<compile_context>
chip_gen: v7x
topology: tpu7x:2x2x1
jax: 0.10.0
libtpu: 0.0.40
codegen_flags: <defaults>
</compile_context>

<pallas_src>
import jax
import jax.numpy as jnp
from jax.experimental import pallas as pl
from jax.experimental.pallas import tpu as pltpu

IN_DIM = 600
OUT_DIM = 100
OUT_PAD = 128    # 100 padded up to 128 -> lane-dense output stores
LAYER_DIMS = [(IN_DIM, 1024), (1024, 512), (512, 256), (256, OUT_DIM)]


def mlp_kernel(x_ref,
               w1_ref, b1_ref,
               w2_ref, b2_ref,
               w3_ref, b3_ref,
               w4_ref, b4_ref,
               o_ref):
    # x tile: (TB, 600) bf16.  Weights bf16, biases f32.
    # MXU runs bf16 x bf16 with f32 accumulation (preferred_element_type).

    # layer1: Linear(600 -> 1024) + ReLU
    h = jnp.dot(x_ref[...], w1_ref[...], preferred_element_type=jnp.float32) + b1_ref[...]
    h = jnp.maximum(h, 0.0).astype(jnp.bfloat16)

    # layer2: Linear(1024 -> 512) + Dropout (identity at inference) + ReLU
    h = jnp.dot(h, w2_ref[...], preferred_element_type=jnp.float32) + b2_ref[...]
    h = jnp.maximum(h, 0.0).astype(jnp.bfloat16)

    # layer3: Linear(512 -> 256) + Dropout (identity at inference) + ReLU
    h = jnp.dot(h, w3_ref[...], preferred_element_type=jnp.float32) + b3_ref[...]
    h = jnp.maximum(h, 0.0).astype(jnp.bfloat16)

    # layer4: Linear(256 -> 128 padded), no activation
    out = jnp.dot(h, w4_ref[...], preferred_element_type=jnp.float32) + b4_ref[...]
    o_ref[...] = out.astype(o_ref.dtype)


def _round_up(x, m):
    return ((x + m - 1) // m) * m


def mlp_forward(x, padded_params):
    """x: (B, 600) f32/bf16.  padded_params: bf16 weights / f32 biases (layer4 padded)."""
    (w1, b1), (w2, b2), (w3, b3), (w4, b4) = padded_params
    B = x.shape[0]

    # Batch tile: 256 fills the 256-wide MXU (v6e/v7x) and amortizes per-step
    # overhead; 128 for mid-size batches; tiny batches round up to a multiple
    # of 16 (bf16 (16,128) vreg packing).
    if B >= 256:
        TB = 256
    elif B >= 128:
        TB = 128
    else:
        TB = _round_up(max(B, 8), 16)

    # Activations go in as bf16, un-padded in the feature dim (Mosaic pads K
    # internally).  Only tiny batches (< one tile) get row-padded; otherwise
    # Pallas' ragged last tile handles B % TB != 0 (masked writeback).
    x_in = x.astype(jnp.bfloat16)
    if B < TB:
        x_in = jnp.zeros((TB, IN_DIM), jnp.bfloat16).at[:B, :].set(x_in)
    Bk = x_in.shape[0]
    grid = (pl.cdiv(Bk, TB),)

    # Weights/biases: full-array blocks with a constant index_map -> stay
    # VMEM-resident across the batch grid (DMA'd once, amortized over tiles).
    def resident(a):
        nd = a.ndim
        return pl.BlockSpec(a.shape, lambda i: (0,) * nd)

    # Megacore batch split only pays off when the grid is long enough that the
    # per-core copy of the resident weights amortizes; short grids stay on one
    # core so the dominant weight DMA is not duplicated.
    dim_sem = ("parallel",) if grid[0] >= 8 else ("arbitrary",)

    out = pl.pallas_call(
        mlp_kernel,
        out_shape=jax.ShapeDtypeStruct((Bk, OUT_PAD), jnp.bfloat16),
        grid_spec=pltpu.PrefetchScalarGridSpec(
            num_scalar_prefetch=0,
            grid=grid,
            in_specs=[pl.BlockSpec((TB, IN_DIM), lambda i: (i, 0)),
                      resident(w1), resident(b1),
                      resident(w2), resident(b2),
                      resident(w3), resident(b3),
                      resident(w4), resident(b4)],
            out_specs=pl.BlockSpec((TB, OUT_PAD), lambda i: (i, 0)),
        ),
        compiler_params=pltpu.CompilerParams(
            dimension_semantics=dim_sem,
            vmem_limit_bytes=32 << 20,
        ),
    )(x_in, w1, b1, w2, b2, w3, b3, w4, b4)

    # Strip batch + lane padding; return f32 like the PyTorch module.
    return out[:B, :OUT_DIM].astype(jnp.float32)


def init_params(key):
    """nn.Linear-style init (uniform(-1/sqrt(fan_in), +)), f32, (in, out) layout.

    NOTE: PyTorch nn.Linear stores weights as (out, in); transpose when
    importing a real state_dict.
    """
    params = []
    for i, (fan_in, fan_out) in enumerate(LAYER_DIMS):
        kw, kb, key = jax.random.split(jax.random.fold_in(key, i), 3)
        bound = 1.0 / jnp.sqrt(jnp.float32(fan_in))
        w = jax.random.uniform(kw, (fan_in, fan_out), jnp.float32, -bound, bound)
        b = jax.random.uniform(kb, (1, fan_out), jnp.float32, -bound, bound)
        params.append((w, b))
    return params


def prepare_params(params_f32):
    """Cast weights to bf16 (biases stay f32); pad layer4 N (100->128) only."""
    (w1, b1), (w2, b2), (w3, b3), (w4, b4) = params_f32

    w4p = jnp.zeros((w4.shape[0], OUT_PAD), jnp.float32).at[:, :OUT_DIM].set(w4)
    b4p = jnp.zeros((1, OUT_PAD), jnp.float32).at[:, :OUT_DIM].set(b4)

    return [(w1.astype(jnp.bfloat16), b1),
            (w2.astype(jnp.bfloat16), b2),
            (w3.astype(jnp.bfloat16), b3),
            (w4p.astype(jnp.bfloat16), b4p)]


def reference_forward(x, padded_params):
    """Pure-JAX reference mirroring the kernel numerics (bf16 weights/activations,
    f32 accumulation, bf16 output), so the comparison is apples-to-apples."""
    (w1, b1), (w2, b2), (w3, b3), (w4, b4) = padded_params
    h = x.astype(jnp.bfloat16)
    h = jnp.dot(h, w1, preferred_element_type=jnp.float32) + b1
    h = jnp.maximum(h, 0.0).astype(jnp.bfloat16)
    h = jnp.dot(h, w2, preferred_element_type=jnp.float32) + b2
    h = jnp.maximum(h, 0.0).astype(jnp.bfloat16)
    h = jnp.dot(h, w3, preferred_element_type=jnp.float32) + b3
    h = jnp.maximum(h, 0.0).astype(jnp.bfloat16)
    out = jnp.dot(h, w4, preferred_element_type=jnp.float32) + b4
    out = out[:, :OUT_DIM].astype(jnp.bfloat16)   # kernel emits bf16
    return out.astype(jnp.float32)


if __name__ == "__main__":
    key = jax.random.PRNGKey(0)
    kx, kx2, kp = jax.random.split(key, 3)

    params = prepare_params(init_params(kp))

    # Small batch: single grid step, row-padded to one 16-row bf16 tile.
    batch = 4
    x = jax.random.normal(kx, (batch, IN_DIM), jnp.float32)
    out = jax.block_until_ready(mlp_forward(x, params))
    ref = reference_forward(x, params)
    assert out.shape == (batch, OUT_DIM), out.shape
    assert jnp.allclose(out, ref, atol=2e-2, rtol=2e-2), "mismatch vs reference (batch=4)"

    # Larger batch: exercises TB=256 tiles + ragged last tile (grid=(2,)).
    batch2 = 300
    x2 = jax.random.normal(kx2, (batch2, IN_DIM), jnp.float32)
    out2 = jax.block_until_ready(mlp_forward(x2, params))
    ref2 = reference_forward(x2, params)
    assert out2.shape == (batch2, OUT_DIM), out2.shape
    assert jnp.allclose(out2, ref2, atol=2e-2, rtol=2e-2), "mismatch vs reference (batch=300)"

    print("KERNEL_OK")
</pallas_src>

<mosaic_0001>
module attributes {stable_mosaic.version = 11 : i64} {
  func.func @mlp_kernel(%arg0: i32, %arg1: memref<16x600xbf16, #tpu.memory_space<vmem>>, %arg2: memref<600x1024xbf16, #tpu.memory_space<vmem>>, %arg3: memref<1x1024xf32, #tpu.memory_space<vmem>>, %arg4: memref<1024x512xbf16, #tpu.memory_space<vmem>>, %arg5: memref<1x512xf32, #tpu.memory_space<vmem>>, %arg6: memref<512x256xbf16, #tpu.memory_space<vmem>>, %arg7: memref<1x256xf32, #tpu.memory_space<vmem>>, %arg8: memref<256x128xbf16, #tpu.memory_space<vmem>>, %arg9: memref<1x128xf32, #tpu.memory_space<vmem>>, %arg10: memref<16x128xbf16, #tpu.memory_space<vmem>>) attributes {dimension_semantics = [#tpu.dimension_semantics<arbitrary>], iteration_bounds = array<i64: 1>, scalar_prefetch = 0 : i64, scratch_operands = 0 : i64, tpu.core_type = #tpu.core_type<tc>, window_params = [{transform_indices = @transform_0, window_bounds = array<i64: 16, 600>}, {pipeline_mode = #tpu.pipeline_mode<synchronous>, transform_indices = @transform_1, window_bounds = array<i64: 600, 1024>}, {pipeline_mode = #tpu.pipeline_mode<synchronous>, transform_indices = @transform_2, window_bounds = array<i64: 1, 1024>}, {pipeline_mode = #tpu.pipeline_mode<synchronous>, transform_indices = @transform_3, window_bounds = array<i64: 1024, 512>}, {pipeline_mode = #tpu.pipeline_mode<synchronous>, transform_indices = @transform_4, window_bounds = array<i64: 1, 512>}, {pipeline_mode = #tpu.pipeline_mode<synchronous>, transform_indices = @transform_5, window_bounds = array<i64: 512, 256>}, {pipeline_mode = #tpu.pipeline_mode<synchronous>, transform_indices = @transform_6, window_bounds = array<i64: 1, 256>}, {pipeline_mode = #tpu.pipeline_mode<synchronous>, transform_indices = @transform_7, window_bounds = array<i64: 256, 128>}, {pipeline_mode = #tpu.pipeline_mode<synchronous>, transform_indices = @transform_8, window_bounds = array<i64: 1, 128>}, {transform_indices = @transform_9, window_bounds = array<i64: 16, 128>}]} {
    %c0 = arith.constant 0 : index
    %c0_0 = arith.constant 0 : index
    %0 = vector.load %arg1[%c0, %c0_0] : memref<16x600xbf16, #tpu.memory_space<vmem>>, vector<16x600xbf16>
    %c0_1 = arith.constant 0 : index
    %c0_2 = arith.constant 0 : index
    %1 = vector.load %arg2[%c0_1, %c0_2] : memref<600x1024xbf16, #tpu.memory_space<vmem>>, vector<600x1024xbf16>
    %cst = arith.constant dense<0.000000e+00> : vector<16x1024xf32>
    %2 = tpu.matmul %0, %1, %cst {dimension_numbers = #tpu.dot_dimension_numbers<[1], [0], [0], [1], [0, 0, 1, 1], [], []>} : vector<16x600xbf16>, vector<600x1024xbf16>, vector<16x1024xf32> -> vector<16x1024xf32>
    %c0_3 = arith.constant 0 : index
    %c0_4 = arith.constant 0 : index
    %3 = vector.load %arg3[%c0_3, %c0_4] : memref<1x1024xf32, #tpu.memory_space<vmem>>, vector<1x1024xf32>
    %4 = vector.broadcast %3 : vector<1x1024xf32> to vector<16x1024xf32>
    %5 = arith.addf %2, %4 : vector<16x1024xf32>
    %cst_5 = arith.constant 0.000000e+00 : f32
    %6 = vector.broadcast %cst_5 : f32 to vector<16x1024xf32>
    %7 = arith.maximumf %5, %6 : vector<16x1024xf32>
    %8 = arith.truncf %7 : vector<16x1024xf32> to vector<16x1024xbf16>
    %c0_6 = arith.constant 0 : index
    %c0_7 = arith.constant 0 : index
    %9 = vector.load %arg4[%c0_6, %c0_7] : memref<1024x512xbf16, #tpu.memory_space<vmem>>, vector<1024x512xbf16>
    %cst_8 = arith.constant dense<0.000000e+00> : vector<16x512xf32>
    %10 = tpu.matmul %8, %9, %cst_8 {dimension_numbers = #tpu.dot_dimension_numbers<[1], [0], [0], [1], [0, 0, 1, 1], [], []>} : vector<16x1024xbf16>, vector<1024x512xbf16>, vector<16x512xf32> -> vector<16x512xf32>
    %c0_9 = arith.constant 0 : index
    %c0_10 = arith.constant 0 : index
    %11 = vector.load %arg5[%c0_9, %c0_10] : memref<1x512xf32, #tpu.memory_space<vmem>>, vector<1x512xf32>
    %12 = vector.broadcast %11 : vector<1x512xf32> to vector<16x512xf32>
    %13 = arith.addf %10, %12 : vector<16x512xf32>
    %cst_11 = arith.constant 0.000000e+00 : f32
    %14 = vector.broadcast %cst_11 : f32 to vector<16x512xf32>
    %15 = arith.maximumf %13, %14 : vector<16x512xf32>
    %16 = arith.truncf %15 : vector<16x512xf32> to vector<16x512xbf16>
    %c0_12 = arith.constant 0 : index
    %c0_13 = arith.constant 0 : index
    %17 = vector.load %arg6[%c0_12, %c0_13] : memref<512x256xbf16, #tpu.memory_space<vmem>>, vector<512x256xbf16>
    %cst_14 = arith.constant dense<0.000000e+00> : vector<16x256xf32>
    %18 = tpu.matmul %16, %17, %cst_14 {dimension_numbers = #tpu.dot_dimension_numbers<[1], [0], [0], [1], [0, 0, 1, 1], [], []>} : vector<16x512xbf16>, vector<512x256xbf16>, vector<16x256xf32> -> vector<16x256xf32>
    %c0_15 = arith.constant 0 : index
    %c0_16 = arith.constant 0 : index
    %19 = vector.load %arg7[%c0_15, %c0_16] : memref<1x256xf32, #tpu.memory_space<vmem>>, vector<1x256xf32>
    %20 = vector.broadcast %19 : vector<1x256xf32> to vector<16x256xf32>
    %21 = arith.addf %18, %20 : vector<16x256xf32>
    %cst_17 = arith.constant 0.000000e+00 : f32
    %22 = vector.broadcast %cst_17 : f32 to vector<16x256xf32>
    %23 = arith.maximumf %21, %22 : vector<16x256xf32>
    %24 = arith.truncf %23 : vector<16x256xf32> to vector<16x256xbf16>
    %c0_18 = arith.constant 0 : index
    %c0_19 = arith.constant 0 : index
    %25 = vector.load %arg8[%c0_18, %c0_19] : memref<256x128xbf16, #tpu.memory_space<vmem>>, vector<256x128xbf16>
    %cst_20 = arith.constant dense<0.000000e+00> : vector<16x128xf32>
    %26 = tpu.matmul %24, %25, %cst_20 {dimension_numbers = #tpu.dot_dimension_numbers<[1], [0], [0], [1], [0, 0, 1, 1], [], []>} : vector<16x256xbf16>, vector<256x128xbf16>, vector<16x128xf32> -> vector<16x128xf32>
    %c0_21 = arith.constant 0 : index
    %c0_22 = arith.constant 0 : index
    %27 = vector.load %arg9[%c0_21, %c0_22] : memref<1x128xf32, #tpu.memory_space<vmem>>, vector<1x128xf32>
    %28 = vector.broadcast %27 : vector<1x128xf32> to vector<16x128xf32>
    %29 = arith.addf %26, %28 : vector<16x128xf32>
    %30 = arith.truncf %29 : vector<16x128xf32> to vector<16x128xbf16>
    %c0_23 = arith.constant 0 : index
    %c0_24 = arith.constant 0 : index
    %31 = vector.load %arg10[%c0_23, %c0_24] : memref<16x128xbf16, #tpu.memory_space<vmem>>, vector<16x128xbf16>
    tpu.vector_store %arg10[%c0_23, %c0_24], %30 {strides = array<i32>} : memref<16x128xbf16, #tpu.memory_space<vmem>>, vector<16x128xbf16>,
    return
  }
  func.func @transform_0(%arg0: i32) -> (i32, i32) {
    %c0_i32 = arith.constant 0 : i32
    %c0_i32_0 = arith.constant 0 : i32
    return %arg0, %c0_i32 : i32, i32
  }
  func.func @transform_1(%arg0: i32) -> (i32, i32) {
    %c0_i32 = arith.constant 0 : i32
    %c0_i32_0 = arith.constant 0 : i32
    %c0_i32_1 = arith.constant 0 : i32
    return %c0_i32, %c0_i32_0 : i32, i32
  }
  func.func @transform_2(%arg0: i32) -> (i32, i32) {
    %c0_i32 = arith.constant 0 : i32
    %c0_i32_0 = arith.constant 0 : i32
    %c0_i32_1 = arith.constant 0 : i32
    return %c0_i32, %c0_i32_0 : i32, i32
  }
  func.func @transform_3(%arg0: i32) -> (i32, i32) {
    %c0_i32 = arith.constant 0 : i32
    %c0_i32_0 = arith.constant 0 : i32
    %c0_i32_1 = arith.constant 0 : i32
    return %c0_i32, %c0_i32_0 : i32, i32
  }
  func.func @transform_4(%arg0: i32) -> (i32, i32) {
    %c0_i32 = arith.constant 0 : i32
    %c0_i32_0 = arith.constant 0 : i32
    %c0_i32_1 = arith.constant 0 : i32
    return %c0_i32, %c0_i32_0 : i32, i32
  }
  func.func @transform_5(%arg0: i32) -> (i32, i32) {
    %c0_i32 = arith.constant 0 : i32
    %c0_i32_0 = arith.constant 0 : i32
    %c0_i32_1 = arith.constant 0 : i32
    return %c0_i32, %c0_i32_0 : i32, i32
  }
  func.func @transform_6(%arg0: i32) -> (i32, i32) {
    %c0_i32 = arith.constant 0 : i32
    %c0_i32_0 = arith.constant 0 : i32
    %c0_i32_1 = arith.constant 0 : i32
    return %c0_i32, %c0_i32_0 : i32, i32
  }
  func.func @transform_7(%arg0: i32) -> (i32, i32) {
    %c0_i32 = arith.constant 0 : i32
    %c0_i32_0 = arith.constant 0 : i32
    %c0_i32_1 = arith.constant 0 : i32
    return %c0_i32, %c0_i32_0 : i32, i32
  }
  func.func @transform_8(%arg0: i32) -> (i32, i32) {
    %c0_i32 = arith.constant 0 : i32
    %c0_i32_0 = arith.constant 0 : i32
    %c0_i32_1 = arith.constant 0 : i32
    return %c0_i32, %c0_i32_0 : i32, i32
  }
  func.func @transform_9(%arg0: i32) -> (i32, i32) {
    %c0_i32 = arith.constant 0 : i32
    %c0_i32_0 = arith.constant 0 : i32
    return %arg0, %c0_i32 : i32, i32
  }
}

</mosaic_0001>

<llo_original>
// kernel: tpu_custom_call.1
$region0: #{tpu_custom_call.1}
  #allocation0 [shape = 'u32[]', space=smem, size = 0x4, offset = 0x4, fixed_abs, tag = 'smem constant byte address 0x4 - core index']
  #allocation1 [shape = 'u32[144,128]{1,0:T(1,128)}', space=vmem, size = 0x12000, scoped, tag = 'internal scratch']
  %s0 = inlined_call_operand.hbm [shape: bf16[16,600], index: 0, kind: input, shape index: {}]
  %s1 = inlined_call_operand.hbm [shape: bf16[600,1024], index: 1, kind: input, shape index: {}]
  %s2 = inlined_call_operand.hbm [shape: f32[1,1024], index: 2, kind: input, shape index: {}]
  %s3 = inlined_call_operand.hbm [shape: bf16[1024,512], index: 3, kind: input, shape index: {}]
  %s4 = inlined_call_operand.hbm [shape: f32[1,512], index: 4, kind: input, shape index: {}]
  %s5 = inlined_call_operand.hbm [shape: bf16[512,256], index: 5, kind: input, shape index: {}]
  %s6 = inlined_call_operand.hbm [shape: f32[1,256], index: 6, kind: input, shape index: {}]
  %s7 = inlined_call_operand.hbm [shape: bf16[256,128], index: 7, kind: input, shape index: {}]
  %s8 = inlined_call_operand.hbm [shape: f32[1,128], index: 8, kind: input, shape index: {}]
  %s9 = inlined_call_operand.hbm [shape: bf16[16,128], index: 9, kind: output, shape index: {}]
  %s10 = sld [smem:[#allocation0]]
  $region82: #{tpu_custom_call.1} parent=0
    _
  %s12 = ssub.s32 1, %s10
  %s13 = scalar_select 0, %s12, %s10
  $region1: #{tpu_custom_call.1} parent=0
    #allocation2 [shape = 'u8[20480]{0}', space=vmem, size = 0x5000, scoped, tag = 'input window, operand 0, single buffered']
    #allocation3 [shape = 's32[1]{0}', space=sflag, size = 0x4, scoped, tag = 'scoped memory for tpu_custom_call.1']
    #allocation4 [shape = 's32[1]{0}', space=sflag, size = 0x4, scoped, tag = 'scoped memory for tpu_custom_call.1']
    #allocation5 [shape = 'u8[1228800]{0}', space=vmem, size = 0x12c000, scoped, tag = 'input window, operand 1, single buffered']
    #allocation6 [shape = 's32[1]{0}', space=sflag, size = 0x4, scoped, tag = 'scoped memory for tpu_custom_call.1']
    #allocation7 [shape = 'u8[4096]{0}', space=vmem, size = 0x1000, scoped, tag = 'input window, operand 2, single buffered']
    #allocation8 [shape = 'u8[1048576]{0}', space=vmem, size = 0x100000, scoped, tag = 'input window, operand 3, single buffered']
    #allocation9 [shape = 's32[1]{0}', space=sflag, size = 0x4, scoped, tag = 'scoped memory for tpu_custom_call.1']
    #allocation10 [shape = 'u8[2048]{0}', space=vmem, size = 0x800, scoped, tag = 'input window, operand 4, single buffered']
    #allocation11 [shape = 'u8[262144]{0}', space=vmem, size = 0x40000, scoped, tag = 'input window, operand 5, single buffered']
    #allocation12 [shape = 's32[1]{0}', space=sflag, size = 0x4, scoped, tag = 'scoped memory for tpu_custom_call.1']
    #allocation13 [shape = 'u8[1024]{0}', space=vmem, size = 0x400, scoped, tag = 'input window, operand 6, single buffered']
    #allocation14 [shape = 'u8[65536]{0}', space=vmem, size = 0x10000, scoped, tag = 'input window, operand 7, single buffered']
    #allocation15 [shape = 's32[1]{0}', space=sflag, size = 0x4, scoped, tag = 'scoped memory for tpu_custom_call.1']
    #allocation16 [shape = 'u8[512]{0}', space=vmem, size = 0x400, scoped, tag = 'input window, operand 8, single buffered']
    #allocation17 [shape = 'u8[4096]{0}', space=vmem, size = 0x1000, scoped, tag = 'output window, operand 0, single buffered']
    %14 = vsyncpa [#allocation3], 0
    %15 = vsyncpa [#allocation6], 0
    %16 = vsyncpa [#allocation9], 0
    %17 = vsyncpa [#allocation12], 0
    %18 = vsyncpa [#allocation15], 0
    %19 = vsyncpa [#allocation4], 0
    // Predicated region
    $region2: #{tpu_custom_call.1} parent=1 // pred_check
      _
    $region3: #{tpu_custom_call.1} parent=1 // pred_check_branch
      %21 = sbr.rel (0) target = $region5
    $region4: #{tpu_custom_call.1} parent=1 // pred_region
      %s23 = ssub.s32 640, 640
      %24 = vsyncadd [#allocation3], %s23
      %s25 = sshll.u32 [#allocation2], 4
      %s26 = int_to_ptr.vmem [resolvable:$true] %s25
      %31 = dma.hbm_to_vmem [thread:$0]  %s0, 640, %s26, [#allocation3], 320, 320, 20
    $region5: #{tpu_custom_call.1} parent=1 // pred_fallthru
      _
    // Predicated region
    $region6: #{tpu_custom_call.1} parent=1 // pred_check
      _
    $region7: #{tpu_custom_call.1} parent=1 // pred_check_branch
      %33 = sbr.rel (0) target = $region9
    $region8: #{tpu_custom_call.1} parent=1 // pred_region
      %s35 = ssub.s32 38400, 38400
      %36 = vsyncadd [#allocation6], %s35
      %s37 = sshll.u32 [#allocation5], 4
      %s38 = int_to_ptr.vmem [resolvable:$true] %s37
      %43 = dma.hbm_to_vmem [thread:$0]  %s1, 38400, %s38, [#allocation6], 512, 512, 32
    $region9: #{tpu_custom_call.1} parent=1 // pred_fallthru
      _
    // Predicated region
    $region10: #{tpu_custom_call.1} parent=1 // pred_check
      _
    $region11: #{tpu_custom_call.1} parent=1 // pred_check_branch
      %45 = sbr.rel (0) target = $region13
    $region12: #{tpu_custom_call.1} parent=1 // pred_region
      %s47 = ssub.s32 128, 128
      %48 = vsyncadd [#allocation6], %s47
      %s50 = sshll.u32 [#allocation7], 4
      %s51 = int_to_ptr.vmem [resolvable:$true] %s50
      %53 = dma.hbm_to_vmem [thread:$0]  %s2, 128, %s51, [#allocation6]
    $region13: #{tpu_custom_call.1} parent=1 // pred_fallthru
      _
    // Predicated region
    $region14: #{tpu_custom_call.1} parent=1 // pred_check
      _
    $region15: #{tpu_custom_call.1} parent=1 // pred_check_branch
      %55 = sbr.rel (0) target = $region17
    $region16: #{tpu_custom_call.1} parent=1 // pred_region
      %s57 = ssub.s32 32768, 32768
      %58 = vsyncadd [#allocation9], %s57
      %s59 = sshll.u32 [#allocation8], 4
      %s60 = int_to_ptr.vmem [resolvable:$true] %s59
      %65 = dma.hbm_to_vmem [thread:$0]  %s3, 32768, %s60, [#allocation9], 256, 256, 16
    $region17: #{tpu_custom_call.1} parent=1 // pred_fallthru
      _
    // Predicated region
    $region18: #{tpu_custom_call.1} parent=1 // pred_check
      _
    $region19: #{tpu_custom_call.1} parent=1 // pred_check_branch
      %67 = sbr.rel (0) target = $region21
    $region20: #{tpu_custom_call.1} parent=1 // pred_region
      %s69 = ssub.s32 64, 64
      %70 = vsyncadd [#allocation9], %s69
      %s72 = sshll.u32 [#allocation10], 4
      %s73 = int_to_ptr.vmem [resolvable:$true] %s72
      %75 = dma.hbm_to_vmem [thread:$0]  %s4, 64, %s73, [#allocation9]
    $region21: #{tpu_custom_call.1} parent=1 // pred_fallthru
      _
    // Predicated region
    $region22: #{tpu_custom_call.1} parent=1 // pred_check
      _
    $region23: #{tpu_custom_call.1} parent=1 // pred_check_branch
      %77 = sbr.rel (0) target = $region25
    $region24: #{tpu_custom_call.1} parent=1 // pred_region
      %s79 = ssub.s32 8192, 8192
      %80 = vsyncadd [#allocation12], %s79
      %s81 = sshll.u32 [#allocation11], 4
      %s82 = int_to_ptr.vmem [resolvable:$true] %s81
      %87 = dma.hbm_to_vmem [thread:$0]  %s5, 8192, %s82, [#allocation12], 128, 128, 8
    $region25: #{tpu_custom_call.1} parent=1 // pred_fallthru
      _
    // Predicated region
    $region26: #{tpu_custom_call.1} parent=1 // pred_check
      _
    $region27: #{tpu_custom_call.1} parent=1 // pred_check_branch
      %89 = sbr.rel (0) target = $region29
    $region28: #{tpu_custom_call.1} parent=1 // pred_region
      %s91 = ssub.s32 32, 32
      %92 = vsyncadd [#allocation12], %s91
      %s94 = sshll.u32 [#allocation13], 4
      %s95 = int_to_ptr.vmem [resolvable:$true] %s94
      %97 = dma.hbm_to_vmem [thread:$0]  %s6, 32, %s95, [#allocation12]
    $region29: #{tpu_custom_call.1} parent=1 // pred_fallthru
      _
    // Predicated region
    $region30: #{tpu_custom_call.1} parent=1 // pred_check
      _
    $region31: #{tpu_custom_call.1} parent=1 // pred_check_branch
      %99 = sbr.rel (0) target = $region33
    $region32: #{tpu_custom_call.1} parent=1 // pred_region
      %s101 = ssub.s32 2048, 2048
      %102 = vsyncadd [#allocation15], %s101
      %s103 = sshll.u32 [#allocation14], 4
      %s104 = int_to_ptr.vmem [resolvable:$true] %s103
      %109 = dma.hbm_to_vmem [thread:$0]  %s7, 2048, %s104, [#allocation15], 64, 64, 4
    $region33: #{tpu_custom_call.1} parent=1 // pred_fallthru
      _
    // Predicated region
    $region34: #{tpu_custom_call.1} parent=1 // pred_check
      _
    $region35: #{tpu_custom_call.1} parent=1 // pred_check_branch
      %111 = sbr.rel (0) target = $region37
    $region36: #{tpu_custom_call.1} parent=1 // pred_region
      %s113 = ssub.s32 16, 16
      %114 = vsyncadd [#allocation15], %s113
      %s116 = sshll.u32 [#allocation16], 4
      %s117 = int_to_ptr.vmem [resolvable:$true] %s116
      %119 = dma.hbm_to_vmem [thread:$0]  %s8, 16, %s117, [#allocation15]
    $region37: #{tpu_custom_call.1} parent=1 // pred_fallthru
      _
    // Predicated region
    $region38: #{tpu_custom_call.1} parent=1 // pred_check
      _
    $region39: #{tpu_custom_call.1} parent=1 // pred_check_branch
      %121 = sbr.rel (0) target = $region41
    $region40: #{tpu_custom_call.1} parent=1 // pred_region
      %122 = dma.done [#allocation3], 640
    $region41: #{tpu_custom_call.1} parent=1 // pred_fallthru
      _
    // Predicated region
    $region42: #{tpu_custom_call.1} parent=1 // pred_check
      _
    $region43: #{tpu_custom_call.1} parent=1 // pred_check_branch
      %124 = sbr.rel (0) target = $region45
    $region44: #{tpu_custom_call.1} parent=1 // pred_region
      %125 = dma.done [#allocation6], 38400
    $region45: #{tpu_custom_call.1} parent=1 // pred_fallthru
      _
    // Predicated region
    $region46: #{tpu_custom_call.1} parent=1 // pred_check
      _
    $region47: #{tpu_custom_call.1} parent=1 // pred_check_branch
      %127 = sbr.rel (0) target = $region49
    $region48: #{tpu_custom_call.1} parent=1 // pred_region
      %128 = dma.done [#allocation6], 128
    $region49: #{tpu_custom_call.1} parent=1 // pred_fallthru
      _
    // Predicated region
    $region50: #{tpu_custom_call.1} parent=1 // pred_check
      _
    $region51: #{tpu_custom_call.1} parent=1 // pred_check_branch
      %130 = sbr.rel (0) target = $region53
    $region52: #{tpu_custom_call.1} parent=1 // pred_region
      %131 = dma.done [#allocation9], 32768
    $region53: #{tpu_custom_call.1} parent=1 // pred_fallthru
      _
    // Predicated region
    $region54: #{tpu_custom_call.1} parent=1 // pred_check
      _
    $region55: #{tpu_custom_call.1} parent=1 // pred_check_branch
      %133 = sbr.rel (0) target = $region57
    $region56: #{tpu_custom_call.1} parent=1 // pred_region
      %134 = dma.done [#allocation9], 64
    $region57: #{tpu_custom_call.1} parent=1 // pred_fallthru
      _
    // Predicated region
    $region58: #{tpu_custom_call.1} parent=1 // pred_check
      _
    $region59: #{tpu_custom_call.1} parent=1 // pred_check_branch
      %136 = sbr.rel (0) target = $region61
    $region60: #{tpu_custom_call.1} parent=1 // pred_region
      %137 = dma.done [#allocation12], 8192
    $region61: #{tpu_custom_call.1} parent=1 // pred_fallthru
      _
    // Predicated region
    $region62: #{tpu_custom_call.1} parent=1 // pred_check
      _
    $region63: #{tpu_custom_call.1} parent=1 // pred_check_branch
      %139 = sbr.rel (0) target = $region65
    $region64: #{tpu_custom_call.1} parent=1 // pred_region
      %140 = dma.done [#allocation12], 32
    $region65: #{tpu_custom_call.1} parent=1 // pred_fallthru
      _
    // Predicated region
    $region66: #{tpu_custom_call.1} parent=1 // pred_check
      _
    $region67: #{tpu_custom_call.1} parent=1 // pred_check_branch
      %142 = sbr.rel (0) target = $region69
    $region68: #{tpu_custom_call.1} parent=1 // pred_region
      %143 = dma.done [#allocation15], 2048
    $region69: #{tpu_custom_call.1} parent=1 // pred_fallthru
      _
    // Predicated region
    $region70: #{tpu_custom_call.1} parent=1 // pred_check
      _
    $region71: #{tpu_custom_call.1} parent=1 // pred_check_branch
      %145 = sbr.rel (0) target = $region73
    $region72: #{tpu_custom_call.1} parent=1 // pred_region
      %146 = dma.done [#allocation15], 16
    $region73: #{tpu_custom_call.1} parent=1 // pred_fallthru
      _
    %v148 = vld [vmem:[#allocation2] sm:$0xff]
    %v149 = vld [vmem:[#allocation2 + $0x8] sm:$0xff]
    %v150 = vld [vmem:[#allocation2 + $0x10] sm:$0xf]
    %v151 = vld [vmem:[#allocation2 + $0x14] sm:$0xff]
    %v152 = vld [vmem:[#allocation2 + $0x1c] sm:$0xff]
    %v153 = vld [vmem:[#allocation2 + $0x24] sm:$0xf]
    %v154 = vld [vmem:[#allocation5] sm:$0xff]
    %v155 = vld [vmem:[#allocation5 + $0x8] sm:$0xff]
    %v156 = vld [vmem:[#allocation5 + $0x10] sm:$0xff]
    %v157 = vld [vmem:[#allocation5 + $0x18] sm:$0xff]
    %v158 = vld [vmem:[#allocation5 + $0x20] sm:$0xff]
    %v159 = vld [vmem:[#allocation5 + $0x28] sm:$0xff]
    %v160 = vld [vmem:[#allocation5 + $0x30] sm:$0xff]
    %v161 = vld [vmem:[#allocation5 + $0x38] sm:$0xff]
    %v162 = vld [vmem:[#allocation5 + $0x40] sm:$0xff]
    %v163 = vld [vmem:[#allocation5 + $0x48] sm:$0xff]
    %v164 = vld [vmem:[#allocation5 + $0x50] sm:$0xff]
    %v165 = vld [vmem:[#allocation5 + $0x58] sm:$0xff]
    %v166 = vld [vmem:[#allocation5 + $0x60] sm:$0xff]
    %v167 = vld [vmem:[#allocation5 + $0x68] sm:$0xff]
    %v168 = vld [vmem:[#allocation5 + $0x70] sm:$0xff]
    %v169 = vld [vmem:[#allocation5 + $0x78] sm:$0xff]
    %v170 = vld [vmem:[#allocation5 + $0x80] sm:$0xff]
    %v171 = vld [vmem:[#allocation5 + $0x88] sm:$0xff]
    %v172 = vld [vmem:[#allocation5 + $0x90] sm:$0xff]
    %v173 = vld [vmem:[#allocation5 + $0x98] sm:$0xff]
    %v174 = vld [vmem:[#allocation5 + $0xa0] sm:$0xff]
    %v175 = vld [vmem:[#allocation5 + $0xa8] sm:$0xff]
    %v176 = vld [vmem:[#allocation5 + $0xb0] sm:$0xff]
    %v177 = vld [vmem:[#allocation5 + $0xb8] sm:$0xff]
    %v178 = vld [vmem:[#allocation5 + $0xc0] sm:$0xff]
    %v179 = vld [vmem:[#allocation5 + $0xc8] sm:$0xff]
    %v180 = vld [vmem:[#allocation5 + $0xd0] sm:$0xff]
    %v181 = vld [vmem:[#allocation5 + $0xd8] sm:$0xff]
    %v182 = vld [vmem:[#allocation5 + $0xe0] sm:$0xff]
    %v183 = vld [vmem:[#allocation5 + $0xe8] sm:$0xff]
    %v184 = vld [vmem:[#allocation5 + $0xf0] sm:$0xff]
    %v185 = vld [vmem:[#allocation5 + $0xf8] sm:$0xff]
    %v186 = vld [vmem:[#allocation5 + $0x100] sm:$0xff]
    %v187 = vld [vmem:[#allocation5 + $0x108] sm:$0xff]
    %v188 = vld [vmem:[#allocation5 + $0x110] sm:$0xff]
    %v189 = vld [vmem:[#allocation5 + $0x118] sm:$0xff]
    %v190 = vld [vmem:[#allocation5 + $0x120] sm:$0xff]
    %v191 = vld [vmem:[#allocation5 + $0x128] sm:$0xff]
    %v192 = vld [vmem:[#allocation5 + $0x130] sm:$0xff]
    %v193 = vld [vmem:[#allocation5 + $0x138] sm:$0xff]
    %v194 = vld [vmem:[#allocation5 + $0x140] sm:$0xff]
    %v195 = vld [vmem:[#allocation5 + $0x148] sm:$0xff]
    %v196 = vld [vmem:[#allocation5 + $0x150] sm:$0xff]
    %v197 = vld [vmem:[#allocation5 + $0x158] sm:$0xff]
    %v198 = vld [vmem:[#allocation5 + $0x160] sm:$0xff]
    %v199 = vld [vmem:[#allocation5 + $0x168] sm:$0xff]
    %v200 = vld [vmem:[#allocation5 + $0x170] sm:$0xff]
    %v201 = vld [vmem:[#allocation5 + $0x178] sm:$0xff]
    %v202 = vld [vmem:[#allocation5 + $0x180] sm:$0xff]
    %v203 = vld [vmem:[#allocation5 + $0x188] sm:$0xff]
    %v204 = vld [vmem:[#allocation5 + $0x190] sm:$0xff]
    %v205 = vld [vmem:[#allocation5 + $0x198] sm:$0xff]
    %v206 = vld [vmem:[#allocation5 + $0x1a0] sm:$0xff]
    %v207 = vld [vmem:[#allocation5 + $0x1a8] sm:$0xff]
    %v208 = vld [vmem:[#allocation5 + $0x1b0] sm:$0xff]
    %v209 = vld [vmem:[#allocation5 + $0x1b8] sm:$0xff]
    %v210 = vld [vmem:[#allocation5 + $0x1c0] sm:$0xff]
    %v211 = vld [vmem:[#allocation5 + $0x1c8] sm:$0xff]
    %v212 = vld [vmem:[#allocation5 + $0x1d0] sm:$0xff]
    %v213 = vld [vmem:[#allocation5 + $0x1d8] sm:$0xff]
    %v214 = vld [vmem:[#allocation5 + $0x1e0] sm:$0xff]
    %v215 = vld [vmem:[#allocation5 + $0x1e8] sm:$0xff]
    %v216 = vld [vmem:[#allocation5 + $0x1f0] sm:$0xff]
    %v217 = vld [vmem:[#allocation5 + $0x1f8] sm:$0xff]
    %v218 = vld [vmem:[#allocation5 + $0x200] sm:$0xff]
    %v219 = vld [vmem:[#allocation5 + $0x208] sm:$0xff]
    %v220 = vld [vmem:[#allocation5 + $0x210] sm:$0xff]
    %v221 = vld [vmem:[#allocation5 + $0x218] sm:$0xff]
    %v222 = vld [vmem:[#allocation5 + $0x220] sm:$0xff]
    %v223 = vld [vmem:[#allocation5 + $0x228] sm:$0xff]
    %v224 = vld [vmem:[#allocation5 + $0x230] sm:$0xff]
    %v225 = vld [vmem:[#allocation5 + $0x238] sm:$0xff]
    %v226 = vld [vmem:[#allocation5 + $0x240] sm:$0xff]
    %v227 = vld [vmem:[#allocation5 + $0x248] sm:$0xff]
    %v228 = vld [vmem:[#allocation5 + $0x250] sm:$0xff]
    %v229 = vld [vmem:[#allocation5 + $0x258] sm:$0xff]
    %v230 = vld [vmem:[#allocation5 + $0x260] sm:$0xff]
    %v231 = vld [vmem:[#allocation5 + $0x268] sm:$0xff]
    %v232 = vld [vmem:[#allocation5 + $0x270] sm:$0xff]
    %v233 = vld [vmem:[#allocation5 + $0x278] sm:$0xff]
    %v234 = vld [vmem:[#allocation5 + $0x280] sm:$0xff]
    %v235 = vld [vmem:[#allocation5 + $0x288] sm:$0xff]
    %v236 = vld [vmem:[#allocation5 + $0x290] sm:$0xff]
    %v237 = vld [vmem:[#allocation5 + $0x298] sm:$0xff]
    %v238 = vld [vmem:[#allocation5 + $0x2a0] sm:$0xff]
    %v239 = vld [vmem:[#allocation5 + $0x2a8] sm:$0xff]
    %v240 = vld [vmem:[#allocation5 + $0x2b0] sm:$0xff]
    %v241 = vld [vmem:[#allocation5 + $0x2b8] sm:$0xff]
    %v242 = vld [vmem:[#allocation5 + $0x2c0] sm:$0xff]
    %v243 = vld [vmem:[#allocation5 + $0x2c8] sm:$0xff]
    %v244 = vld [vmem:[#allocation5 + $0x2d0] sm:$0xff]
    %v245 = vld [vmem:[#allocation5 + $0x2d8] sm:$0xff]
    %v246 = vld [vmem:[#allocation5 + $0x2e0] sm:$0xff]
    %v247 = vld [vmem:[#allocation5 + $0x2e8] sm:$0xff]
    %v248 = vld [vmem:[#allocation5 + $0x2f0] sm:$0xff]
    %v249 = vld [vmem:[#allocation5 + $0x2f8] sm:$0xff]
    %v250 = vld [vmem:[#allocation5 + $0x300] sm:$0xff]
    %v251 = vld [vmem:[#allocation5 + $0x308] sm:$0xff]
    %v252 = vld [vmem:[#allocation5 + $0x310] sm:$0xff]
    %v253 = vld [vmem:[#allocation5 + $0x318] sm:$0xff]
    %v254 = vld [vmem:[#allocation5 + $0x320] sm:$0xff]
    %v255 = vld [vmem:[#allocation5 + $0x328] sm:$0xff]
    %v256 = vld [vmem:[#allocation5 + $0x330] sm:$0xff]
    %v257 = vld [vmem:[#allocation5 + $0x338] sm:$0xff]
    %v258 = vld [vmem:[#allocation5 + $0x340] sm:$0xff]
    %v259 = vld [vmem:[#allocation5 + $0x348] sm:$0xff]
    %v260 = vld [vmem:[#allocation5 + $0x350] sm:$0xff]
    %v261 = vld [vmem:[#allocation5 + $0x358] sm:$0xff]
    %v262 = vld [vmem:[#allocation5 + $0x360] sm:$0xff]
    %v263 = vld [vmem:[#allocation5 + $0x368] sm:$0xff]
    %v264 = vld [vmem:[#allocation5 + $0x370] sm:$0xff]
    %v265 = vld [vmem:[#allocation5 + $0x378] sm:$0xff]
    %v266 = vld [vmem:[#allocation5 + $0x380] sm:$0xff]
    %v267 = vld [vmem:[#allocation5 + $0x388] sm:$0xff]
    %v268 = vld [vmem:[#allocation5 + $0x390] sm:$0xff]
    %v269 = vld [vmem:[#allocation5 + $0x398] sm:$0xff]
    %v270 = vld [vmem:[#allocation5 + $0x3a0] sm:$0xff]
    %v271 = vld [vmem:[#allocation5 + $0x3a8] sm:$0xff]
    %v272 = vld [vmem:[#allocation5 + $0x3b0] sm:$0xff]
    %v273 = vld [vmem:[#allocation5 + $0x3b8] sm:$0xff]
    %v274 = vld [vmem:[#allocation5 + $0x3c0] sm:$0xff]
    %v275 = vld [vmem:[#allocation5 + $0x3c8] sm:$0xff]
    %v276 = vld [vmem:[#allocation5 + $0x3d0] sm:$0xff]
    %v277 = vld [vmem:[#allocation5 + $0x3d8] sm:$0xff]
    %v278 = vld [vmem:[#allocation5 + $0x3e0] sm:$0xff]
    %v279 = vld [vmem:[#allocation5 + $0x3e8] sm:$0xff]
    %v280 = vld [vmem:[#allocation5 + $0x3f0] sm:$0xff]
    %v281 = vld [vmem:[#allocation5 + $0x3f8] sm:$0xff]
    %v282 = vld [vmem:[#allocation5 + $0x400] sm:$0xff]
    %v283 = vld [vmem:[#allocation5 + $0x408] sm:$0xff]
    %v284 = vld [vmem:[#allocation5 + $0x410] sm:$0xff]
    %v285 = vld [vmem:[#allocation5 + $0x418] sm:$0xff]
    %v286 = vld [vmem:[#allocation5 + $0x420] sm:$0xff]
    %v287 = vld [vmem:[#allocation5 + $0x428] sm:$0xff]
    %v288 = vld [vmem:[#allocation5 + $0x430] sm:$0xff]
    %v289 = vld [vmem:[#allocation5 + $0x438] sm:$0xff]
    %v290 = vld [vmem:[#allocation5 + $0x440] sm:$0xff]
    %v291 = vld [vmem:[#allocation5 + $0x448] sm:$0xff]
    %v292 = vld [vmem:[#allocation5 + $0x450] sm:$0xff]
    %v293 = vld [vmem:[#allocation5 + $0x458] sm:$0xff]
    %v294 = vld [vmem:[#allocation5 + $0x460] sm:$0xff]
    %v295 = vld [vmem:[#allocation5 + $0x468] sm:$0xff]
    %v296 = vld [vmem:[#allocation5 + $0x470] sm:$0xff]
    %v297 = vld [vmem:[#allocation5 + $0x478] sm:$0xff]
    %v298 = vld [vmem:[#allocation5 + $0x480] sm:$0xff]
    %v299 = vld [vmem:[#allocation5 + $0x488] sm:$0xff]
    %v300 = vld [vmem:[#allocation5 + $0x490] sm:$0xff]
    %v301 = vld [vmem:[#allocation5 + $0x498] sm:$0xff]
    %v302 = vld [vmem:[#allocation5 + $0x4a0] sm:$0xff]
    %v303 = vld [vmem:[#allocation5 + $0x4a8] sm:$0xff]
    %v304 = vld [vmem:[#allocation5 + $0x4b0] sm:$0xff]
    %v305 = vld [vmem:[#allocation5 + $0x4b8] sm:$0xff]
    %v306 = vld [vmem:[#allocation5 + $0x4c0] sm:$0xff]
    %v307 = vld [vmem:[#allocation5 + $0x4c8] sm:$0xff]
    %v308 = vld [vmem:[#allocation5 + $0x4d0] sm:$0xff]
    %v309 = vld [vmem:[#allocation5 + $0x4d8] sm:$0xff]
    %v310 = vld [vmem:[#allocation5 + $0x4e0] sm:$0xff]
    %v311 = vld [vmem:[#allocation5 + $0x4e8] sm:$0xff]
    %v312 = vld [vmem:[#allocation5 + $0x4f0] sm:$0xff]
    %v313 = vld [vmem:[#allocation5 + $0x4f8] sm:$0xff]
    %v314 = vld [vmem:[#allocation5 + $0x500] sm:$0xff]
    %v315 = vld [vmem:[#allocation5 + $0x508] sm:$0xff]
    %v316 = vld [vmem:[#allocation5 + $0x510] sm:$0xff]
    %v317 = vld [vmem:[#allocation5 + $0x518] sm:$0xff]
    %v318 = vld [vmem:[#allocation5 + $0x520] sm:$0xff]
    %v319 = vld [vmem:[#allocation5 + $0x528] sm:$0xff]
    %v320 = vld [vmem:[#allocation5 + $0x530] sm:$0xff]
    %v321 = vld [vmem:[#allocation5 + $0x538] sm:$0xff]
    %v322 = vld [vmem:[#allocation5 + $0x540] sm:$0xff]
    %v323 = vld [vmem:[#allocation5 + $0x548] sm:$0xff]
    %v324 = vld [vmem:[#allocation5 + $0x550] sm:$0xff]
    %v325 = vld [vmem:[#allocation5 + $0x558] sm:$0xff]
    %v326 = vld [vmem:[#allocation5 + $0x560] sm:$0xff]
    %v327 = vld [vmem:[#allocation5 + $0x568] sm:$0xff]
    %v328 = vld [vmem:[#allocation5 + $0x570] sm:$0xff]
    %v329 = vld [vmem:[#allocation5 + $0x578] sm:$0xff]
    %v330 = vld [vmem:[#allocation5 + $0x580] sm:$0xff]
    %v331 = vld [vmem:[#allocation5 + $0x588] sm:$0xff]
    %v332 = vld [vmem:[#allocation5 + $0x590] sm:$0xff]
    %v333 = vld [vmem:[#allocation5 + $0x598] sm:$0xff]
    %v334 = vld [vmem:[#allocation5 + $0x5a0] sm:$0xff]
    %v335 = vld [vmem:[#allocation5 + $0x5a8] sm:$0xff]
    %v336 = vld [vmem:[#allocation5 + $0x5b0] sm:$0xff]
    %v337 = vld [vmem:[#allocation5 + $0x5b8] sm:$0xff]
    %v338 = vld [vmem:[#allocation5 + $0x5c0] sm:$0xff]
    %v339 = vld [vmem:[#allocation5 + $0x5c8] sm:$0xff]
    %v340 = vld [vmem:[#allocation5 + $0x5d0] sm:$0xff]
    %v341 = vld [vmem:[#allocation5 + $0x5d8] sm:$0xff]
    %v342 = vld [vmem:[#allocation5 + $0x5e0] sm:$0xff]
    %v343 = vld [vmem:[#allocation5 + $0x5e8] sm:$0xff]
    %v344 = vld [vmem:[#allocation5 + $0x5f0] sm:$0xff]
    %v345 = vld [vmem:[#allocation5 + $0x5f8] sm:$0xff]
    %v346 = vld [vmem:[#allocation5 + $0x600] sm:$0xff]
    %v347 = vld [vmem:[#allocation5 + $0x608] sm:$0xff]
    %v348 = vld [vmem:[#allocation5 + $0x610] sm:$0xff]
    %v349 = vld [vmem:[#allocation5 + $0x618] sm:$0xff]
    %v350 = vld [vmem:[#allocation5 + $0x620] sm:$0xff]
    %v351 = vld [vmem:[#allocation5 + $0x628] sm:$0xff]
    %v352 = vld [vmem:[#allocation5 + $0x630] sm:$0xff]
    %v353 = vld [vmem:[#allocation5 + $0x638] sm:$0xff]
    %v354 = vld [vmem:[#allocation5 + $0x640] sm:$0xff]
    %v355 = vld [vmem:[#allocation5 + $0x648] sm:$0xff]
    %v356 = vld [vmem:[#allocation5 + $0x650] sm:$0xff]
    %v357 = vld [vmem:[#allocation5 + $0x658] sm:$0xff]
    %v358 = vld [vmem:[#allocation5 + $0x660] sm:$0xff]
    %v359 = vld [vmem:[#allocation5 + $0x668] sm:$0xff]
    %v360 = vld [vmem:[#allocation5 + $0x670] sm:$0xff]
    %v361 = vld [vmem:[#allocation5 + $0x678] sm:$0xff]
    %v362 = vld [vmem:[#allocation5 + $0x680] sm:$0xff]
    %v363 = vld [vmem:[#allocation5 + $0x688] sm:$0xff]
    %v364 = vld [vmem:[#allocation5 + $0x690] sm:$0xff]
    %v365 = vld [vmem:[#allocation5 + $0x698] sm:$0xff]
    %v366 = vld [vmem:[#allocation5 + $0x6a0] sm:$0xff]
    %v367 = vld [vmem:[#allocation5 + $0x6a8] sm:$0xff]
    %v368 = vld [vmem:[#allocation5 + $0x6b0] sm:$0xff]
    %v369 = vld [vmem:[#allocation5 + $0x6b8] sm:$0xff]
    %v370 = vld [vmem:[#allocation5 + $0x6c0] sm:$0xff]
    %v371 = vld [vmem:[#allocation5 + $0x6c8] sm:$0xff]
    %v372 = vld [vmem:[#allocation5 + $0x6d0] sm:$0xff]
    %v373 = vld [vmem:[#allocation5 + $0x6d8] sm:$0xff]
    %v374 = vld [vmem:[#allocation5 + $0x6e0] sm:$0xff]
    %v375 = vld [vmem:[#allocation5 + $0x6e8] sm:$0xff]
    %v376 = vld [vmem:[#allocation5 + $0x6f0] sm:$0xff]
    %v377 = vld [vmem:[#allocation5 + $0x6f8] sm:$0xff]
    %v378 = vld [vmem:[#allocation5 + $0x700] sm:$0xff]
    %v379 = vld [vmem:[#allocation5 + $0x708] sm:$0xff]
    %v380 = vld [vmem:[#allocation5 + $0x710] sm:$0xff]
    %v381 = vld [vmem:[#allocation5 + $0x718] sm:$0xff]
    %v382 = vld [vmem:[#allocation5 + $0x720] sm:$0xff]
    %v383 = vld [vmem:[#allocation5 + $0x728] sm:$0xff]
    %v384 = vld [vmem:[#allocation5 + $0x730] sm:$0xff]
    %v385 = vld [vmem:[#allocation5 + $0x738] sm:$0xff]
    %v386 = vld [vmem:[#allocation5 + $0x740] sm:$0xff]
    %v387 = vld [vmem:[#allocation5 + $0x748] sm:$0xff]
    %v388 = vld [vmem:[#allocation5 + $0x750] sm:$0xff]
    %v389 = vld [vmem:[#allocation5 + $0x758] sm:$0xff]
    %v390 = vld [vmem:[#allocation5 + $0x760] sm:$0xff]
    %v391 = vld [vmem:[#allocation5 + $0x768] sm:$0xff]
    %v392 = vld [vmem:[#allocation5 + $0x770] sm:$0xff]
    %v393 = vld [vmem:[#allocation5 + $0x778] sm:$0xff]
    %v394 = vld [vmem:[#allocation5 + $0x780] sm:$0xff]
    %v395 = vld [vmem:[#allocation5 + $0x788] sm:$0xff]
    %v396 = vld [vmem:[#allocation5 + $0x790] sm:$0xff]
    %v397 = vld [vmem:[#allocation5 + $0x798] sm:$0xff]
    %v398 = vld [vmem:[#allocation5 + $0x7a0] sm:$0xff]
    %v399 = vld [vmem:[#allocation5 + $0x7a8] sm:$0xff]
    %v400 = vld [vmem:[#allocation5 + $0x7b0] sm:$0xff]
    %v401 = vld [vmem:[#allocation5 + $0x7b8] sm:$0xff]
    %v402 = vld [vmem:[#allocation5 + $0x7c0] sm:$0xff]
    %v403 = vld [vmem:[#allocation5 + $0x7c8] sm:$0xff]
    %v404 = vld [vmem:[#allocation5 + $0x7d0] sm:$0xff]
    %v405 = vld [vmem:[#allocation5 + $0x7d8] sm:$0xff]
    %v406 = vld [vmem:[#allocation5 + $0x7e0] sm:$0xff]
    %v407 = vld [vmem:[#allocation5 + $0x7e8] sm:$0xff]
    %v408 = vld [vmem:[#allocation5 + $0x7f0] sm:$0xff]
    %v409 = vld [vmem:[#allocation5 + $0x7f8] sm:$0xff]
    %v410 = vld [vmem:[#allocation5 + $0x800] sm:$0xff]
    %v411 = vld [vmem:[#allocation5 + $0x808] sm:$0xff]
    %v412 = vld [vmem:[#allocation5 + $0x810] sm:$0xff]
    %v413 = vld [vmem:[#allocation5 + $0x818] sm:$0xff]
    %v414 = vld [vmem:[#allocation5 + $0x820] sm:$0xff]
    %v415 = vld [vmem:[#allocation5 + $0x828] sm:$0xff]
    %v416 = vld [vmem:[#allocation5 + $0x830] sm:$0xff]
    %v417 = vld [vmem:[#allocation5 + $0x838] sm:$0xff]
    %v418 = vld [vmem:[#allocation5 + $0x840] sm:$0xff]
    %v419 = vld [vmem:[#allocation5 + $0x848] sm:$0xff]
    %v420 = vld [vmem:[#allocation5 + $0x850] sm:$0xff]
    %v421 = vld [vmem:[#allocation5 + $0x858] sm:$0xff]
    %v422 = vld [vmem:[#allocation5 + $0x860] sm:$0xff]
    %v423 = vld [vmem:[#allocation5 + $0x868] sm:$0xff]
    %v424 = vld [vmem:[#allocation5 + $0x870] sm:$0xff]
    %v425 = vld [vmem:[#allocation5 + $0x878] sm:$0xff]
    %v426 = vld [vmem:[#allocation5 + $0x880] sm:$0xff]
    %v427 = vld [vmem:[#allocation5 + $0x888] sm:$0xff]
    %v428 = vld [vmem:[#allocation5 + $0x890] sm:$0xff]
    %v429 = vld [vmem:[#allocation5 + $0x898] sm:$0xff]
    %v430 = vld [vmem:[#allocation5 + $0x8a0] sm:$0xff]
    %v431 = vld [vmem:[#allocation5 + $0x8a8] sm:$0xff]
    %v432 = vld [vmem:[#allocation5 + $0x8b0] sm:$0xff]
    %v433 = vld [vmem:[#allocation5 + $0x8b8] sm:$0xff]
    %v434 = vld [vmem:[#allocation5 + $0x8c0] sm:$0xff]
    %v435 = vld [vmem:[#allocation5 + $0x8c8] sm:$0xff]
    %v436 = vld [vmem:[#allocation5 + $0x8d0] sm:$0xff]
    %v437 = vld [vmem:[#allocation5 + $0x8d8] sm:$0xff]
    %v438 = vld [vmem:[#allocation5 + $0x8e0] sm:$0xff]
    %v439 = vld [vmem:[#allocation5 + $0x8e8] sm:$0xff]
    %v440 = vld [vmem:[#allocation5 + $0x8f0] sm:$0xff]
    %v441 = vld [vmem:[#allocation5 + $0x8f8] sm:$0xff]
    %v442 = vld [vmem:[#allocation5 + $0x900] sm:$0xff]
    %v443 = vld [vmem:[#allocation5 + $0x908] sm:$0xff]
    %v444 = vld [vmem:[#allocation5 + $0x910] sm:$0xff]
    %v445 = vld [vmem:[#allocation5 + $0x918] sm:$0xff]
    %v446 = vld [vmem:[#allocation5 + $0x920] sm:$0xff]
    %v447 = vld [vmem:[#allocation5 + $0x928] sm:$0xff]
    %v448 = vld [vmem:[#allocation5 + $0x930] sm:$0xff]
    %v449 = vld [vmem:[#allocation5 + $0x938] sm:$0xff]
    %v450 = vld [vmem:[#allocation5 + $0x940] sm:$0xff]
    %v451 = vld [vmem:[#allocation5 + $0x948] sm:$0xff]
    %v452 = vld [vmem:[#allocation5 + $0x950] sm:$0xff]
    %v453 = vld [vmem:[#allocation5 + $0x958] sm:$0xff]
    %v454 = vld [vmem:[#allocation7] sm:$0xff]
    %v456 = vlaneseq
    %v457 = vshrl.u32 %v456, 7
    %v458 = vsub.s32 0, %v457
    %v459 = vrot.slane %v454, %v458
    %v460 = vlaneseq
    %v461 = vshrl.u32 %v460, 7
    %v462 = vsub.s32 1, %v461
    %v463 = vrot.slane %v454, %v462
    %v464 = vlaneseq
    %v465 = vshrl.u32 %v464, 7
    %v466 = vsub.s32 2, %v465
    %v467 = vrot.slane %v454, %v466
    %v468 = vlaneseq
    %v469 = vshrl.u32 %v468, 7
    %v470 = vsub.s32 3, %v469
    %v471 = vrot.slane %v454, %v470
    %v472 = vlaneseq
    %v473 = vshrl.u32 %v472, 7
    %v474 = vsub.s32 4, %v473
    %v475 = vrot.slane %v454, %v474
    %v476 = vlaneseq
    %v477 = vshrl.u32 %v476, 7
    %v478 = vsub.s32 5, %v477
    %v479 = vrot.slane %v454, %v478
    %v480 = vlaneseq
    %v481 = vshrl.u32 %v480, 7
    %v482 = vsub.s32 6, %v481
    %v483 = vrot.slane %v454, %v482
    %v484 = vlaneseq
    %v485 = vshrl.u32 %v484, 7
    %v486 = vsub.s32 7, %v485
    %v487 = vrot.slane %v454, %v486
    %v502 = vunpack.c.l.b16 %v148
    %v503 = vunpack.c.h.b16 %v148
    %v504 = vunpack.c.l.b16 %v149
    %v505 = vunpack.c.h.b16 %v149
    %v506 = vunpack.c.l.b16 %v150
    %v507 = vunpack.c.l.b16 %v151
    %v508 = vunpack.c.h.b16 %v151
    %v509 = vunpack.c.l.b16 %v152
    %v510 = vunpack.c.h.b16 %v152
    %v511 = vunpack.c.l.b16 %v153
    %v512 = vpack.c.b16 %v507, %v502
    %v513 = vpack.c.b16 %v508, %v503
    %v514 = vpack.c.b16 %v509, %v504
    %v515 = vpack.c.b16 %v510, %v505
    %v516 = vpack.c.b16 %v511, %v506
    %v821 = vunpack.c.l.b16 %v154
    %v822 = vunpack.c.h.b16 %v154
    %v823 = vunpack.c.l.b16 %v155
    %v824 = vunpack.c.h.b16 %v155
    %v825 = vunpack.c.l.b16 %v156
    %v826 = vunpack.c.h.b16 %v156
    %v827 = vunpack.c.l.b16 %v157
    %v828 = vunpack.c.h.b16 %v157
    %v829 = vunpack.c.l.b16 %v158
    %v830 = vunpack.c.h.b16 %v158
    %v831 = vunpack.c.l.b16 %v159
    %v832 = vunpack.c.h.b16 %v159
    %v833 = vunpack.c.l.b16 %v160
    %v834 = vunpack.c.h.b16 %v160
    %v835 = vunpack.c.l.b16 %v161
    %v836 = vunpack.c.h.b16 %v161
    %v837 = vunpack.c.l.b16 %v162
    %v838 = vunpack.c.h.b16 %v162
    %v839 = vunpack.c.l.b16 %v163
    %v840 = vunpack.c.h.b16 %v163
    %v841 = vunpack.c.l.b16 %v164
    %v842 = vunpack.c.h.b16 %v164
    %v843 = vunpack.c.l.b16 %v165
    %v844 = vunpack.c.h.b16 %v165
    %v845 = vunpack.c.l.b16 %v166
    %v846 = vunpack.c.h.b16 %v166
    %v847 = vunpack.c.l.b16 %v167
    %v848 = vunpack.c.h.b16 %v167
    %v849 = vunpack.c.l.b16 %v168
    %v850 = vunpack.c.h.b16 %v168
    %v851 = vunpack.c.l.b16 %v169
    %v852 = vunpack.c.h.b16 %v169
    %v853 = vunpack.c.l.b16 %v170
    %v854 = vunpack.c.h.b16 %v170
    %v855 = vunpack.c.l.b16 %v171
    %v856 = vunpack.c.h.b16 %v171
    %v857 = vunpack.c.l.b16 %v172
    %v858 = vunpack.c.h.b16 %v172
    %v859 = vunpack.c.l.b16 %v173
    %v860 = vunpack.c.h.b16 %v173
    %v861 = vunpack.c.l.b16 %v174
    %v862 = vunpack.c.h.b16 %v174
    %v863 = vunpack.c.l.b16 %v175
    %v864 = vunpack.c.h.b16 %v175
    %v865 = vunpack.c.l.b16 %v176
    %v866 = vunpack.c.h.b16 %v176
    %v867 = vunpack.c.l.b16 %v177
    %v868 = vunpack.c.h.b16 %v177
    %v869 = vunpack.c.l.b16 %v178
    %v870 = vunpack.c.h.b16 %v178
    %v871 = vunpack.c.l.b16 %v179
    %v872 = vunpack.c.h.b16 %v179
    %v873 = vunpack.c.l.b16 %v180
    %v874 = vunpack.c.h.b16 %v180
    %v875 = vunpack.c.l.b16 %v181
    %v876 = vunpack.c.h.b16 %v181
    %v877 = vunpack.c.l.b16 %v182
    %v878 = vunpack.c.h.b16 %v182
    %v879 = vunpack.c.l.b16 %v183
    %v880 = vunpack.c.h.b16 %v183
    %v881 = vunpack.c.l.b16 %v184
    %v882 = vunpack.c.h.b16 %v184
    %v883 = vunpack.c.l.b16 %v185
    %v884 = vunpack.c.h.b16 %v185
    %v885 = vunpack.c.l.b16 %v186
    %v886 = vunpack.c.h.b16 %v186
    %v887 = vunpack.c.l.b16 %v187
    %v888 = vunpack.c.h.b16 %v187
    %v889 = vunpack.c.l.b16 %v188
    %v890 = vunpack.c.h.b16 %v188
    %v891 = vunpack.c.l.b16 %v189
    %v892 = vunpack.c.h.b16 %v189
    %v893 = vunpack.c.l.b16 %v190
    %v894 = vunpack.c.h.b16 %v190
    %v895 = vunpack.c.l.b16 %v191
    %v896 = vunpack.c.h.b16 %v191
    %v897 = vunpack.c.l.b16 %v192
    %v898 = vunpack.c.h.b16 %v192
    %v899 = vunpack.c.l.b16 %v193
    %v900 = vunpack.c.h.b16 %v193
    %v901 = vunpack.c.l.b16 %v194
    %v902 = vunpack.c.h.b16 %v194
    %v903 = vunpack.c.l.b16 %v195
    %v904 = vunpack.c.h.b16 %v195
    %v905 = vunpack.c.l.b16 %v196
    %v906 = vunpack.c.h.b16 %v196
    %v907 = vunpack.c.l.b16 %v197
    %v908 = vunpack.c.h.b16 %v197
    %v909 = vunpack.c.l.b16 %v198
    %v910 = vunpack.c.h.b16 %v198
    %v911 = vunpack.c.l.b16 %v199
    %v912 = vunpack.c.h.b16 %v199
    %v913 = vunpack.c.l.b16 %v200
    %v914 = vunpack.c.h.b16 %v200
    %v915 = vunpack.c.l.b16 %v201
    %v916 = vunpack.c.h.b16 %v201
    %v917 = vunpack.c.l.b16 %v202
    %v918 = vunpack.c.h.b16 %v202
    %v919 = vunpack.c.l.b16 %v203
    %v920 = vunpack.c.h.b16 %v203
    %v921 = vunpack.c.l.b16 %v204
    %v922 = vunpack.c.h.b16 %v204
    %v923 = vunpack.c.l.b16 %v205
    %v924 = vunpack.c.h.b16 %v205
    %v925 = vunpack.c.l.b16 %v206
    %v926 = vunpack.c.h.b16 %v206
    %v927 = vunpack.c.l.b16 %v207
    %v928 = vunpack.c.h.b16 %v207
    %v929 = vunpack.c.l.b16 %v208
    %v930 = vunpack.c.h.b16 %v208
    %v931 = vunpack.c.l.b16 %v209
    %v932 = vunpack.c.h.b16 %v209
    %v933 = vunpack.c.l.b16 %v210
    %v934 = vunpack.c.h.b16 %v210
    %v935 = vunpack.c.l.b16 %v211
    %v936 = vunpack.c.h.b16 %v211
    %v937 = vunpack.c.l.b16 %v212
    %v938 = vunpack.c.h.b16 %v212
    %v939 = vunpack.c.l.b16 %v213
    %v940 = vunpack.c.h.b16 %v213
    %v941 = vunpack.c.l.b16 %v214
    %v942 = vunpack.c.h.b16 %v214
    %v943 = vunpack.c.l.b16 %v215
    %v944 = vunpack.c.h.b16 %v215
    %v945 = vunpack.c.l.b16 %v216
    %v946 = vunpack.c.h.b16 %v216
    %v947 = vunpack.c.l.b16 %v217
    %v948 = vunpack.c.h.b16 %v217
    %v949 = vunpack.c.l.b16 %v218
    %v950 = vunpack.c.h.b16 %v218
    %v951 = vunpack.c.l.b16 %v219
    %v952 = vunpack.c.h.b16 %v219
    %v953 = vunpack.c.l.b16 %v220
    %v954 = vunpack.c.h.b16 %v220
    %v955 = vunpack.c.l.b16 %v221
    %v956 = vunpack.c.h.b16 %v221
    %v957 = vunpack.c.l.b16 %v222
    %v958 = vunpack.c.h.b16 %v222
    %v959 = vunpack.c.l.b16 %v223
    %v960 = vunpack.c.h.b16 %v223
    %v961 = vunpack.c.l.b16 %v224
    %v962 = vunpack.c.h.b16 %v224
    %v963 = vunpack.c.l.b16 %v225
    %v964 = vunpack.c.h.b16 %v225
    %v965 = vunpack.c.l.b16 %v226
    %v966 = vunpack.c.h.b16 %v226
    %v967 = vunpack.c.l.b16 %v227
    %v968 = vunpack.c.h.b16 %v227
    %v969 = vunpack.c.l.b16 %v228
    %v970 = vunpack.c.h.b16 %v228
    %v971 = vunpack.c.l.b16 %v229
    %v972 = vunpack.c.h.b16 %v229
    %v973 = vunpack.c.l.b16 %v230
    %v974 = vunpack.c.h.b16 %v230
    %v975 = vunpack.c.l.b16 %v231
    %v976 = vunpack.c.h.b16 %v231
    %v977 = vunpack.c.l.b16 %v232
    %v978 = vunpack.c.h.b16 %v232
    %v979 = vunpack.c.l.b16 %v233
    %v980 = vunpack.c.h.b16 %v233
    %v981 = vunpack.c.l.b16 %v234
    %v982 = vunpack.c.h.b16 %v234
    %v983 = vunpack.c.l.b16 %v235
    %v984 = vunpack.c.h.b16 %v235
    %v985 = vunpack.c.l.b16 %v236
    %v986 = vunpack.c.h.b16 %v236
    %v987 = vunpack.c.l.b16 %v237
    %v988 = vunpack.c.h.b16 %v237
    %v989 = vunpack.c.l.b16 %v238
    %v990 = vunpack.c.h.b16 %v238
    %v991 = vunpack.c.l.b16 %v239
    %v992 = vunpack.c.h.b16 %v239
    %v993 = vunpack.c.l.b16 %v240
    %v994 = vunpack.c.h.b16 %v240
    %v995 = vunpack.c.l.b16 %v241
    %v996 = vunpack.c.h.b16 %v241
    %v997 = vunpack.c.l.b16 %v242
    %v998 = vunpack.c.h.b16 %v242
    %v999 = vunpack.c.l.b16 %v243
    %v1000 = vunpack.c.h.b16 %v243
    %v1001 = vunpack.c.l.b16 %v244
    %v1002 = vunpack.c.h.b16 %v244
    %v1003 = vunpack.c.l.b16 %v245
    %v1004 = vunpack.c.h.b16 %v245
    %v1005 = vunpack.c.l.b16 %v246
    %v1006 = vunpack.c.h.b16 %v246
    %v1007 = vunpack.c.l.b16 %v247
    %v1008 = vunpack.c.h.b16 %v247
    %v1009 = vunpack.c.l.b16 %v248
    %v1010 = vunpack.c.h.b16 %v248
    %v1011 = vunpack.c.l.b16 %v249
    %v1012 = vunpack.c.h.b16 %v249
    %v1013 = vunpack.c.l.b16 %v250
    %v1014 = vunpack.c.h.b16 %v250
    %v1015 = vunpack.c.l.b16 %v251
    %v1016 = vunpack.c.h.b16 %v251
    %v1017 = vunpack.c.l.b16 %v252
    %v1018 = vunpack.c.h.b16 %v252
    %v1019 = vunpack.c.l.b16 %v253
    %v1020 = vunpack.c.h.b16 %v253
    %v1021 = vunpack.c.l.b16 %v254
    %v1022 = vunpack.c.h.b16 %v254
    %v1023 = vunpack.c.l.b16 %v255
    %v1024 = vunpack.c.h.b16 %v255
    %v1025 = vunpack.c.l.b16 %v256
    %v1026 = vunpack.c.h.b16 %v256
    %v1027 = vunpack.c.l.b16 %v257
    %v1028 = vunpack.c.h.b16 %v257
    %v1029 = vunpack.c.l.b16 %v258
    %v1030 = vunpack.c.h.b16 %v258
    %v1031 = vunpack.c.l.b16 %v259
    %v1032 = vunpack.c.h.b16 %v259
    %v1033 = vunpack.c.l.b16 %v260
    %v1034 = vunpack.c.h.b16 %v260
    %v1035 = vunpack.c.l.b16 %v261
    %v1036 = vunpack.c.h.b16 %v261
    %v1037 = vunpack.c.l.b16 %v262
    %v1038 = vunpack.c.h.b16 %v262
    %v1039 = vunpack.c.l.b16 %v263
    %v1040 = vunpack.c.h.b16 %v263
    %v1041 = vunpack.c.l.b16 %v264
    %v1042 = vunpack.c.h.b16 %v264
    %v1043 = vunpack.c.l.b16 %v265
    %v1044 = vunpack.c.h.b16 %v265
    %v1045 = vunpack.c.l.b16 %v266
    %v1046 = vunpack.c.h.b16 %v266
    %v1047 = vunpack.c.l.b16 %v267
    %v1048 = vunpack.c.h.b16 %v267
    %v1049 = vunpack.c.l.b16 %v268
    %v1050 = vunpack.c.h.b16 %v268
    %v1051 = vunpack.c.l.b16 %v269
    %v1052 = vunpack.c.h.b16 %v269
    %v1053 = vunpack.c.l.b16 %v270
    %v1054 = vunpack.c.h.b16 %v270
    %v1055 = vunpack.c.l.b16 %v271
    %v1056 = vunpack.c.h.b16 %v271
    %v1057 = vunpack.c.l.b16 %v272
    %v1058 = vunpack.c.h.b16 %v272
    %v1059 = vunpack.c.l.b16 %v273
    %v1060 = vunpack.c.h.b16 %v273
    %v1061 = vunpack.c.l.b16 %v274
    %v1062 = vunpack.c.h.b16 %v274
    %v1063 = vunpack.c.l.b16 %v275
    %v1064 = vunpack.c.h.b16 %v275
    %v1065 = vunpack.c.l.b16 %v276
    %v1066 = vunpack.c.h.b16 %v276
    %v1067 = vunpack.c.l.b16 %v277
    %v1068 = vunpack.c.h.b16 %v277
    %v1069 = vunpack.c.l.b16 %v278
    %v1070 = vunpack.c.h.b16 %v278
    %v1071 = vunpack.c.l.b16 %v279
    %v1072 = vunpack.c.h.b16 %v279
    %v1073 = vunpack.c.l.b16 %v280
    %v1074 = vunpack.c.h.b16 %v280
    %v1075 = vunpack.c.l.b16 %v281
    %v1076 = vunpack.c.h.b16 %v281
    %v1077 = vunpack.c.l.b16 %v282
    %v1078 = vunpack.c.h.b16 %v282
    %v1079 = vunpack.c.l.b16 %v283
    %v1080 = vunpack.c.h.b16 %v283
    %v1081 = vunpack.c.l.b16 %v284
    %v1082 = vunpack.c.h.b16 %v284
    %v1083 = vunpack.c.l.b16 %v285
    %v1084 = vunpack.c.h.b16 %v285
    %v1085 = vunpack.c.l.b16 %v286
    %v1086 = vunpack.c.h.b16 %v286
    %v1087 = vunpack.c.l.b16 %v287
    %v1088 = vunpack.c.h.b16 %v287
    %v1089 = vunpack.c.l.b16 %v288
    %v1090 = vunpack.c.h.b16 %v288
    %v1091 = vunpack.c.l.b16 %v289
    %v1092 = vunpack.c.h.b16 %v289
    %v1093 = vunpack.c.l.b16 %v290
    %v1094 = vunpack.c.h.b16 %v290
    %v1095 = vunpack.c.l.b16 %v291
    %v1096 = vunpack.c.h.b16 %v291
    %v1097 = vunpack.c.l.b16 %v292
    %v1098 = vunpack.c.h.b16 %v292
    %v1099 = vunpack.c.l.b16 %v293
    %v1100 = vunpack.c.h.b16 %v293
    %v1101 = vunpack.c.l.b16 %v294
    %v1102 = vunpack.c.h.b16 %v294
    %v1103 = vunpack.c.l.b16 %v295
    %v1104 = vunpack.c.h.b16 %v295
    %v1105 = vunpack.c.l.b16 %v296
    %v1106 = vunpack.c.h.b16 %v296
    %v1107 = vunpack.c.l.b16 %v297
    %v1108 = vunpack.c.h.b16 %v297
    %v1109 = vunpack.c.l.b16 %v298
    %v1110 = vunpack.c.h.b16 %v298
    %v1111 = vunpack.c.l.b16 %v299
    %v1112 = vunpack.c.h.b16 %v299
    %v1113 = vunpack.c.l.b16 %v300
    %v1114 = vunpack.c.h.b16 %v300
    %v1115 = vunpack.c.l.b16 %v301
    %v1116 = vunpack.c.h.b16 %v301
    %v1117 = vunpack.c.l.b16 %v302
    %v1118 = vunpack.c.h.b16 %v302
    %v1119 = vunpack.c.l.b16 %v303
    %v1120 = vunpack.c.h.b16 %v303
    %v1121 = vunpack.c.l.b16 %v304
    %v1122 = vunpack.c.h.b16 %v304
    %v1123 = vunpack.c.l.b16 %v305
    %v1124 = vunpack.c.h.b16 %v305
    %v1125 = vunpack.c.l.b16 %v306
    %v1126 = vunpack.c.h.b16 %v306
    %v1127 = vunpack.c.l.b16 %v307
    %v1128 = vunpack.c.h.b16 %v307
    %v1129 = vunpack.c.l.b16 %v308
    %v1130 = vunpack.c.h.b16 %v308
    %v1131 = vunpack.c.l.b16 %v309
    %v1132 = vunpack.c.h.b16 %v309
    %v1133 = vunpack.c.l.b16 %v310
    %v1134 = vunpack.c.h.b16 %v310
    %v1135 = vunpack.c.l.b16 %v311
    %v1136 = vunpack.c.h.b16 %v311
    %v1137 = vunpack.c.l.b16 %v312
    %v1138 = vunpack.c.h.b16 %v312
    %v1139 = vunpack.c.l.b16 %v313
    %v1140 = vunpack.c.h.b16 %v313
    %v1141 = vunpack.c.l.b16 %v314
    %v1142 = vunpack.c.h.b16 %v314
    %v1143 = vunpack.c.l.b16 %v315
    %v1144 = vunpack.c.h.b16 %v315
    %v1145 = vunpack.c.l.b16 %v316
    %v1146 = vunpack.c.h.b16 %v316
    %v1147 = vunpack.c.l.b16 %v317
    %v1148 = vunpack.c.h.b16 %v317
    %v1149 = vunpack.c.l.b16 %v318
    %v1150 = vunpack.c.h.b16 %v318
    %v1151 = vunpack.c.l.b16 %v319
    %v1152 = vunpack.c.h.b16 %v319
    %v1153 = vunpack.c.l.b16 %v320
    %v1154 = vunpack.c.h.b16 %v320
    %v1155 = vunpack.c.l.b16 %v321
    %v1156 = vunpack.c.h.b16 %v321
    %v1157 = vunpack.c.l.b16 %v322
    %v1158 = vunpack.c.h.b16 %v322
    %v1159 = vunpack.c.l.b16 %v323
    %v1160 = vunpack.c.h.b16 %v323
    %v1161 = vunpack.c.l.b16 %v324
    %v1162 = vunpack.c.h.b16 %v324
    %v1163 = vunpack.c.l.b16 %v325
    %v1164 = vunpack.c.h.b16 %v325
    %v1165 = vunpack.c.l.b16 %v326
    %v1166 = vunpack.c.h.b16 %v326
    %v1167 = vunpack.c.l.b16 %v327
    %v1168 = vunpack.c.h.b16 %v327
    %v1169 = vunpack.c.l.b16 %v328
    %v1170 = vunpack.c.h.b16 %v328
    %v1171 = vunpack.c.l.b16 %v329
    %v1172 = vunpack.c.h.b16 %v329
    %v1173 = vunpack.c.l.b16 %v330
    %v1174 = vunpack.c.h.b16 %v330
    %v1175 = vunpack.c.l.b16 %v331
    %v1176 = vunpack.c.h.b16 %v331
    %v1177 = vunpack.c.l.b16 %v332
    %v1178 = vunpack.c.h.b16 %v332
    %v1179 = vunpack.c.l.b16 %v333
    %v1180 = vunpack.c.h.b16 %v333
    %v1181 = vunpack.c.l.b16 %v334
    %v1182 = vunpack.c.h.b16 %v334
    %v1183 = vunpack.c.l.b16 %v335
    %v1184 = vunpack.c.h.b16 %v335
    %v1185 = vunpack.c.l.b16 %v336
    %v1186 = vunpack.c.h.b16 %v336
    %v1187 = vunpack.c.l.b16 %v337
    %v1188 = vunpack.c.h.b16 %v337
    %v1189 = vunpack.c.l.b16 %v338
    %v1190 = vunpack.c.h.b16 %v338
    %v1191 = vunpack.c.l.b16 %v339
    %v1192 = vunpack.c.h.b16 %v339
    %v1193 = vunpack.c.l.b16 %v340
    %v1194 = vunpack.c.h.b16 %v340
    %v1195 = vunpack.c.l.b16 %v341
    %v1196 = vunpack.c.h.b16 %v341
    %v1197 = vunpack.c.l.b16 %v342
    %v1198 = vunpack.c.h.b16 %v342
    %v1199 = vunpack.c.l.b16 %v343
    %v1200 = vunpack.c.h.b16 %v343
    %v1201 = vunpack.c.l.b16 %v344
    %v1202 = vunpack.c.h.b16 %v344
    %v1203 = vunpack.c.l.b16 %v345
    %v1204 = vunpack.c.h.b16 %v345
    %v1205 = vunpack.c.l.b16 %v346
    %v1206 = vunpack.c.h.b16 %v346
    %v1207 = vunpack.c.l.b16 %v347
    %v1208 = vunpack.c.h.b16 %v347
    %v1209 = vunpack.c.l.b16 %v348
    %v1210 = vunpack.c.h.b16 %v348
    %v1211 = vunpack.c.l.b16 %v349
    %v1212 = vunpack.c.h.b16 %v349
    %v1213 = vunpack.c.l.b16 %v350
    %v1214 = vunpack.c.h.b16 %v350
    %v1215 = vunpack.c.l.b16 %v351
    %v1216 = vunpack.c.h.b16 %v351
    %v1217 = vunpack.c.l.b16 %v352
    %v1218 = vunpack.c.h.b16 %v352
    %v1219 = vunpack.c.l.b16 %v353
    %v1220 = vunpack.c.h.b16 %v353
    %v1221 = vunpack.c.l.b16 %v354
    %v1222 = vunpack.c.h.b16 %v354
    %v1223 = vunpack.c.l.b16 %v355
    %v1224 = vunpack.c.h.b16 %v355
    %v1225 = vunpack.c.l.b16 %v356
    %v1226 = vunpack.c.h.b16 %v356
    %v1227 = vunpack.c.l.b16 %v357
    %v1228 = vunpack.c.h.b16 %v357
    %v1229 = vunpack.c.l.b16 %v358
    %v1230 = vunpack.c.h.b16 %v358
    %v1231 = vunpack.c.l.b16 %v359
    %v1232 = vunpack.c.h.b16 %v359
    %v1233 = vunpack.c.l.b16 %v360
    %v1234 = vunpack.c.h.b16 %v360
    %v1235 = vunpack.c.l.b16 %v361
    %v1236 = vunpack.c.h.b16 %v361
    %v1237 = vunpack.c.l.b16 %v362
    %v1238 = vunpack.c.h.b16 %v362
    %v1239 = vunpack.c.l.b16 %v363
    %v1240 = vunpack.c.h.b16 %v363
    %v1241 = vunpack.c.l.b16 %v364
    %v1242 = vunpack.c.h.b16 %v364
    %v1243 = vunpack.c.l.b16 %v365
    %v1244 = vunpack.c.h.b16 %v365
    %v1245 = vunpack.c.l.b16 %v366
    %v1246 = vunpack.c.h.b16 %v366
    %v1247 = vunpack.c.l.b16 %v367
    %v1248 = vunpack.c.h.b16 %v367
    %v1249 = vunpack.c.l.b16 %v368
    %v1250 = vunpack.c.h.b16 %v368
    %v1251 = vunpack.c.l.b16 %v369
    %v1252 = vunpack.c.h.b16 %v369
    %v1253 = vunpack.c.l.b16 %v370
    %v1254 = vunpack.c.h.b16 %v370
    %v1255 = vunpack.c.l.b16 %v371
    %v1256 = vunpack.c.h.b16 %v371
    %v1257 = vunpack.c.l.b16 %v372
    %v1258 = vunpack.c.h.b16 %v372
    %v1259 = vunpack.c.l.b16 %v373
    %v1260 = vunpack.c.h.b16 %v373
    %v1261 = vunpack.c.l.b16 %v374
    %v1262 = vunpack.c.h.b16 %v374
    %v1263 = vunpack.c.l.b16 %v375
    %v1264 = vunpack.c.h.b16 %v375
    %v1265 = vunpack.c.l.b16 %v376
    %v1266 = vunpack.c.h.b16 %v376
    %v1267 = vunpack.c.l.b16 %v377
    %v1268 = vunpack.c.h.b16 %v377
    %v1269 = vunpack.c.l.b16 %v378
    %v1270 = vunpack.c.h.b16 %v378
    %v1271 = vunpack.c.l.b16 %v379
    %v1272 = vunpack.c.h.b16 %v379
    %v1273 = vunpack.c.l.b16 %v380
    %v1274 = vunpack.c.h.b16 %v380
    %v1275 = vunpack.c.l.b16 %v381
    %v1276 = vunpack.c.h.b16 %v381
    %v1277 = vunpack.c.l.b16 %v382
    %v1278 = vunpack.c.h.b16 %v382
    %v1279 = vunpack.c.l.b16 %v383
    %v1280 = vunpack.c.h.b16 %v383
    %v1281 = vunpack.c.l.b16 %v384
    %v1282 = vunpack.c.h.b16 %v384
    %v1283 = vunpack.c.l.b16 %v385
    %v1284 = vunpack.c.h.b16 %v385
    %v1285 = vunpack.c.l.b16 %v386
    %v1286 = vunpack.c.h.b16 %v386
    %v1287 = vunpack.c.l.b16 %v387
    %v1288 = vunpack.c.h.b16 %v387
    %v1289 = vunpack.c.l.b16 %v388
    %v1290 = vunpack.c.h.b16 %v388
    %v1291 = vunpack.c.l.b16 %v389
    %v1292 = vunpack.c.h.b16 %v389
    %v1293 = vunpack.c.l.b16 %v390
    %v1294 = vunpack.c.h.b16 %v390
    %v1295 = vunpack.c.l.b16 %v391
    %v1296 = vunpack.c.h.b16 %v391
    %v1297 = vunpack.c.l.b16 %v392
    %v1298 = vunpack.c.h.b16 %v392
    %v1299 = vunpack.c.l.b16 %v393
    %v1300 = vunpack.c.h.b16 %v393
    %v1301 = vunpack.c.l.b16 %v394
    %v1302 = vunpack.c.h.b16 %v394
    %v1303 = vunpack.c.l.b16 %v395
    %v1304 = vunpack.c.h.b16 %v395
    %v1305 = vunpack.c.l.b16 %v396
    %v1306 = vunpack.c.h.b16 %v396
    %v1307 = vunpack.c.l.b16 %v397
    %v1308 = vunpack.c.h.b16 %v397
    %v1309 = vunpack.c.l.b16 %v398
    %v1310 = vunpack.c.h.b16 %v398
    %v1311 = vunpack.c.l.b16 %v399
    %v1312 = vunpack.c.h.b16 %v399
    %v1313 = vunpack.c.l.b16 %v400
    %v1314 = vunpack.c.h.b16 %v400
    %v1315 = vunpack.c.l.b16 %v401
    %v1316 = vunpack.c.h.b16 %v401
    %v1317 = vunpack.c.l.b16 %v402
    %v1318 = vunpack.c.h.b16 %v402
    %v1319 = vunpack.c.l.b16 %v403
    %v1320 = vunpack.c.h.b16 %v403
    %v1321 = vunpack.c.l.b16 %v404
    %v1322 = vunpack.c.h.b16 %v404
    %v1323 = vunpack.c.l.b16 %v405
    %v1324 = vunpack.c.h.b16 %v405
    %v1325 = vunpack.c.l.b16 %v406
    %v1326 = vunpack.c.h.b16 %v406
    %v1327 = vunpack.c.l.b16 %v407
    %v1328 = vunpack.c.h.b16 %v407
    %v1329 = vunpack.c.l.b16 %v408
    %v1330 = vunpack.c.h.b16 %v408
    %v1331 = vunpack.c.l.b16 %v409
    %v1332 = vunpack.c.h.b16 %v409
    %v1333 = vunpack.c.l.b16 %v410
    %v1334 = vunpack.c.h.b16 %v410
    %v1335 = vunpack.c.l.b16 %v411
    %v1336 = vunpack.c.h.b16 %v411
    %v1337 = vunpack.c.l.b16 %v412
    %v1338 = vunpack.c.h.b16 %v412
    %v1339 = vunpack.c.l.b16 %v413
    %v1340 = vunpack.c.h.b16 %v413
    %v1341 = vunpack.c.l.b16 %v414
    %v1342 = vunpack.c.h.b16 %v414
    %v1343 = vunpack.c.l.b16 %v415
    %v1344 = vunpack.c.h.b16 %v415
    %v1345 = vunpack.c.l.b16 %v416
    %v1346 = vunpack.c.h.b16 %v416
    %v1347 = vunpack.c.l.b16 %v417
    %v1348 = vunpack.c.h.b16 %v417
    %v1349 = vunpack.c.l.b16 %v418
    %v1350 = vunpack.c.h.b16 %v418
    %v1351 = vunpack.c.l.b16 %v419
    %v1352 = vunpack.c.h.b16 %v419
    %v1353 = vunpack.c.l.b16 %v420
    %v1354 = vunpack.c.h.b16 %v420
    %v1355 = vunpack.c.l.b16 %v421
    %v1356 = vunpack.c.h.b16 %v421
    %v1357 = vunpack.c.l.b16 %v422
    %v1358 = vunpack.c.h.b16 %v422
    %v1359 = vunpack.c.l.b16 %v423
    %v1360 = vunpack.c.h.b16 %v423
    %v1361 = vunpack.c.l.b16 %v424
    %v1362 = vunpack.c.h.b16 %v424
    %v1363 = vunpack.c.l.b16 %v425
    %v1364 = vunpack.c.h.b16 %v425
    %v1365 = vunpack.c.l.b16 %v426
    %v1366 = vunpack.c.h.b16 %v426
    %v1367 = vunpack.c.l.b16 %v427
    %v1368 = vunpack.c.h.b16 %v427
    %v1369 = vunpack.c.l.b16 %v428
    %v1370 = vunpack.c.h.b16 %v428
    %v1371 = vunpack.c.l.b16 %v429
    %v1372 = vunpack.c.h.b16 %v429
    %v1373 = vunpack.c.l.b16 %v430
    %v1374 = vunpack.c.h.b16 %v430
    %v1375 = vunpack.c.l.b16 %v431
    %v1376 = vunpack.c.h.b16 %v431
    %v1377 = vunpack.c.l.b16 %v432
    %v1378 = vunpack.c.h.b16 %v432
    %v1379 = vunpack.c.l.b16 %v433
    %v1380 = vunpack.c.h.b16 %v433
    %v1381 = vunpack.c.l.b16 %v434
    %v1382 = vunpack.c.h.b16 %v434
    %v1383 = vunpack.c.l.b16 %v435
    %v1384 = vunpack.c.h.b16 %v435
    %v1385 = vunpack.c.l.b16 %v436
    %v1386 = vunpack.c.h.b16 %v436
    %v1387 = vunpack.c.l.b16 %v437
    %v1388 = vunpack.c.h.b16 %v437
    %v1389 = vunpack.c.l.b16 %v438
    %v1390 = vunpack.c.h.b16 %v438
    %v1391 = vunpack.c.l.b16 %v439
    %v1392 = vunpack.c.h.b16 %v439
    %v1393 = vunpack.c.l.b16 %v440
    %v1394 = vunpack.c.h.b16 %v440
    %v1395 = vunpack.c.l.b16 %v441
    %v1396 = vunpack.c.h.b16 %v441
    %v1397 = vunpack.c.l.b16 %v442
    %v1398 = vunpack.c.h.b16 %v442
    %v1399 = vunpack.c.l.b16 %v443
    %v1400 = vunpack.c.h.b16 %v443
    %v1401 = vunpack.c.l.b16 %v444
    %v1402 = vunpack.c.h.b16 %v444
    %v1403 = vunpack.c.l.b16 %v445
    %v1404 = vunpack.c.h.b16 %v445
    %v1405 = vunpack.c.l.b16 %v446
    %v1406 = vunpack.c.h.b16 %v446
    %v1407 = vunpack.c.l.b16 %v447
    %v1408 = vunpack.c.h.b16 %v447
    %v1409 = vunpack.c.l.b16 %v448
    %v1410 = vunpack.c.h.b16 %v448
    %v1411 = vunpack.c.l.b16 %v449
    %v1412 = vunpack.c.h.b16 %v449
    %v1413 = vunpack.c.l.b16 %v450
    %v1414 = vunpack.c.h.b16 %v450
    %v1415 = vunpack.c.l.b16 %v451
    %v1416 = vunpack.c.h.b16 %v451
    %v1417 = vunpack.c.l.b16 %v452
    %v1418 = vunpack.c.h.b16 %v452
    %v1419 = vunpack.c.l.b16 %v453
    %v1420 = vunpack.c.h.b16 %v453
    %v1421 = vpack.c.b16 %v829, %v821
    %v1422 = vpack.c.b16 %v830, %v822
    %v1423 = vpack.c.b16 %v831, %v823
    %v1424 = vpack.c.b16 %v832, %v824
    %v1425 = vpack.c.b16 %v833, %v825
    %v1426 = vpack.c.b16 %v834, %v826
    %v1427 = vpack.c.b16 %v835, %v827
    %v1428 = vpack.c.b16 %v836, %v828
    %v1429 = vpack.c.b16 %v845, %v837
    %v1430 = vpack.c.b16 %v846, %v838
    %v1431 = vpack.c.b16 %v847, %v839
    %v1432 = vpack.c.b16 %v848, %v840
    %v1433 = vpack.c.b16 %v849, %v841
    %v1434 = vpack.c.b16 %v850, %v842
    %v1435 = vpack.c.b16 %v851, %v843
    %v1436 = vpack.c.b16 %v852, %v844
    %v1437 = vpack.c.b16 %v861, %v853
    %v1438 = vpack.c.b16 %v862, %v854
    %v1439 = vpack.c.b16 %v863, %v855
    %v1440 = vpack.c.b16 %v864, %v856
    %v1441 = vpack.c.b16 %v865, %v857
    %v1442 = vpack.c.b16 %v866, %v858
    %v1443 = vpack.c.b16 %v867, %v859
    %v1444 = vpack.c.b16 %v868, %v860
    %v1445 = vpack.c.b16 %v877, %v869
    %v1446 = vpack.c.b16 %v878, %v870
    %v1447 = vpack.c.b16 %v879, %v871
    %v1448 = vpack.c.b16 %v880, %v872
    %v1449 = vpack.c.b16 %v881, %v873
    %v1450 = vpack.c.b16 %v882, %v874
    %v1451 = vpack.c.b16 %v883, %v875
    %v1452 = vpack.c.b16 %v884, %v876
    %v1453 = vpack.c.b16 %v893, %v885
    %v1454 = vpack.c.b16 %v894, %v886
    %v1455 = vpack.c.b16 %v895, %v887
    %v1456 = vpack.c.b16 %v896, %v888
    %v1457 = vpack.c.b16 %v897, %v889
    %v1458 = vpack.c.b16 %v898, %v890
    %v1459 = vpack.c.b16 %v899, %v891
    %v1460 = vpack.c.b16 %v900, %v892
    %v1461 = vpack.c.b16 %v909, %v901
    %v1462 = vpack.c.b16 %v910, %v902
    %v1463 = vpack.c.b16 %v911, %v903
    %v1464 = vpack.c.b16 %v912, %v904
    %v1465 = vpack.c.b16 %v913, %v905
    %v1466 = vpack.c.b16 %v914, %v906
    %v1467 = vpack.c.b16 %v915, %v907
    %v1468 = vpack.c.b16 %v916, %v908
    %v1469 = vpack.c.b16 %v925, %v917
    %v1470 = vpack.c.b16 %v926, %v918
    %v1471 = vpack.c.b16 %v927, %v919
    %v1472 = vpack.c.b16 %v928, %v920
    %v1473 = vpack.c.b16 %v929, %v921
    %v1474 = vpack.c.b16 %v930, %v922
    %v1475 = vpack.c.b16 %v931, %v923
    %v1476 = vpack.c.b16 %v932, %v924
    %v1477 = vpack.c.b16 %v941, %v933
    %v1478 = vpack.c.b16 %v942, %v934
    %v1479 = vpack.c.b16 %v943, %v935
    %v1480 = vpack.c.b16 %v944, %v936
    %v1481 = vpack.c.b16 %v945, %v937
    %v1482 = vpack.c.b16 %v946, %v938
    %v1483 = vpack.c.b16 %v947, %v939
    %v1484 = vpack.c.b16 %v948, %v940
    %v1485 = vpack.c.b16 %v957, %v949
    %v1486 = vpack.c.b16 %v958, %v950
    %v1487 = vpack.c.b16 %v959, %v951
    %v1488 = vpack.c.b16 %v960, %v952
    %v1489 = vpack.c.b16 %v961, %v953
    %v1490 = vpack.c.b16 %v962, %v954
    %v1491 = vpack.c.b16 %v963, %v955
    %v1492 = vpack.c.b16 %v964, %v956
    %v1493 = vpack.c.b16 %v973, %v965
    %v1494 = vpack.c.b16 %v974, %v966
    %v1495 = vpack.c.b16 %v975, %v967
    %v1496 = vpack.c.b16 %v976, %v968
    %v1497 = vpack.c.b16 %v977, %v969
    %v1498 = vpack.c.b16 %v978, %v970
    %v1499 = vpack.c.b16 %v979, %v971
    %v1500 = vpack.c.b16 %v980, %v972
    %v1501 = vpack.c.b16 %v989, %v981
    %v1502 = vpack.c.b16 %v990, %v982
    %v1503 = vpack.c.b16 %v991, %v983
    %v1504 = vpack.c.b16 %v992, %v984
    %v1505 = vpack.c.b16 %v993, %v985
    %v1506 = vpack.c.b16 %v994, %v986
    %v1507 = vpack.c.b16 %v995, %v987
    %v1508 = vpack.c.b16 %v996, %v988
    %v1509 = vpack.c.b16 %v1005, %v997
    %v1510 = vpack.c.b16 %v1006, %v998
    %v1511 = vpack.c.b16 %v1007, %v999
    %v1512 = vpack.c.b16 %v1008, %v1000
    %v1513 = vpack.c.b16 %v1009, %v1001
    %v1514 = vpack.c.b16 %v1010, %v1002
    %v1515 = vpack.c.b16 %v1011, %v1003
    %v1516 = vpack.c.b16 %v1012, %v1004
    %v1517 = vpack.c.b16 %v1021, %v1013
    %v1518 = vpack.c.b16 %v1022, %v1014
    %v1519 = vpack.c.b16 %v1023, %v1015
    %v1520 = vpack.c.b16 %v1024, %v1016
    %v1521 = vpack.c.b16 %v1025, %v1017
    %v1522 = vpack.c.b16 %v1026, %v1018
    %v1523 = vpack.c.b16 %v1027, %v1019
    %v1524 = vpack.c.b16 %v1028, %v1020
    %v1525 = vpack.c.b16 %v1037, %v1029
    %v1526 = vpack.c.b16 %v1038, %v1030
    %v1527 = vpack.c.b16 %v1039, %v1031
    %v1528 = vpack.c.b16 %v1040, %v1032
    %v1529 = vpack.c.b16 %v1041, %v1033
    %v1530 = vpack.c.b16 %v1042, %v1034
    %v1531 = vpack.c.b16 %v1043, %v1035
    %v1532 = vpack.c.b16 %v1044, %v1036
    %v1533 = vpack.c.b16 %v1053, %v1045
    %v1534 = vpack.c.b16 %v1054, %v1046
    %v1535 = vpack.c.b16 %v1055, %v1047
    %v1536 = vpack.c.b16 %v1056, %v1048
    %v1537 = vpack.c.b16 %v1057, %v1049
    %v1538 = vpack.c.b16 %v1058, %v1050
    %v1539 = vpack.c.b16 %v1059, %v1051
    %v1540 = vpack.c.b16 %v1060, %v1052
    %v1541 = vpack.c.b16 %v1069, %v1061
    %v1542 = vpack.c.b16 %v1070, %v1062
    %v1543 = vpack.c.b16 %v1071, %v1063
    %v1544 = vpack.c.b16 %v1072, %v1064
    %v1545 = vpack.c.b16 %v1073, %v1065
    %v1546 = vpack.c.b16 %v1074, %v1066
    %v1547 = vpack.c.b16 %v1075, %v1067
    %v1548 = vpack.c.b16 %v1076, %v1068
    %v1549 = vpack.c.b16 %v1085, %v1077
    %v1550 = vpack.c.b16 %v1086, %v1078
    %v1551 = vpack.c.b16 %v1087, %v1079
    %v1552 = vpack.c.b16 %v1088, %v1080
    %v1553 = vpack.c.b16 %v1089, %v1081
    %v1554 = vpack.c.b16 %v1090, %v1082
    %v1555 = vpack.c.b16 %v1091, %v1083
    %v1556 = vpack.c.b16 %v1092, %v1084
    %v1557 = vpack.c.b16 %v1101, %v1093
    %v1558 = vpack.c.b16 %v1102, %v1094
    %v1559 = vpack.c.b16 %v1103, %v1095
    %v1560 = vpack.c.b16 %v1104, %v1096
    %v1561 = vpack.c.b16 %v1105, %v1097
    %v1562 = vpack.c.b16 %v1106, %v1098
    %v1563 = vpack.c.b16 %v1107, %v1099
    %v1564 = vpack.c.b16 %v1108, %v1100
    %v1565 = vpack.c.b16 %v1117, %v1109
    %v1566 = vpack.c.b16 %v1118, %v1110
    %v1567 = vpack.c.b16 %v1119, %v1111
    %v1568 = vpack.c.b16 %v1120, %v1112
    %v1569 = vpack.c.b16 %v1121, %v1113
    %v1570 = vpack.c.b16 %v1122, %v1114
    %v1571 = vpack.c.b16 %v1123, %v1115
    %v1572 = vpack.c.b16 %v1124, %v1116
    %v1573 = vpack.c.b16 %v1133, %v1125
    %v1574 = vpack.c.b16 %v1134, %v1126
    %v1575 = vpack.c.b16 %v1135, %v1127
    %v1576 = vpack.c.b16 %v1136, %v1128
    %v1577 = vpack.c.b16 %v1137, %v1129
    %v1578 = vpack.c.b16 %v1138, %v1130
    %v1579 = vpack.c.b16 %v1139, %v1131
    %v1580 = vpack.c.b16 %v1140, %v1132
    %v1581 = vpack.c.b16 %v1149, %v1141
    %v1582 = vpack.c.b16 %v1150, %v1142
    %v1583 = vpack.c.b16 %v1151, %v1143
    %v1584 = vpack.c.b16 %v1152, %v1144
    %v1585 = vpack.c.b16 %v1153, %v1145
    %v1586 = vpack.c.b16 %v1154, %v1146
    %v1587 = vpack.c.b16 %v1155, %v1147
    %v1588 = vpack.c.b16 %v1156, %v1148
    %v1589 = vpack.c.b16 %v1165, %v1157
    %v1590 = vpack.c.b16 %v1166, %v1158
    %v1591 = vpack.c.b16 %v1167, %v1159
    %v1592 = vpack.c.b16 %v1168, %v1160
    %v1593 = vpack.c.b16 %v1169, %v1161
    %v1594 = vpack.c.b16 %v1170, %v1162
    %v1595 = vpack.c.b16 %v1171, %v1163
    %v1596 = vpack.c.b16 %v1172, %v1164
    %v1597 = vpack.c.b16 %v1181, %v1173
    %v1598 = vpack.c.b16 %v1182, %v1174
    %v1599 = vpack.c.b16 %v1183, %v1175
    %v1600 = vpack.c.b16 %v1184, %v1176
    %v1601 = vpack.c.b16 %v1185, %v1177
    %v1602 = vpack.c.b16 %v1186, %v1178
    %v1603 = vpack.c.b16 %v1187, %v1179
    %v1604 = vpack.c.b16 %v1188, %v1180
    %v1605 = vpack.c.b16 %v1197, %v1189
    %v1606 = vpack.c.b16 %v1198, %v1190
    %v1607 = vpack.c.b16 %v1199, %v1191
    %v1608 = vpack.c.b16 %v1200, %v1192
    %v1609 = vpack.c.b16 %v1201, %v1193
    %v1610 = vpack.c.b16 %v1202, %v1194
    %v1611 = vpack.c.b16 %v1203, %v1195
    %v1612 = vpack.c.b16 %v1204, %v1196
    %v1613 = vpack.c.b16 %v1213, %v1205
    %v1614 = vpack.c.b16 %v1214, %v1206
    %v1615 = vpack.c.b16 %v1215, %v1207
    %v1616 = vpack.c.b16 %v1216, %v1208
    %v1617 = vpack.c.b16 %v1217, %v1209
    %v1618 = vpack.c.b16 %v1218, %v1210
    %v1619 = vpack.c.b16 %v1219, %v1211
    %v1620 = vpack.c.b16 %v1220, %v1212
    %v1621 = vpack.c.b16 %v1229, %v1221
    %v1622 = vpack.c.b16 %v1230, %v1222
    %v1623 = vpack.c.b16 %v1231, %v1223
    %v1624 = vpack.c.b16 %v1232, %v1224
    %v1625 = vpack.c.b16 %v1233, %v1225
    %v1626 = vpack.c.b16 %v1234, %v1226
    %v1627 = vpack.c.b16 %v1235, %v1227
    %v1628 = vpack.c.b16 %v1236, %v1228
    %v1629 = vpack.c.b16 %v1245, %v1237
    %v1630 = vpack.c.b16 %v1246, %v1238
    %v1631 = vpack.c.b16 %v1247, %v1239
    %v1632 = vpack.c.b16 %v1248, %v1240
    %v1633 = vpack.c.b16 %v1249, %v1241
    %v1634 = vpack.c.b16 %v1250, %v1242
    %v1635 = vpack.c.b16 %v1251, %v1243
    %v1636 = vpack.c.b16 %v1252, %v1244
    %v1637 = vpack.c.b16 %v1261, %v1253
    %v1638 = vpack.c.b16 %v1262, %v1254
    %v1639 = vpack.c.b16 %v1263, %v1255
    %v1640 = vpack.c.b16 %v1264, %v1256
    %v1641 = vpack.c.b16 %v1265, %v1257
    %v1642 = vpack.c.b16 %v1266, %v1258
    %v1643 = vpack.c.b16 %v1267, %v1259
    %v1644 = vpack.c.b16 %v1268, %v1260
    %v1645 = vpack.c.b16 %v1277, %v1269
    %v1646 = vpack.c.b16 %v1278, %v1270
    %v1647 = vpack.c.b16 %v1279, %v1271
    %v1648 = vpack.c.b16 %v1280, %v1272
    %v1649 = vpack.c.b16 %v1281, %v1273
    %v1650 = vpack.c.b16 %v1282, %v1274
    %v1651 = vpack.c.b16 %v1283, %v1275
    %v1652 = vpack.c.b16 %v1284, %v1276
    %v1653 = vpack.c.b16 %v1293, %v1285
    %v1654 = vpack.c.b16 %v1294, %v1286
    %v1655 = vpack.c.b16 %v1295, %v1287
    %v1656 = vpack.c.b16 %v1296, %v1288
    %v1657 = vpack.c.b16 %v1297, %v1289
    %v1658 = vpack.c.b16 %v1298, %v1290
    %v1659 = vpack.c.b16 %v1299, %v1291
    %v1660 = vpack.c.b16 %v1300, %v1292
    %v1661 = vpack.c.b16 %v1309, %v1301
    %v1662 = vpack.c.b16 %v1310, %v1302
    %v1663 = vpack.c.b16 %v1311, %v1303
    %v1664 = vpack.c.b16 %v1312, %v1304
    %v1665 = vpack.c.b16 %v1313, %v1305
    %v1666 = vpack.c.b16 %v1314, %v1306
    %v1667 = vpack.c.b16 %v1315, %v1307
    %v1668 = vpack.c.b16 %v1316, %v1308
    %v1669 = vpack.c.b16 %v1325, %v1317
    %v1670 = vpack.c.b16 %v1326, %v1318
    %v1671 = vpack.c.b16 %v1327, %v1319
    %v1672 = vpack.c.b16 %v1328, %v1320
    %v1673 = vpack.c.b16 %v1329, %v1321
    %v1674 = vpack.c.b16 %v1330, %v1322
    %v1675 = vpack.c.b16 %v1331, %v1323
    %v1676 = vpack.c.b16 %v1332, %v1324
    %v1677 = vpack.c.b16 %v1341, %v1333
    %v1678 = vpack.c.b16 %v1342, %v1334
    %v1679 = vpack.c.b16 %v1343, %v1335
    %v1680 = vpack.c.b16 %v1344, %v1336
    %v1681 = vpack.c.b16 %v1345, %v1337
    %v1682 = vpack.c.b16 %v1346, %v1338
    %v1683 = vpack.c.b16 %v1347, %v1339
    %v1684 = vpack.c.b16 %v1348, %v1340
    %v1685 = vpack.c.b16 %v1357, %v1349
    %v1686 = vpack.c.b16 %v1358, %v1350
    %v1687 = vpack.c.b16 %v1359, %v1351
    %v1688 = vpack.c.b16 %v1360, %v1352
    %v1689 = vpack.c.b16 %v1361, %v1353
    %v1690 = vpack.c.b16 %v1362, %v1354
    %v1691 = vpack.c.b16 %v1363, %v1355
    %v1692 = vpack.c.b16 %v1364, %v1356
    %v1693 = vpack.c.b16 %v1373, %v1365
    %v1694 = vpack.c.b16 %v1374, %v1366
    %v1695 = vpack.c.b16 %v1375, %v1367
    %v1696 = vpack.c.b16 %v1376, %v1368
    %v1697 = vpack.c.b16 %v1377, %v1369
    %v1698 = vpack.c.b16 %v1378, %v1370
    %v1699 = vpack.c.b16 %v1379, %v1371
    %v1700 = vpack.c.b16 %v1380, %v1372
    %v1701 = vpack.c.b16 %v1389, %v1381
    %v1702 = vpack.c.b16 %v1390, %v1382
    %v1703 = vpack.c.b16 %v1391, %v1383
    %v1704 = vpack.c.b16 %v1392, %v1384
    %v1705 = vpack.c.b16 %v1393, %v1385
    %v1706 = vpack.c.b16 %v1394, %v1386
    %v1707 = vpack.c.b16 %v1395, %v1387
    %v1708 = vpack.c.b16 %v1396, %v1388
    %v1709 = vpack.c.b16 %v1405, %v1397
    %v1710 = vpack.c.b16 %v1406, %v1398
    %v1711 = vpack.c.b16 %v1407, %v1399
    %v1712 = vpack.c.b16 %v1408, %v1400
    %v1713 = vpack.c.b16 %v1409, %v1401
    %v1714 = vpack.c.b16 %v1410, %v1402
    %v1715 = vpack.c.b16 %v1411, %v1403
    %v1716 = vpack.c.b16 %v1412, %v1404
    %v1717 = vpack.c.b16 %v1413, %v1413
    %v1718 = vpack.c.b16 %v1414, %v1414
    %v1719 = vpack.c.b16 %v1415, %v1415
    %v1720 = vpack.c.b16 %v1416, %v1416
    %v1721 = vpack.c.b16 %v1417, %v1417
    %v1722 = vpack.c.b16 %v1418, %v1418
    %v1723 = vpack.c.b16 %v1419, %v1419
    %v1724 = vpack.c.b16 %v1420, %v1420
    %vm2021 = vcmask 719872
    %v2023 = vsel %vm2021, %v516, 0
    %vm2025 = vcmask 1043456
    %v2027 = vsel %vm2025, %v1717, 0
    %v2030 = vsel %vm2025, %v1718, 0
    %v2033 = vsel %vm2025, %v1719, 0
    %v2036 = vsel %vm2025, %v1720, 0
    %v2039 = vsel %vm2025, %v1721, 0
    %v2042 = vsel %vm2025, %v1722, 0
    %v2045 = vsel %vm2025, %v1723, 0
    %v2048 = vsel %vm2025, %v1724, 0
    %2050 = vmatprep.subr.bf16.mxu0 %v1422
    %2051 = vmatpush1.bf16.msra.mxu0 %v1421
    %2052 = vmatprep.subr.bf16.mxu0 %v1430
    %2053 = vmatpush1.bf16.msra.mxu0 %v1429
    %2054 = vmatprep.subr.bf16.mxu0 %v1438
    %2055 = vmatpush1.bf16.msra.mxu0 %v1437
    %2056 = vmatprep.subr.bf16.mxu0 %v1446
    %2057 = vmatpush1.bf16.msra.mxu0 %v1445
    %2058 = vmatprep.subr.bf16.mxu0 %v1454
    %2059 = vmatpush1.bf16.msra.mxu0 %v1453
    %2060 = vmatprep.subr.bf16.mxu0 %v1462
    %2061 = vmatpush1.bf16.msra.mxu0 %v1461
    %2062 = vmatprep.subr.bf16.mxu0 %v1470
    %2063 = vmatpush1.bf16.msra.mxu0 %v1469
    %2064 = vmatprep.subr.bf16.mxu0 %v1478
    %2065 = vmatpush1.bf16.msra.mxu0 %v1477
    %2066 = vmatprep.subr.bf16.mxu0 %v1486
    %2067 = vmatpush1.bf16.msra.mxu0 %v1485
    %2068 = vmatprep.subr.bf16.mxu0 %v1494
    %2069 = vmatpush1.bf16.msra.mxu0 %v1493
    %2070 = vmatprep.subr.bf16.mxu0 %v1502
    %2071 = vmatpush1.bf16.msra.mxu0 %v1501
    %2072 = vmatprep.subr.bf16.mxu0 %v1510
    %2073 = vmatpush1.bf16.msra.mxu0 %v1509
    %2074 = vmatprep.subr.bf16.mxu0 %v1518
    %2075 = vmatpush1.bf16.msra.mxu0 %v1517
    %2076 = vmatprep.subr.bf16.mxu0 %v1526
    %2077 = vmatpush1.bf16.msra.mxu0 %v1525
    %2078 = vmatprep.subr.bf16.mxu0 %v1534
    %2079 = vmatpush1.bf16.msra.mxu0 %v1533
    %2080 = vmatprep.subr.bf16.mxu0 %v1542
    %2081 = vmatpush1.bf16.msra.mxu0 %v1541
    %2082 = vmatprep.mubr.bf16.mxu0 %v513
    %2083 = vmatmul.mubr.bf16.gmra.mrb[0].mxu0 %v512
    %v2084 = vpop.f32.mrb[0].mxu0
    %v2085 = vadd.f32 %v459, %v2084
    %v2086 = vpop.f32.mrb[0].mxu0
    %v2087 = vadd.f32 %v463, %v2086
    %v2088 = vpop.f32.mrb[0].mxu0
    %v2089 = vadd.f32 %v459, %v2088
    %v2090 = vpop.f32.mrb[0].mxu0
    %v2091 = vadd.f32 %v463, %v2090
    %2092 = vdwg.mxu0
    %2093 = vmatprep.subr.bf16.mxu0 %v1550
    %2094 = vmatpush1.bf16.msra.mxu0 %v1549
    %2095 = vmatprep.subr.bf16.mxu0 %v1558
    %2096 = vmatpush1.bf16.msra.mxu0 %v1557
    %2097 = vmatprep.subr.bf16.mxu0 %v1566
    %2098 = vmatpush1.bf16.msra.mxu0 %v1565
    %2099 = vmatprep.subr.bf16.mxu0 %v1574
    %2100 = vmatpush1.bf16.msra.mxu0 %v1573
    %2101 = vmatprep.subr.bf16.mxu0 %v1582
    %2102 = vmatpush1.bf16.msra.mxu0 %v1581
    %2103 = vmatprep.subr.bf16.mxu0 %v1590
    %2104 = vmatpush1.bf16.msra.mxu0 %v1589
    %2105 = vmatprep.subr.bf16.mxu0 %v1598
    %2106 = vmatpush1.bf16.msra.mxu0 %v1597
    %2107 = vmatprep.subr.bf16.mxu0 %v1606
    %2108 = vmatpush1.bf16.msra.mxu0 %v1605
    %2109 = vmatprep.subr.bf16.mxu0 %v1614
    %2110 = vmatpush1.bf16.msra.mxu0 %v1613
    %2111 = vmatprep.subr.bf16.mxu0 %v1622
    %2112 = vmatpush1.bf16.msra.mxu0 %v1621
    %2113 = vmatprep.subr.bf16.mxu0 %v1630
    %2114 = vmatpush1.bf16.msra.mxu0 %v1629
    %2115 = vmatprep.subr.bf16.mxu0 %v1638
    %2116 = vmatpush1.bf16.msra.mxu0 %v1637
    %2117 = vmatprep.subr.bf16.mxu0 %v1646
    %2118 = vmatpush1.bf16.msra.mxu0 %v1645
    %2119 = vmatprep.subr.bf16.mxu0 %v1654
    %2120 = vmatpush1.bf16.msra.mxu0 %v1653
    %2121 = vmatprep.subr.bf16.mxu0 %v1662
    %2122 = vmatpush1.bf16.msra.mxu0 %v1661
    %2123 = vmatprep.subr.bf16.mxu0 %v1670
    %2124 = vmatpush1.bf16.msra.mxu0 %v1669
    %2125 = vmatprep.mubr.bf16.mxu0 %v515
    %2126 = vmatmul.mubr.bf16.gmra.mrb[0].mxu0 %v514
    %v2127 = vpop.f32.mrb[0].mxu0
    %v2128 = vadd.f32 %v2085, %v2127
    %v2129 = vpop.f32.mrb[0].mxu0
    %v2130 = vadd.f32 %v2087, %v2129
    %v2131 = vpop.f32.mrb[0].mxu0
    %v2132 = vadd.f32 %v2089, %v2131
    %v2133 = vpop.f32.mrb[0].mxu0
    %v2134 = vadd.f32 %v2091, %v2133
    %2135 = vdwg.mxu0
    %2136 = vmatprep.subr.bf16.mxu0 %v1678
    %2137 = vmatpush1.bf16.msra.mxu0 %v1677
    %2138 = vmatprep.subr.bf16.mxu0 %v1686
    %2139 = vmatpush1.bf16.msra.mxu0 %v1685
    %2140 = vmatprep.subr.bf16.mxu0 %v1694
    %2141 = vmatpush1.bf16.msra.mxu0 %v1693
    %2142 = vmatprep.subr.bf16.mxu0 %v1702
    %2143 = vmatpush1.bf16.msra.mxu0 %v1701
    %2144 = vmatprep.subr.bf16.mxu0 %v1710
    %2145 = vmatpush1.bf16.msra.mxu0 %v1709
    %2146 = vmatprep.subr.bf16.mxu0 %v2030
    %2147 = vmatpush1.bf16.msra.mxu0 %v2027
    %2148 = vmatprep.subr.bf16.mxu0 0
    %2149 = vmatpush1.bf16.msra.mxu0 0
    %2150 = vmatprep.subr.bf16.mxu0 0
    %2151 = vmatpush1.bf16.msra.mxu0 0
    %2152 = vmatprep.subr.bf16.mxu0 0
    %2153 = vmatpush1.bf16.msra.mxu0 0
    %2154 = vmatprep.subr.bf16.mxu0 0
    %2155 = vmatpush1.bf16.msra.mxu0 0
    %2156 = vmatprep.subr.bf16.mxu0 0
    %2157 = vmatpush1.bf16.msra.mxu0 0
    %2158 = vmatprep.subr.bf16.mxu0 0
    %2159 = vmatpush1.bf16.msra.mxu0 0
    %2160 = vmatprep.subr.bf16.mxu0 0
    %2161 = vmatpush1.bf16.msra.mxu0 0
    %2162 = vmatprep.subr.bf16.mxu0 0
    %2163 = vmatpush1.bf16.msra.mxu0 0
    %2164 = vmatprep.subr.bf16.mxu0 0
    %2165 = vmatpush1.bf16.msra.mxu0 0
    %2166 = vmatprep.subr.bf16.mxu0 0
    %2167 = vmatpush1.bf16.msra.mxu0 0
    %2168 = vmatprep.mubr.bf16.mxu0 0
    %2169 = vmatmul.mubr.bf16.gmra.mrb[0].mxu0 %v2023
    %v2170 = vpop.f32.mrb[0].mxu0
    %v2171 = vadd.f32 %v2128, %v2170
    %v2172 = vpop.f32.mrb[0].mxu0
    %v2173 = vadd.f32 %v2130, %v2172
    %v2174 = vpop.f32.mrb[0].mxu0
    %v2175 = vadd.f32 %v2132, %v2174
    %v2176 = vpop.f32.mrb[0].mxu0
    %v2177 = vadd.f32 %v2134, %v2176
    %2178 = vdwg.mxu0
    %2179 = vmatprep.subr.bf16.mxu0 %v1424
    %2180 = vmatpush1.bf16.msra.mxu0 %v1423
    %2181 = vmatprep.subr.bf16.mxu0 %v1432
    %2182 = vmatpush1.bf16.msra.mxu0 %v1431
    %2183 = vmatprep.subr.bf16.mxu0 %v1440
    %2184 = vmatpush1.bf16.msra.mxu0 %v1439
    %2185 = vmatprep.subr.bf16.mxu0 %v1448
    %2186 = vmatpush1.bf16.msra.mxu0 %v1447
    %2187 = vmatprep.subr.bf16.mxu0 %v1456
    %2188 = vmatpush1.bf16.msra.mxu0 %v1455
    %2189 = vmatprep.subr.bf16.mxu0 %v1464
    %2190 = vmatpush1.bf16.msra.mxu0 %v1463
    %2191 = vmatprep.subr.bf16.mxu0 %v1472
    %2192 = vmatpush1.bf16.msra.mxu0 %v1471
    %2193 = vmatprep.subr.bf16.mxu0 %v1480
    %2194 = vmatpush1.bf16.msra.mxu0 %v1479
    %2195 = vmatprep.subr.bf16.mxu0 %v1488
    %2196 = vmatpush1.bf16.msra.mxu0 %v1487
    %2197 = vmatprep.subr.bf16.mxu0 %v1496
    %2198 = vmatpush1.bf16.msra.mxu0 %v1495
    %2199 = vmatprep.subr.bf16.mxu0 %v1504
    %2200 = vmatpush1.bf16.msra.mxu0 %v1503
    %2201 = vmatprep.subr.bf16.mxu0 %v1512
    %2202 = vmatpush1.bf16.msra.mxu0 %v1511
    %2203 = vmatprep.subr.bf16.mxu0 %v1520
    %2204 = vmatpush1.bf16.msra.mxu0 %v1519
    %2205 = vmatprep.subr.bf16.mxu0 %v1528
    %2206 = vmatpush1.bf16.msra.mxu0 %v1527
    %2207 = vmatprep.subr.bf16.mxu0 %v1536
    %2208 = vmatpush1.bf16.msra.mxu0 %v1535
    %2209 = vmatprep.subr.bf16.mxu0 %v1544
    %2210 = vmatpush1.bf16.msra.mxu0 %v1543
    %2211 = vmatprep.mubr.bf16.mxu0 %v513
    %2212 = vmatmul.mubr.bf16.gmra.mrb[0].mxu0 %v512
    %v2213 = vpop.f32.mrb[0].mxu0
    %v2214 = vadd.f32 %v467, %v2213
    %v2215 = vpop.f32.mrb[0].mxu0
    %v2216 = vadd.f32 %v471, %v2215
    %v2217 = vpop.f32.mrb[0].mxu0
    %v2218 = vadd.f32 %v467, %v2217
    %v2219 = vpop.f32.mrb[0].mxu0
    %v2220 = vadd.f32 %v471, %v2219
    %2221 = vdwg.mxu0
    %2222 = vmatprep.subr.bf16.mxu0 %v1552
    %2223 = vmatpush1.bf16.msra.mxu0 %v1551
    %2224 = vmatprep.subr.bf16.mxu0 %v1560
    %2225 = vmatpush1.bf16.msra.mxu0 %v1559
    %2226 = vmatprep.subr.bf16.mxu0 %v1568
    %2227 = vmatpush1.bf16.msra.mxu0 %v1567
    %2228 = vmatprep.subr.bf16.mxu0 %v1576
    %2229 = vmatpush1.bf16.msra.mxu0 %v1575
    %2230 = vmatprep.subr.bf16.mxu0 %v1584
    %2231 = vmatpush1.bf16.msra.mxu0 %v1583
    %2232 = vmatprep.subr.bf16.mxu0 %v1592
    %2233 = vmatpush1.bf16.msra.mxu0 %v1591
    %2234 = vmatprep.subr.bf16.mxu0 %v1600
    %2235 = vmatpush1.bf16.msra.mxu0 %v1599
    %2236 = vmatprep.subr.bf16.mxu0 %v1608
    %2237 = vmatpush1.bf16.msra.mxu0 %v1607
    %2238 = vmatprep.subr.bf16.mxu0 %v1616
    %2239 = vmatpush1.bf16.msra.mxu0 %v1615
    %2240 = vmatprep.subr.bf16.mxu0 %v1624
    %2241 = vmatpush1.bf16.msra.mxu0 %v1623
    %2242 = vmatprep.subr.bf16.mxu0 %v1632
    %2243 = vmatpush1.bf16.msra.mxu0 %v1631
    %2244 = vmatprep.subr.bf16.mxu0 %v1640
    %2245 = vmatpush1.bf16.msra.mxu0 %v1639
    %2246 = vmatprep.subr.bf16.mxu0 %v1648
    %2247 = vmatpush1.bf16.msra.mxu0 %v1647
    %2248 = vmatprep.subr.bf16.mxu0 %v1656
    %2249 = vmatpush1.bf16.msra.mxu0 %v1655
    %2250 = vmatprep.subr.bf16.mxu0 %v1664
    %2251 = vmatpush1.bf16.msra.mxu0 %v1663
    %2252 = vmatprep.subr.bf16.mxu0 %v1672
    %2253 = vmatpush1.bf16.msra.mxu0 %v1671
    %2254 = vmatprep.mubr.bf16.mxu0 %v515
    %2255 = vmatmul.mubr.bf16.gmra.mrb[0].mxu0 %v514
    %v2256 = vpop.f32.mrb[0].mxu0
    %v2257 = vadd.f32 %v2214, %v2256
    %v2258 = vpop.f32.mrb[0].mxu0
    %v2259 = vadd.f32 %v2216, %v2258
    %v2260 = vpop.f32.mrb[0].mxu0
    %v2261 = vadd.f32 %v2218, %v2260
    %v2262 = vpop.f32.mrb[0].mxu0
    %v2263 = vadd.f32 %v2220, %v2262
    %2264 = vdwg.mxu0
    %2265 = vmatprep.subr.bf16.mxu0 %v1680
    %2266 = vmatpush1.bf16.msra.mxu0 %v1679
    %2267 = vmatprep.subr.bf16.mxu0 %v1688
    %2268 = vmatpush1.bf16.msra.mxu0 %v1687
    %2269 = vmatprep.subr.bf16.mxu0 %v1696
    %2270 = vmatpush1.bf16.msra.mxu0 %v1695
    %2271 = vmatprep.subr.bf16.mxu0 %v1704
    %2272 = vmatpush1.bf16.msra.mxu0 %v1703
    %2273 = vmatprep.subr.bf16.mxu0 %v1712
    %2274 = vmatpush1.bf16.msra.mxu0 %v1711
    %2275 = vmatprep.subr.bf16.mxu0 %v2036
    %2276 = vmatpush1.bf16.msra.mxu0 %v2033
    %2277 = vmatprep.subr.bf16.mxu0 0
    %2278 = vmatpush1.bf16.msra.mxu0 0
    %2279 = vmatprep.subr.bf16.mxu0 0
    %2280 = vmatpush1.bf16.msra.mxu0 0
    %2281 = vmatprep.subr.bf16.mxu0 0
    %2282 = vmatpush1.bf16.msra.mxu0 0
    %2283 = vmatprep.subr.bf16.mxu0 0
    %2284 = vmatpush1.bf16.msra.mxu0 0
    %2285 = vmatprep.subr.bf16.mxu0 0
    %2286 = vmatpush1.bf16.msra.mxu0 0
    %2287 = vmatprep.subr.bf16.mxu0 0
    %2288 = vmatpush1.bf16.msra.mxu0 0
    %2289 = vmatprep.subr.bf16.mxu0 0
    %2290 = vmatpush1.bf16.msra.mxu0 0
    %2291 = vmatprep.subr.bf16.mxu0 0
    %2292 = vmatpush1.bf16.msra.mxu0 0
    %2293 = vmatprep.subr.bf16.mxu0 0
    %2294 = vmatpush1.bf16.msra.mxu0 0
    %2295 = vmatprep.subr.bf16.mxu0 0
    %2296 = vmatpush1.bf16.msra.mxu0 0
    %2297 = vmatprep.mubr.bf16.mxu0 0
    %2298 = vmatmul.mubr.bf16.gmra.mrb[0].mxu0 %v2023
    %v2299 = vpop.f32.mrb[0].mxu0
    %v2300 = vadd.f32 %v2257, %v2299
    %v2301 = vpop.f32.mrb[0].mxu0
    %v2302 = vadd.f32 %v2259, %v2301
    %v2303 = vpop.f32.mrb[0].mxu0
    %v2304 = vadd.f32 %v2261, %v2303
    %v2305 = vpop.f32.mrb[0].mxu0
    %v2306 = vadd.f32 %v2263, %v2305
    %2307 = vdwg.mxu0
    %2308 = vmatprep.subr.bf16.mxu0 %v1426
    %2309 = vmatpush1.bf16.msra.mxu0 %v1425
    %2310 = vmatprep.subr.bf16.mxu0 %v1434
    %2311 = vmatpush1.bf16.msra.mxu0 %v1433
    %2312 = vmatprep.subr.bf16.mxu0 %v1442
    %2313 = vmatpush1.bf16.msra.mxu0 %v1441
    %2314 = vmatprep.subr.bf16.mxu0 %v1450
    %2315 = vmatpush1.bf16.msra.mxu0 %v1449
    %2316 = vmatprep.subr.bf16.mxu0 %v1458
    %2317 = vmatpush1.bf16.msra.mxu0 %v1457
    %2318 = vmatprep.subr.bf16.mxu0 %v1466
    %2319 = vmatpush1.bf16.msra.mxu0 %v1465
    %2320 = vmatprep.subr.bf16.mxu0 %v1474
    %2321 = vmatpush1.bf16.msra.mxu0 %v1473
    %2322 = vmatprep.subr.bf16.mxu0 %v1482
    %2323 = vmatpush1.bf16.msra.mxu0 %v1481
    %2324 = vmatprep.subr.bf16.mxu0 %v1490
    %2325 = vmatpush1.bf16.msra.mxu0 %v1489
    %2326 = vmatprep.subr.bf16.mxu0 %v1498
    %2327 = vmatpush1.bf16.msra.mxu0 %v1497
    %2328 = vmatprep.subr.bf16.mxu0 %v1506
    %2329 = vmatpush1.bf16.msra.mxu0 %v1505
    %2330 = vmatprep.subr.bf16.mxu0 %v1514
    %2331 = vmatpush1.bf16.msra.mxu0 %v1513
    %2332 = vmatprep.subr.bf16.mxu0 %v1522
    %2333 = vmatpush1.bf16.msra.mxu0 %v1521
    %2334 = vmatprep.subr.bf16.mxu0 %v1530
    %2335 = vmatpush1.bf16.msra.mxu0 %v1529
    %2336 = vmatprep.subr.bf16.mxu0 %v1538
    %2337 = vmatpush1.bf16.msra.mxu0 %v1537
    %2338 = vmatprep.subr.bf16.mxu0 %v1546
    %2339 = vmatpush1.bf16.msra.mxu0 %v1545
    %2340 = vmatprep.mubr.bf16.mxu0 %v513
    %2341 = vmatmul.mubr.bf16.gmra.mrb[0].mxu0 %v512
    %v2342 = vpop.f32.mrb[0].mxu0
    %v2343 = vadd.f32 %v475, %v2342
    %v2344 = vpop.f32.mrb[0].mxu0
    %v2345 = vadd.f32 %v479, %v2344
    %v2346 = vpop.f32.mrb[0].mxu0
    %v2347 = vadd.f32 %v475, %v2346
    %v2348 = vpop.f32.mrb[0].mxu0
    %v2349 = vadd.f32 %v479, %v2348
    %2350 = vdwg.mxu0
    %2351 = vmatprep.subr.bf16.mxu0 %v1554
    %2352 = vmatpush1.bf16.msra.mxu0 %v1553
    %2353 = vmatprep.subr.bf16.mxu0 %v1562
    %2354 = vmatpush1.bf16.msra.mxu0 %v1561
    %2355 = vmatprep.subr.bf16.mxu0 %v1570
    %2356 = vmatpush1.bf16.msra.mxu0 %v1569
    %2357 = vmatprep.subr.bf16.mxu0 %v1578
    %2358 = vmatpush1.bf16.msra.mxu0 %v1577
    %2359 = vmatprep.subr.bf16.mxu0 %v1586
    %2360 = vmatpush1.bf16.msra.mxu0 %v1585
    %2361 = vmatprep.subr.bf16.mxu0 %v1594
    %2362 = vmatpush1.bf16.msra.mxu0 %v1593
    %2363 = vmatprep.subr.bf16.mxu0 %v1602
    %2364 = vmatpush1.bf16.msra.mxu0 %v1601
    %2365 = vmatprep.subr.bf16.mxu0 %v1610
    %2366 = vmatpush1.bf16.msra.mxu0 %v1609
    %2367 = vmatprep.subr.bf16.mxu0 %v1618
    %2368 = vmatpush1.bf16.msra.mxu0 %v1617
    %2369 = vmatprep.subr.bf16.mxu0 %v1626
    %2370 = vmatpush1.bf16.msra.mxu0 %v1625
    %2371 = vmatprep.subr.bf16.mxu0 %v1634
    %2372 = vmatpush1.bf16.msra.mxu0 %v1633
    %2373 = vmatprep.subr.bf16.mxu0 %v1642
    %2374 = vmatpush1.bf16.msra.mxu0 %v1641
    %2375 = vmatprep.subr.bf16.mxu0 %v1650
    %2376 = vmatpush1.bf16.msra.mxu0 %v1649
    %2377 = vmatprep.subr.bf16.mxu0 %v1658
    %2378 = vmatpush1.bf16.msra.mxu0 %v1657
    %2379 = vmatprep.subr.bf16.mxu0 %v1666
    %2380 = vmatpush1.bf16.msra.mxu0 %v1665
    %2381 = vmatprep.subr.bf16.mxu0 %v1674
    %2382 = vmatpush1.bf16.msra.mxu0 %v1673
    %2383 = vmatprep.mubr.bf16.mxu0 %v515
    %2384 = vmatmul.mubr.bf16.gmra.mrb[0].mxu0 %v514
    %v2385 = vpop.f32.mrb[0].mxu0
    %v2386 = vadd.f32 %v2343, %v2385
    %v2387 = vpop.f32.mrb[0].mxu0
    %v2388 = vadd.f32 %v2345, %v2387
    %v2389 = vpop.f32.mrb[0].mxu0
    %v2390 = vadd.f32 %v2347, %v2389
    %v2391 = vpop.f32.mrb[0].mxu0
    %v2392 = vadd.f32 %v2349, %v2391
    %2393 = vdwg.mxu0
    %2394 = vmatprep.subr.bf16.mxu0 %v1682
    %2395 = vmatpush1.bf16.msra.mxu0 %v1681
    %2396 = vmatprep.subr.bf16.mxu0 %v1690
    %2397 = vmatpush1.bf16.msra.mxu0 %v1689
    %2398 = vmatprep.subr.bf16.mxu0 %v1698
    %2399 = vmatpush1.bf16.msra.mxu0 %v1697
    %2400 = vmatprep.subr.bf16.mxu0 %v1706
    %2401 = vmatpush1.bf16.msra.mxu0 %v1705
    %2402 = vmatprep.subr.bf16.mxu0 %v1714
    %2403 = vmatpush1.bf16.msra.mxu0 %v1713
    %2404 = vmatprep.subr.bf16.mxu0 %v2042
    %2405 = vmatpush1.bf16.msra.mxu0 %v2039
    %2406 = vmatprep.subr.bf16.mxu0 0
    %2407 = vmatpush1.bf16.msra.mxu0 0
    %2408 = vmatprep.subr.bf16.mxu0 0
    %2409 = vmatpush1.bf16.msra.mxu0 0
    %2410 = vmatprep.subr.bf16.mxu0 0
    %2411 = vmatpush1.bf16.msra.mxu0 0
    %2412 = vmatprep.subr.bf16.mxu0 0
    %2413 = vmatpush1.bf16.msra.mxu0 0
    %2414 = vmatprep.subr.bf16.mxu0 0
    %2415 = vmatpush1.bf16.msra.mxu0 0
    %2416 = vmatprep.subr.bf16.mxu0 0
    %2417 = vmatpush1.bf16.msra.mxu0 0
    %2418 = vmatprep.subr.bf16.mxu0 0
    %2419 = vmatpush1.bf16.msra.mxu0 0
    %2420 = vmatprep.subr.bf16.mxu0 0
    %2421 = vmatpush1.bf16.msra.mxu0 0
    %2422 = vmatprep.subr.bf16.mxu0 0
    %2423 = vmatpush1.bf16.msra.mxu0 0
    %2424 = vmatprep.subr.bf16.mxu0 0
    %2425 = vmatpush1.bf16.msra.mxu0 0
    %2426 = vmatprep.mubr.bf16.mxu0 0
    %2427 = vmatmul.mubr.bf16.gmra.mrb[0].mxu0 %v2023
    %v2428 = vpop.f32.mrb[0].mxu0
    %v2429 = vadd.f32 %v2386, %v2428
    %v2430 = vpop.f32.mrb[0].mxu0
    %v2431 = vadd.f32 %v2388, %v2430
    %v2432 = vpop.f32.mrb[0].mxu0
    %v2433 = vadd.f32 %v2390, %v2432
    %v2434 = vpop.f32.mrb[0].mxu0
    %v2435 = vadd.f32 %v2392, %v2434
    %2436 = vdwg.mxu0
    %2437 = vmatprep.subr.bf16.mxu0 %v1428
    %2438 = vmatpush1.bf16.msra.mxu0 %v1427
    %2439 = vmatprep.subr.bf16.mxu0 %v1436
    %2440 = vmatpush1.bf16.msra.mxu0 %v1435
    %2441 = vmatprep.subr.bf16.mxu0 %v1444
    %2442 = vmatpush1.bf16.msra.mxu0 %v1443
    %2443 = vmatprep.subr.bf16.mxu0 %v1452
    %2444 = vmatpush1.bf16.msra.mxu0 %v1451
    %2445 = vmatprep.subr.bf16.mxu0 %v1460
    %2446 = vmatpush1.bf16.msra.mxu0 %v1459
    %2447 = vmatprep.subr.bf16.mxu0 %v1468
    %2448 = vmatpush1.bf16.msra.mxu0 %v1467
    %2449 = vmatprep.subr.bf16.mxu0 %v1476
    %2450 = vmatpush1.bf16.msra.mxu0 %v1475
    %2451 = vmatprep.subr.bf16.mxu0 %v1484
    %2452 = vmatpush1.bf16.msra.mxu0 %v1483
    %2453 = vmatprep.subr.bf16.mxu0 %v1492
    %2454 = vmatpush1.bf16.msra.mxu0 %v1491
    %2455 = vmatprep.subr.bf16.mxu0 %v1500
    %2456 = vmatpush1.bf16.msra.mxu0 %v1499
    %2457 = vmatprep.subr.bf16.mxu0 %v1508
    %2458 = vmatpush1.bf16.msra.mxu0 %v1507
    %2459 = vmatprep.subr.bf16.mxu0 %v1516
    %2460 = vmatpush1.bf16.msra.mxu0 %v1515
    %2461 = vmatprep.subr.bf16.mxu0 %v1524
    %2462 = vmatpush1.bf16.msra.mxu0 %v1523
    %2463 = vmatprep.subr.bf16.mxu0 %v1532
    %2464 = vmatpush1.bf16.msra.mxu0 %v1531
    %2465 = vmatprep.subr.bf16.mxu0 %v1540
    %2466 = vmatpush1.bf16.msra.mxu0 %v1539
    %2467 = vmatprep.subr.bf16.mxu0 %v1548
    %2468 = vmatpush1.bf16.msra.mxu0 %v1547
    %2469 = vmatprep.mubr.bf16.mxu0 %v513
    %2470 = vmatmul.mubr.bf16.gmra.mrb[0].mxu0 %v512
    %v2471 = vpop.f32.mrb[0].mxu0
    %v2472 = vadd.f32 %v483, %v2471
    %v2473 = vpop.f32.mrb[0].mxu0
    %v2474 = vadd.f32 %v487, %v2473
    %v2475 = vpop.f32.mrb[0].mxu0
    %v2476 = vadd.f32 %v483, %v2475
    %v2477 = vpop.f32.mrb[0].mxu0
    %v2478 = vadd.f32 %v487, %v2477
    %2479 = vdwg.mxu0
    %2480 = vmatprep.subr.bf16.mxu0 %v1556
    %2481 = vmatpush1.bf16.msra.mxu0 %v1555
    %2482 = vmatprep.subr.bf16.mxu0 %v1564
    %2483 = vmatpush1.bf16.msra.mxu0 %v1563
    %2484 = vmatprep.subr.bf16.mxu0 %v1572
    %2485 = vmatpush1.bf16.msra.mxu0 %v1571
    %2486 = vmatprep.subr.bf16.mxu0 %v1580
    %2487 = vmatpush1.bf16.msra.mxu0 %v1579
    %2488 = vmatprep.subr.bf16.mxu0 %v1588
    %2489 = vmatpush1.bf16.msra.mxu0 %v1587
    %2490 = vmatprep.subr.bf16.mxu0 %v1596
    %2491 = vmatpush1.bf16.msra.mxu0 %v1595
    %2492 = vmatprep.subr.bf16.mxu0 %v1604
    %2493 = vmatpush1.bf16.msra.mxu0 %v1603
    %2494 = vmatprep.subr.bf16.mxu0 %v1612
    %2495 = vmatpush1.bf16.msra.mxu0 %v1611
    %2496 = vmatprep.subr.bf16.mxu0 %v1620
    %2497 = vmatpush1.bf16.msra.mxu0 %v1619
    %2498 = vmatprep.subr.bf16.mxu0 %v1628
    %2499 = vmatpush1.bf16.msra.mxu0 %v1627
    %2500 = vmatprep.subr.bf16.mxu0 %v1636
    %2501 = vmatpush1.bf16.msra.mxu0 %v1635
    %2502 = vmatprep.subr.bf16.mxu0 %v1644
    %2503 = vmatpush1.bf16.msra.mxu0 %v1643
    %2504 = vmatprep.subr.bf16.mxu0 %v1652
    %2505 = vmatpush1.bf16.msra.mxu0 %v1651
    %2506 = vmatprep.subr.bf16.mxu0 %v1660
    %2507 = vmatpush1.bf16.msra.mxu0 %v1659
    %2508 = vmatprep.subr.bf16.mxu0 %v1668
    %2509 = vmatpush1.bf16.msra.mxu0 %v1667
    %2510 = vmatprep.subr.bf16.mxu0 %v1676
    %2511 = vmatpush1.bf16.msra.mxu0 %v1675
    %2512 = vmatprep.mubr.bf16.mxu0 %v515
    %2513 = vmatmul.mubr.bf16.gmra.mrb[0].mxu0 %v514
    %v2514 = vpop.f32.mrb[0].mxu0
    %v2515 = vadd.f32 %v2472, %v2514
    %v2516 = vpop.f32.mrb[0].mxu0
    %v2517 = vadd.f32 %v2474, %v2516
    %v2518 = vpop.f32.mrb[0].mxu0
    %v2519 = vadd.f32 %v2476, %v2518
    %v2520 = vpop.f32.mrb[0].mxu0
    %v2521 = vadd.f32 %v2478, %v2520
    %2522 = vdwg.mxu0
    %2523 = vmatprep.subr.bf16.mxu0 %v1684
    %2524 = vmatpush1.bf16.msra.mxu0 %v1683
    %2525 = vmatprep.subr.bf16.mxu0 %v1692
    %2526 = vmatpush1.bf16.msra.mxu0 %v1691
    %2527 = vmatprep.subr.bf16.mxu0 %v1700
    %2528 = vmatpush1.bf16.msra.mxu0 %v1699
    %2529 = vmatprep.subr.bf16.mxu0 %v1708
    %2530 = vmatpush1.bf16.msra.mxu0 %v1707
    %2531 = vmatprep.subr.bf16.mxu0 %v1716
    %2532 = vmatpush1.bf16.msra.mxu0 %v1715
    %2533 = vmatprep.subr.bf16.mxu0 %v2048
    %2534 = vmatpush1.bf16.msra.mxu0 %v2045
    %2535 = vmatprep.subr.bf16.mxu0 0
    %2536 = vmatpush1.bf16.msra.mxu0 0
    %2537 = vmatprep.subr.bf16.mxu0 0
    %2538 = vmatpush1.bf16.msra.mxu0 0
    %2539 = vmatprep.subr.bf16.mxu0 0
    %2540 = vmatpush1.bf16.msra.mxu0 0
    %2541 = vmatprep.subr.bf16.mxu0 0
    %2542 = vmatpush1.bf16.msra.mxu0 0
    %2543 = vmatprep.subr.bf16.mxu0 0
    %2544 = vmatpush1.bf16.msra.mxu0 0
    %2545 = vmatprep.subr.bf16.mxu0 0
    %2546 = vmatpush1.bf16.msra.mxu0 0
    %2547 = vmatprep.subr.bf16.mxu0 0
    %2548 = vmatpush1.bf16.msra.mxu0 0
    %2549 = vmatprep.subr.bf16.mxu0 0
    %2550 = vmatpush1.bf16.msra.mxu0 0
    %2551 = vmatprep.subr.bf16.mxu0 0
    %2552 = vmatpush1.bf16.msra.mxu0 0
    %2553 = vmatprep.subr.bf16.mxu0 0
    %2554 = vmatpush1.bf16.msra.mxu0 0
    %2555 = vmatprep.mubr.bf16.mxu0 0
    %2556 = vmatmul.mubr.bf16.gmra.mrb[0].mxu0 %v2023
    %v2557 = vpop.f32.mrb[0].mxu0
    %v2558 = vadd.f32 %v2515, %v2557
    %v2559 = vpop.f32.mrb[0].mxu0
    %v2560 = vadd.f32 %v2517, %v2559
    %v2561 = vpop.f32.mrb[0].mxu0
    %v2562 = vadd.f32 %v2519, %v2561
    %v2563 = vpop.f32.mrb[0].mxu0
    %v2564 = vadd.f32 %v2521, %v2563
    %2565 = vdwg.mxu0
    %v2566 = vmax.f32 %v2171, 0.0
    %v2567 = vmax.f32 %v2173, 0.0
    %v2568 = vmax.f32 %v2300, 0.0
    %v2569 = vmax.f32 %v2302, 0.0
    %v2570 = vmax.f32 %v2429, 0.0
    %v2571 = vmax.f32 %v2431, 0.0
    %v2572 = vmax.f32 %v2558, 0.0
    %v2573 = vmax.f32 %v2560, 0.0
    %v2574 = vmax.f32 %v2175, 0.0
    %v2575 = vmax.f32 %v2177, 0.0
    %v2576 = vmax.f32 %v2304, 0.0
    %v2577 = vmax.f32 %v2306, 0.0
    %v2578 = vmax.f32 %v2433, 0.0
    %v2579 = vmax.f32 %v2435, 0.0
    %v2580 = vmax.f32 %v2562, 0.0
    %v2581 = vmax.f32 %v2564, 0.0
    %v2582 = vpack.c.bf16 %v2574, %v2566
    %v2583 = vpack.c.bf16 %v2575, %v2567
    %v2584 = vpack.c.bf16 %v2576, %v2568
    %v2585 = vpack.c.bf16 %v2577, %v2569
    %v2586 = vpack.c.bf16 %v2578, %v2570
    %v2587 = vpack.c.bf16 %v2579, %v2571
    %v2588 = vpack.c.bf16 %v2580, %v2572
    %v2589 = vpack.c.bf16 %v2581, %v2573
    %v2590 = vld [vmem:[#allocation8] sm:$0xff]
    %v2591 = vld [vmem:[#allocation8 + $0x8] sm:$0xff]
    %v2592 = vld [vmem:[#allocation8 + $0x10] sm:$0xff]
    %v2593 = vld [vmem:[#allocation8 + $0x18] sm:$0xff]
    %v2594 = vld [vmem:[#allocation8 + $0x20] sm:$0xff]
    %v2595 = vld [vmem:[#allocation8 + $0x28] sm:$0xff]
    %v2596 = vld [vmem:[#allocation8 + $0x30] sm:$0xff]
    %v2597 = vld [vmem:[#allocation8 + $0x38] sm:$0xff]
    %v2598 = vld [vmem:[#allocation8 + $0x40] sm:$0xff]
    %v2599 = vld [vmem:[#allocation8 + $0x48] sm:$0xff]
    %v2600 = vld [vmem:[#allocation8 + $0x50] sm:$0xff]
    %v2601 = vld [vmem:[#allocation8 + $0x58] sm:$0xff]
    %v2602 = vld [vmem:[#allocation8 + $0x60] sm:$0xff]
    %v2603 = vld [vmem:[#allocation8 + $0x68] sm:$0xff]
    %v2604 = vld [vmem:[#allocation8 + $0x70] sm:$0xff]
    %v2605 = vld [vmem:[#allocation8 + $0x78] sm:$0xff]
    %v2606 = vld [vmem:[#allocation8 + $0x80] sm:$0xff]
    %v2607 = vld [vmem:[#allocation8 + $0x88] sm:$0xff]
    %v2608 = vld [vmem:[#allocation8 + $0x90] sm:$0xff]
    %v2609 = vld [vmem:[#allocation8 + $0x98] sm:$0xff]
    %v2610 = vld [vmem:[#allocation8 + $0xa0] sm:$0xff]
    %v2611 = vld [vmem:[#allocation8 + $0xa8] sm:$0xff]
    %v2612 = vld [vmem:[#allocation8 + $0xb0] sm:$0xff]
    %v2613 = vld [vmem:[#allocation8 + $0xb8] sm:$0xff]
    %v2614 = vld [vmem:[#allocation8 + $0xc0] sm:$0xff]
    %v2615 = vld [vmem:[#allocation8 + $0xc8] sm:$0xff]
    %v2616 = vld [vmem:[#allocation8 + $0xd0] sm:$0xff]
    %v2617 = vld [vmem:[#allocation8 + $0xd8] sm:$0xff]
    %v2618 = vld [vmem:[#allocation8 + $0xe0] sm:$0xff]
    %v2619 = vld [vmem:[#allocation8 + $0xe8] sm:$0xff]
    %v2620 = vld [vmem:[#allocation8 + $0xf0] sm:$0xff]
    %v2621 = vld [vmem:[#allocation8 + $0xf8] sm:$0xff]
    %v2622 = vld [vmem:[#allocation8 + $0x100] sm:$0xff]
    %v2623 = vld [vmem:[#allocation8 + $0x108] sm:$0xff]
    %v2624 = vld [vmem:[#allocation8 + $0x110] sm:$0xff]
    %v2625 = vld [vmem:[#allocation8 + $0x118] sm:$0xff]
    %v2626 = vld [vmem:[#allocation8 + $0x120] sm:$0xff]
    %v2627 = vld [vmem:[#allocation8 + $0x128] sm:$0xff]
    %v2628 = vld [vmem:[#allocation8 + $0x130] sm:$0xff]
    %v2629 = vld [vmem:[#allocation8 + $0x138] sm:$0xff]
    %v2630 = vld [vmem:[#allocation8 + $0x140] sm:$0xff]
    %v2631 = vld [vmem:[#allocation8 + $0x148] sm:$0xff]
    %v2632 = vld [vmem:[#allocation8 + $0x150] sm:$0xff]
    %v2633 = vld [vmem:[#allocation8 + $0x158] sm:$0xff]
    %v2634 = vld [vmem:[#allocation8 + $0x160] sm:$0xff]
    %v2635 = vld [vmem:[#allocation8 + $0x168] sm:$0xff]
    %v2636 = vld [vmem:[#allocation8 + $0x170] sm:$0xff]
    %v2637 = vld [vmem:[#allocation8 + $0x178] sm:$0xff]
    %v2638 = vld [vmem:[#allocation8 + $0x180] sm:$0xff]
    %v2639 = vld [vmem:[#allocation8 + $0x188] sm:$0xff]
    %v2640 = vld [vmem:[#allocation8 + $0x190] sm:$0xff]
    %v2641 = vld [vmem:[#allocation8 + $0x198] sm:$0xff]
    %v2642 = vld [vmem:[#allocation8 + $0x1a0] sm:$0xff]
    %v2643 = vld [vmem:[#allocation8 + $0x1a8] sm:$0xff]
    %v2644 = vld [vmem:[#allocation8 + $0x1b0] sm:$0xff]
    %v2645 = vld [vmem:[#allocation8 + $0x1b8] sm:$0xff]
    %v2646 = vld [vmem:[#allocation8 + $0x1c0] sm:$0xff]
    %v2647 = vld [vmem:[#allocation8 + $0x1c8] sm:$0xff]
    %v2648 = vld [vmem:[#allocation8 + $0x1d0] sm:$0xff]
    %v2649 = vld [vmem:[#allocation8 + $0x1d8] sm:$0xff]
    %v2650 = vld [vmem:[#allocation8 + $0x1e0] sm:$0xff]
    %v2651 = vld [vmem:[#allocation8 + $0x1e8] sm:$0xff]
    %v2652 = vld [vmem:[#allocation8 + $0x1f0] sm:$0xff]
    %v2653 = vld [vmem:[#allocation8 + $0x1f8] sm:$0xff]
    %v2654 = vld [vmem:[#allocation8 + $0x200] sm:$0xff]
    %v2655 = vld [vmem:[#allocation8 + $0x208] sm:$0xff]
    %v2656 = vld [vmem:[#allocation8 + $0x210] sm:$0xff]
    %v2657 = vld [vmem:[#allocation8 + $0x218] sm:$0xff]
    %v2658 = vld [vmem:[#allocation8 + $0x220] sm:$0xff]
    %v2659 = vld [vmem:[#allocation8 + $0x228] sm:$0xff]
    %v2660 = vld [vmem:[#allocation8 + $0x230] sm:$0xff]
    %v2661 = vld [vmem:[#allocation8 + $0x238] sm:$0xff]
    %v2662 = vld [vmem:[#allocation8 + $0x240] sm:$0xff]
    %v2663 = vld [vmem:[#allocation8 + $0x248] sm:$0xff]
    %v2664 = vld [vmem:[#allocation8 + $0x250] sm:$0xff]
    %v2665 = vld [vmem:[#allocation8 + $0x258] sm:$0xff]
    %v2666 = vld [vmem:[#allocation8 + $0x260] sm:$0xff]
    %v2667 = vld [vmem:[#allocation8 + $0x268] sm:$0xff]
    %v2668 = vld [vmem:[#allocation8 + $0x270] sm:$0xff]
    %v2669 = vld [vmem:[#allocation8 + $0x278] sm:$0xff]
    %v2670 = vld [vmem:[#allocation8 + $0x280] sm:$0xff]
    %v2671 = vld [vmem:[#allocation8 + $0x288] sm:$0xff]
    %v2672 = vld [vmem:[#allocation8 + $0x290] sm:$0xff]
    %v2673 = vld [vmem:[#allocation8 + $0x298] sm:$0xff]
    %v2674 = vld [vmem:[#allocation8 + $0x2a0] sm:$0xff]
    %v2675 = vld [vmem:[#allocation8 + $0x2a8] sm:$0xff]
    %v2676 = vld [vmem:[#allocation8 + $0x2b0] sm:$0xff]
    %v2677 = vld [vmem:[#allocation8 + $0x2b8] sm:$0xff]
    %v2678 = vld [vmem:[#allocation8 + $0x2c0] sm:$0xff]
    %v2679 = vld [vmem:[#allocation8 + $0x2c8] sm:$0xff]
    %v2680 = vld [vmem:[#allocation8 + $0x2d0] sm:$0xff]
    %v2681 = vld [vmem:[#allocation8 + $0x2d8] sm:$0xff]
    %v2682 = vld [vmem:[#allocation8 + $0x2e0] sm:$0xff]
    %v2683 = vld [vmem:[#allocation8 + $0x2e8] sm:$0xff]
    %v2684 = vld [vmem:[#allocation8 + $0x2f0] sm:$0xff]
    %v2685 = vld [vmem:[#allocation8 + $0x2f8] sm:$0xff]
    %v2686 = vld [vmem:[#allocation8 + $0x300] sm:$0xff]
    %v2687 = vld [vmem:[#allocation8 + $0x308] sm:$0xff]
    %v2688 = vld [vmem:[#allocation8 + $0x310] sm:$0xff]
    %v2689 = vld [vmem:[#allocation8 + $0x318] sm:$0xff]
    %v2690 = vld [vmem:[#allocation8 + $0x320] sm:$0xff]
    %v2691 = vld [vmem:[#allocation8 + $0x328] sm:$0xff]
    %v2692 = vld [vmem:[#allocation8 + $0x330] sm:$0xff]
    %v2693 = vld [vmem:[#allocation8 + $0x338] sm:$0xff]
    %v2694 = vld [vmem:[#allocation8 + $0x340] sm:$0xff]
    %v2695 = vld [vmem:[#allocation8 + $0x348] sm:$0xff]
    %v2696 = vld [vmem:[#allocation8 + $0x350] sm:$0xff]
    %v2697 = vld [vmem:[#allocation8 + $0x358] sm:$0xff]
    %v2698 = vld [vmem:[#allocation8 + $0x360] sm:$0xff]
    %v2699 = vld [vmem:[#allocation8 + $0x368] sm:$0xff]
    %v2700 = vld [vmem:[#allocation8 + $0x370] sm:$0xff]
    %v2701 = vld [vmem:[#allocation8 + $0x378] sm:$0xff]
    %v2702 = vld [vmem:[#allocation8 + $0x380] sm:$0xff]
    %v2703 = vld [vmem:[#allocation8 + $0x388] sm:$0xff]
    %v2704 = vld [vmem:[#allocation8 + $0x390] sm:$0xff]
    %v2705 = vld [vmem:[#allocation8 + $0x398] sm:$0xff]
    %v2706 = vld [vmem:[#allocation8 + $0x3a0] sm:$0xff]
    %v2707 = vld [vmem:[#allocation8 + $0x3a8] sm:$0xff]
    %v2708 = vld [vmem:[#allocation8 + $0x3b0] sm:$0xff]
    %v2709 = vld [vmem:[#allocation8 + $0x3b8] sm:$0xff]
    %v2710 = vld [vmem:[#allocation8 + $0x3c0] sm:$0xff]
    %v2711 = vld [vmem:[#allocation8 + $0x3c8] sm:$0xff]
    %v2712 = vld [vmem:[#allocation8 + $0x3d0] sm:$0xff]
    %v2713 = vld [vmem:[#allocation8 + $0x3d8] sm:$0xff]
    %v2714 = vld [vmem:[#allocation8 + $0x3e0] sm:$0xff]
    %v2715 = vld [vmem:[#allocation8 + $0x3e8] sm:$0xff]
    %v2716 = vld [vmem:[#allocation8 + $0x3f0] sm:$0xff]
    %v2717 = vld [vmem:[#allocation8 + $0x3f8] sm:$0xff]
    %v2718 = vld [vmem:[#allocation8 + $0x400] sm:$0xff]
    %v2719 = vld [vmem:[#allocation8 + $0x408] sm:$0xff]
    %v2720 = vld [vmem:[#allocation8 + $0x410] sm:$0xff]
    %v2721 = vld [vmem:[#allocation8 + $0x418] sm:$0xff]
    %v2722 = vld [vmem:[#allocation8 + $0x420] sm:$0xff]
    %v2723 = vld [vmem:[#allocation8 + $0x428] sm:$0xff]
    %v2724 = vld [vmem:[#allocation8 + $0x430] sm:$0xff]
    %v2725 = vld [vmem:[#allocation8 + $0x438] sm:$0xff]
    %v2726 = vld [vmem:[#allocation8 + $0x440] sm:$0xff]
    %v2727 = vld [vmem:[#allocation8 + $0x448] sm:$0xff]
    %v2728 = vld [vmem:[#allocation8 + $0x450] sm:$0xff]
    %v2729 = vld [vmem:[#allocation8 + $0x458] sm:$0xff]
    %v2730 = vld [vmem:[#allocation8 + $0x460] sm:$0xff]
    %v2731 = vld [vmem:[#allocation8 + $0x468] sm:$0xff]
    %v2732 = vld [vmem:[#allocation8 + $0x470] sm:$0xff]
    %v2733 = vld [vmem:[#allocation8 + $0x478] sm:$0xff]
    %v2734 = vld [vmem:[#allocation8 + $0x480] sm:$0xff]
    %v2735 = vld [vmem:[#allocation8 + $0x488] sm:$0xff]
    %v2736 = vld [vmem:[#allocation8 + $0x490] sm:$0xff]
    %v2737 = vld [vmem:[#allocation8 + $0x498] sm:$0xff]
    %v2738 = vld [vmem:[#allocation8 + $0x4a0] sm:$0xff]
    %v2739 = vld [vmem:[#allocation8 + $0x4a8] sm:$0xff]
    %v2740 = vld [vmem:[#allocation8 + $0x4b0] sm:$0xff]
    %v2741 = vld [vmem:[#allocation8 + $0x4b8] sm:$0xff]
    %v2742 = vld [vmem:[#allocation8 + $0x4c0] sm:$0xff]
    %v2743 = vld [vmem:[#allocation8 + $0x4c8] sm:$0xff]
    %v2744 = vld [vmem:[#allocation8 + $0x4d0] sm:$0xff]
    %v2745 = vld [vmem:[#allocation8 + $0x4d8] sm:$0xff]
    %v2746 = vld [vmem:[#allocation8 + $0x4e0] sm:$0xff]
    %v2747 = vld [vmem:[#allocation8 + $0x4e8] sm:$0xff]
    %v2748 = vld [vmem:[#allocation8 + $0x4f0] sm:$0xff]
    %v2749 = vld [vmem:[#allocation8 + $0x4f8] sm:$0xff]
    %v2750 = vld [vmem:[#allocation8 + $0x500] sm:$0xff]
    %v2751 = vld [vmem:[#allocation8 + $0x508] sm:$0xff]
    %v2752 = vld [vmem:[#allocation8 + $0x510] sm:$0xff]
    %v2753 = vld [vmem:[#allocation8 + $0x518] sm:$0xff]
    %v2754 = vld [vmem:[#allocation8 + $0x520] sm:$0xff]
    %v2755 = vld [vmem:[#allocation8 + $0x528] sm:$0xff]
    %v2756 = vld [vmem:[#allocation8 + $0x530] sm:$0xff]
    %v2757 = vld [vmem:[#allocation8 + $0x538] sm:$0xff]
    %v2758 = vld [vmem:[#allocation8 + $0x540] sm:$0xff]
    %v2759 = vld [vmem:[#allocation8 + $0x548] sm:$0xff]
    %v2760 = vld [vmem:[#allocation8 + $0x550] sm:$0xff]
    %v2761 = vld [vmem:[#allocation8 + $0x558] sm:$0xff]
    %v2762 = vld [vmem:[#allocation8 + $0x560] sm:$0xff]
    %v2763 = vld [vmem:[#allocation8 + $0x568] sm:$0xff]
    %v2764 = vld [vmem:[#allocation8 + $0x570] sm:$0xff]
    %v2765 = vld [vmem:[#allocation8 + $0x578] sm:$0xff]
    %v2766 = vld [vmem:[#allocation8 + $0x580] sm:$0xff]
    %v2767 = vld [vmem:[#allocation8 + $0x588] sm:$0xff]
    %v2768 = vld [vmem:[#allocation8 + $0x590] sm:$0xff]
    %v2769 = vld [vmem:[#allocation8 + $0x598] sm:$0xff]
    %v2770 = vld [vmem:[#allocation8 + $0x5a0] sm:$0xff]
    %v2771 = vld [vmem:[#allocation8 + $0x5a8] sm:$0xff]
    %v2772 = vld [vmem:[#allocation8 + $0x5b0] sm:$0xff]
    %v2773 = vld [vmem:[#allocation8 + $0x5b8] sm:$0xff]
    %v2774 = vld [vmem:[#allocation8 + $0x5c0] sm:$0xff]
    %v2775 = vld [vmem:[#allocation8 + $0x5c8] sm:$0xff]
    %v2776 = vld [vmem:[#allocation8 + $0x5d0] sm:$0xff]
    %v2777 = vld [vmem:[#allocation8 + $0x5d8] sm:$0xff]
    %v2778 = vld [vmem:[#allocation8 + $0x5e0] sm:$0xff]
    %v2779 = vld [vmem:[#allocation8 + $0x5e8] sm:$0xff]
    %v2780 = vld [vmem:[#allocation8 + $0x5f0] sm:$0xff]
    %v2781 = vld [vmem:[#allocation8 + $0x5f8] sm:$0xff]
    %v2782 = vld [vmem:[#allocation8 + $0x600] sm:$0xff]
    %v2783 = vld [vmem:[#allocation8 + $0x608] sm:$0xff]
    %v2784 = vld [vmem:[#allocation8 + $0x610] sm:$0xff]
    %v2785 = vld [vmem:[#allocation8 + $0x618] sm:$0xff]
    %v2786 = vld [vmem:[#allocation8 + $0x620] sm:$0xff]
    %v2787 = vld [vmem:[#allocation8 + $0x628] sm:$0xff]
    %v2788 = vld [vmem:[#allocation8 + $0x630] sm:$0xff]
    %v2789 = vld [vmem:[#allocation8 + $0x638] sm:$0xff]
    %v2790 = vld [vmem:[#allocation8 + $0x640] sm:$0xff]
    %v2791 = vld [vmem:[#allocation8 + $0x648] sm:$0xff]
    %v2792 = vld [vmem:[#allocation8 + $0x650] sm:$0xff]
    %v2793 = vld [vmem:[#allocation8 + $0x658] sm:$0xff]
    %v2794 = vld [vmem:[#allocation8 + $0x660] sm:$0xff]
    %v2795 = vld [vmem:[#allocation8 + $0x668] sm:$0xff]
    %v2796 = vld [vmem:[#allocation8 + $0x670] sm:$0xff]
    %v2797 = vld [vmem:[#allocation8 + $0x678] sm:$0xff]
    %v2798 = vld [vmem:[#allocation8 + $0x680] sm:$0xff]
    %v2799 = vld [vmem:[#allocation8 + $0x688] sm:$0xff]
    %v2800 = vld [vmem:[#allocation8 + $0x690] sm:$0xff]
    %v2801 = vld [vmem:[#allocation8 + $0x698] sm:$0xff]
    %v2802 = vld [vmem:[#allocation8 + $0x6a0] sm:$0xff]
    %v2803 = vld [vmem:[#allocation8 + $0x6a8] sm:$0xff]
    %v2804 = vld [vmem:[#allocation8 + $0x6b0] sm:$0xff]
    %v2805 = vld [vmem:[#allocation8 + $0x6b8] sm:$0xff]
    %v2806 = vld [vmem:[#allocation8 + $0x6c0] sm:$0xff]
    %v2807 = vld [vmem:[#allocation8 + $0x6c8] sm:$0xff]
    %v2808 = vld [vmem:[#allocation8 + $0x6d0] sm:$0xff]
    %v2809 = vld [vmem:[#allocation8 + $0x6d8] sm:$0xff]
    %v2810 = vld [vmem:[#allocation8 + $0x6e0] sm:$0xff]
    %v2811 = vld [vmem:[#allocation8 + $0x6e8] sm:$0xff]
    %v2812 = vld [vmem:[#allocation8 + $0x6f0] sm:$0xff]
    %v2813 = vld [vmem:[#allocation8 + $0x6f8] sm:$0xff]
    %v2814 = vld [vmem:[#allocation8 + $0x700] sm:$0xff]
    %v2815 = vld [vmem:[#allocation8 + $0x708] sm:$0xff]
    %v2816 = vld [vmem:[#allocation8 + $0x710] sm:$0xff]
    %v2817 = vld [vmem:[#allocation8 + $0x718] sm:$0xff]
    %v2818 = vld [vmem:[#allocation8 + $0x720] sm:$0xff]
    %v2819 = vld [vmem:[#allocation8 + $0x728] sm:$0xff]
    %v2820 = vld [vmem:[#allocation8 + $0x730] sm:$0xff]
    %v2821 = vld [vmem:[#allocation8 + $0x738] sm:$0xff]
    %v2822 = vld [vmem:[#allocation8 + $0x740] sm:$0xff]
    %v2823 = vld [vmem:[#allocation8 + $0x748] sm:$0xff]
    %v2824 = vld [vmem:[#allocation8 + $0x750] sm:$0xff]
    %v2825 = vld [vmem:[#allocation8 + $0x758] sm:$0xff]
    %v2826 = vld [vmem:[#allocation8 + $0x760] sm:$0xff]
    %v2827 = vld [vmem:[#allocation8 + $0x768] sm:$0xff]
    %v2828 = vld [vmem:[#allocation8 + $0x770] sm:$0xff]
    %v2829 = vld [vmem:[#allocation8 + $0x778] sm:$0xff]
    %v2830 = vld [vmem:[#allocation8 + $0x780] sm:$0xff]
    %v2831 = vld [vmem:[#allocation8 + $0x788] sm:$0xff]
    %v2832 = vld [vmem:[#allocation8 + $0x790] sm:$0xff]
    %v2833 = vld [vmem:[#allocation8 + $0x798] sm:$0xff]
    %v2834 = vld [vmem:[#allocation8 + $0x7a0] sm:$0xff]
    %v2835 = vld [vmem:[#allocation8 + $0x7a8] sm:$0xff]
    %v2836 = vld [vmem:[#allocation8 + $0x7b0] sm:$0xff]
    %v2837 = vld [vmem:[#allocation8 + $0x7b8] sm:$0xff]
    %v2838 = vld [vmem:[#allocation8 + $0x7c0] sm:$0xff]
    %v2839 = vld [vmem:[#allocation8 + $0x7c8] sm:$0xff]
    %v2840 = vld [vmem:[#allocation8 + $0x7d0] sm:$0xff]
    %v2841 = vld [vmem:[#allocation8 + $0x7d8] sm:$0xff]
    %v2842 = vld [vmem:[#allocation8 + $0x7e0] sm:$0xff]
    %v2843 = vld [vmem:[#allocation8 + $0x7e8] sm:$0xff]
    %v2844 = vld [vmem:[#allocation8 + $0x7f0] sm:$0xff]
    %v2845 = vld [vmem:[#allocation8 + $0x7f8] sm:$0xff]
    %v2846 = vld [vmem:[#allocation10] sm:$0xf]
    %v2848 = vlaneseq
    %v2849 = vshrl.u32 %v2848, 7
    %v2850 = vsub.s32 0, %v2849
    %v2851 = vrot.slane %v2846, %v2850
    %v2852 = vlaneseq
    %v2853 = vshrl.u32 %v2852, 7
    %v2854 = vsub.s32 1, %v2853
    %v2855 = vrot.slane %v2846, %v2854
    %v2856 = vlaneseq
    %v2857 = vshrl.u32 %v2856, 7
    %v2858 = vsub.s32 2, %v2857
    %v2859 = vrot.slane %v2846, %v2858
    %v2860 = vlaneseq
    %v2861 = vshrl.u32 %v2860, 7
    %v2862 = vsub.s32 3, %v2861
    %v2863 = vrot.slane %v2846, %v2862
    %v3124 = vunpack.c.l.b16 %v2590
    %v3125 = vunpack.c.h.b16 %v2590
    %v3126 = vunpack.c.l.b16 %v2591
    %v3127 = vunpack.c.h.b16 %v2591
    %v3128 = vunpack.c.l.b16 %v2592
    %v3129 = vunpack.c.h.b16 %v2592
    %v3130 = vunpack.c.l.b16 %v2593
    %v3131 = vunpack.c.h.b16 %v2593
    %v3132 = vunpack.c.l.b16 %v2594
    %v3133 = vunpack.c.h.b16 %v2594
    %v3134 = vunpack.c.l.b16 %v2595
    %v3135 = vunpack.c.h.b16 %v2595
    %v3136 = vunpack.c.l.b16 %v2596
    %v3137 = vunpack.c.h.b16 %v2596
    %v3138 = vunpack.c.l.b16 %v2597
    %v3139 = vunpack.c.h.b16 %v2597
    %v3140 = vunpack.c.l.b16 %v2598
    %v3141 = vunpack.c.h.b16 %v2598
    %v3142 = vunpack.c.l.b16 %v2599
    %v3143 = vunpack.c.h.b16 %v2599
    %v3144 = vunpack.c.l.b16 %v2600
    %v3145 = vunpack.c.h.b16 %v2600
    %v3146 = vunpack.c.l.b16 %v2601
    %v3147 = vunpack.c.h.b16 %v2601
    %v3148 = vunpack.c.l.b16 %v2602
    %v3149 = vunpack.c.h.b16 %v2602
    %v3150 = vunpack.c.l.b16 %v2603
    %v3151 = vunpack.c.h.b16 %v2603
    %v3152 = vunpack.c.l.b16 %v2604
    %v3153 = vunpack.c.h.b16 %v2604
    %v3154 = vunpack.c.l.b16 %v2605
    %v3155 = vunpack.c.h.b16 %v2605
    %v3156 = vunpack.c.l.b16 %v2606
    %v3157 = vunpack.c.h.b16 %v2606
    %v3158 = vunpack.c.l.b16 %v2607
    %v3159 = vunpack.c.h.b16 %v2607
    %v3160 = vunpack.c.l.b16 %v2608
    %v3161 = vunpack.c.h.b16 %v2608
    %v3162 = vunpack.c.l.b16 %v2609
    %v3163 = vunpack.c.h.b16 %v2609
    %v3164 = vunpack.c.l.b16 %v2610
    %v3165 = vunpack.c.h.b16 %v2610
    %v3166 = vunpack.c.l.b16 %v2611
    %v3167 = vunpack.c.h.b16 %v2611
    %v3168 = vunpack.c.l.b16 %v2612
    %v3169 = vunpack.c.h.b16 %v2612
    %v3170 = vunpack.c.l.b16 %v2613
    %v3171 = vunpack.c.h.b16 %v2613
    %v3172 = vunpack.c.l.b16 %v2614
    %v3173 = vunpack.c.h.b16 %v2614
    %v3174 = vunpack.c.l.b16 %v2615
    %v3175 = vunpack.c.h.b16 %v2615
    %v3176 = vunpack.c.l.b16 %v2616
    %v3177 = vunpack.c.h.b16 %v2616
    %v3178 = vunpack.c.l.b16 %v2617
    %v3179 = vunpack.c.h.b16 %v2617
    %v3180 = vunpack.c.l.b16 %v2618
    %v3181 = vunpack.c.h.b16 %v2618
    %v3182 = vunpack.c.l.b16 %v2619
    %v3183 = vunpack.c.h.b16 %v2619
    %v3184 = vunpack.c.l.b16 %v2620
    %v3185 = vunpack.c.h.b16 %v2620
    %v3186 = vunpack.c.l.b16 %v2621
    %v3187 = vunpack.c.h.b16 %v2621
    %v3188 = vunpack.c.l.b16 %v2622
    %v3189 = vunpack.c.h.b16 %v2622
    %v3190 = vunpack.c.l.b16 %v2623
    %v3191 = vunpack.c.h.b16 %v2623
    %v3192 = vunpack.c.l.b16 %v2624
    %v3193 = vunpack.c.h.b16 %v2624
    %v3194 = vunpack.c.l.b16 %v2625
    %v3195 = vunpack.c.h.b16 %v2625
    %v3196 = vunpack.c.l.b16 %v2626
    %v3197 = vunpack.c.h.b16 %v2626
    %v3198 = vunpack.c.l.b16 %v2627
    %v3199 = vunpack.c.h.b16 %v2627
    %v3200 = vunpack.c.l.b16 %v2628
    %v3201 = vunpack.c.h.b16 %v2628
    %v3202 = vunpack.c.l.b16 %v2629
    %v3203 = vunpack.c.h.b16 %v2629
    %v3204 = vunpack.c.l.b16 %v2630
    %v3205 = vunpack.c.h.b16 %v2630
    %v3206 = vunpack.c.l.b16 %v2631
    %v3207 = vunpack.c.h.b16 %v2631
    %v3208 = vunpack.c.l.b16 %v2632
    %v3209 = vunpack.c.h.b16 %v2632
    %v3210 = vunpack.c.l.b16 %v2633
    %v3211 = vunpack.c.h.b16 %v2633
    %v3212 = vunpack.c.l.b16 %v2634
    %v3213 = vunpack.c.h.b16 %v2634
    %v3214 = vunpack.c.l.b16 %v2635
    %v3215 = vunpack.c.h.b16 %v2635
    %v3216 = vunpack.c.l.b16 %v2636
    %v3217 = vunpack.c.h.b16 %v2636
    %v3218 = vunpack.c.l.b16 %v2637
    %v3219 = vunpack.c.h.b16 %v2637
    %v3220 = vunpack.c.l.b16 %v2638
    %v3221 = vunpack.c.h.b16 %v2638
    %v3222 = vunpack.c.l.b16 %v2639
    %v3223 = vunpack.c.h.b16 %v2639
    %v3224 = vunpack.c.l.b16 %v2640
    %v3225 = vunpack.c.h.b16 %v2640
    %v3226 = vunpack.c.l.b16 %v2641
    %v3227 = vunpack.c.h.b16 %v2641
    %v3228 = vunpack.c.l.b16 %v2642
    %v3229 = vunpack.c.h.b16 %v2642
    %v3230 = vunpack.c.l.b16 %v2643
    %v3231 = vunpack.c.h.b16 %v2643
    %v3232 = vunpack.c.l.b16 %v2644
    %v3233 = vunpack.c.h.b16 %v2644
    %v3234 = vunpack.c.l.b16 %v2645
    %v3235 = vunpack.c.h.b16 %v2645
    %v3236 = vunpack.c.l.b16 %v2646
    %v3237 = vunpack.c.h.b16 %v2646
    %v3238 = vunpack.c.l.b16 %v2647
    %v3239 = vunpack.c.h.b16 %v2647
    %v3240 = vunpack.c.l.b16 %v2648
    %v3241 = vunpack.c.h.b16 %v2648
    %v3242 = vunpack.c.l.b16 %v2649
    %v3243 = vunpack.c.h.b16 %v2649
    %v3244 = vunpack.c.l.b16 %v2650
    %v3245 = vunpack.c.h.b16 %v2650
    %v3246 = vunpack.c.l.b16 %v2651
    %v3247 = vunpack.c.h.b16 %v2651
    %v3248 = vunpack.c.l.b16 %v2652
    %v3249 = vunpack.c.h.b16 %v2652
    %v3250 = vunpack.c.l.b16 %v2653
    %v3251 = vunpack.c.h.b16 %v2653
    %v3252 = vunpack.c.l.b16 %v2654
    %v3253 = vunpack.c.h.b16 %v2654
    %v3254 = vunpack.c.l.b16 %v2655
    %v3255 = vunpack.c.h.b16 %v2655
    %v3256 = vunpack.c.l.b16 %v2656
    %v3257 = vunpack.c.h.b16 %v2656
    %v3258 = vunpack.c.l.b16 %v2657
    %v3259 = vunpack.c.h.b16 %v2657
    %v3260 = vunpack.c.l.b16 %v2658
    %v3261 = vunpack.c.h.b16 %v2658
    %v3262 = vunpack.c.l.b16 %v2659
    %v3263 = vunpack.c.h.b16 %v2659
    %v3264 = vunpack.c.l.b16 %v2660
    %v3265 = vunpack.c.h.b16 %v2660
    %v3266 = vunpack.c.l.b16 %v2661
    %v3267 = vunpack.c.h.b16 %v2661
    %v3268 = vunpack.c.l.b16 %v2662
    %v3269 = vunpack.c.h.b16 %v2662
    %v3270 = vunpack.c.l.b16 %v2663
    %v3271 = vunpack.c.h.b16 %v2663
    %v3272 = vunpack.c.l.b16 %v2664
    %v3273 = vunpack.c.h.b16 %v2664
    %v3274 = vunpack.c.l.b16 %v2665
    %v3275 = vunpack.c.h.b16 %v2665
    %v3276 = vunpack.c.l.b16 %v2666
    %v3277 = vunpack.c.h.b16 %v2666
    %v3278 = vunpack.c.l.b16 %v2667
    %v3279 = vunpack.c.h.b16 %v2667
    %v3280 = vunpack.c.l.b16 %v2668
    %v3281 = vunpack.c.h.b16 %v2668
    %v3282 = vunpack.c.l.b16 %v2669
    %v3283 = vunpack.c.h.b16 %v2669
    %v3284 = vunpack.c.l.b16 %v2670
    %v3285 = vunpack.c.h.b16 %v2670
    %v3286 = vunpack.c.l.b16 %v2671
    %v3287 = vunpack.c.h.b16 %v2671
    %v3288 = vunpack.c.l.b16 %v2672
    %v3289 = vunpack.c.h.b16 %v2672
    %v3290 = vunpack.c.l.b16 %v2673
    %v3291 = vunpack.c.h.b16 %v2673
    %v3292 = vunpack.c.l.b16 %v2674
    %v3293 = vunpack.c.h.b16 %v2674
    %v3294 = vunpack.c.l.b16 %v2675
    %v3295 = vunpack.c.h.b16 %v2675
    %v3296 = vunpack.c.l.b16 %v2676
    %v3297 = vunpack.c.h.b16 %v2676
    %v3298 = vunpack.c.l.b16 %v2677
    %v3299 = vunpack.c.h.b16 %v2677
    %v3300 = vunpack.c.l.b16 %v2678
    %v3301 = vunpack.c.h.b16 %v2678
    %v3302 = vunpack.c.l.b16 %v2679
    %v3303 = vunpack.c.h.b16 %v2679
    %v3304 = vunpack.c.l.b16 %v2680
    %v3305 = vunpack.c.h.b16 %v2680
    %v3306 = vunpack.c.l.b16 %v2681
    %v3307 = vunpack.c.h.b16 %v2681
    %v3308 = vunpack.c.l.b16 %v2682
    %v3309 = vunpack.c.h.b16 %v2682
    %v3310 = vunpack.c.l.b16 %v2683
    %v3311 = vunpack.c.h.b16 %v2683
    %v3312 = vunpack.c.l.b16 %v2684
    %v3313 = vunpack.c.h.b16 %v2684
    %v3314 = vunpack.c.l.b16 %v2685
    %v3315 = vunpack.c.h.b16 %v2685
    %v3316 = vunpack.c.l.b16 %v2686
    %v3317 = vunpack.c.h.b16 %v2686
    %v3318 = vunpack.c.l.b16 %v2687
    %v3319 = vunpack.c.h.b16 %v2687
    %v3320 = vunpack.c.l.b16 %v2688
    %v3321 = vunpack.c.h.b16 %v2688
    %v3322 = vunpack.c.l.b16 %v2689
    %v3323 = vunpack.c.h.b16 %v2689
    %v3324 = vunpack.c.l.b16 %v2690
    %v3325 = vunpack.c.h.b16 %v2690
    %v3326 = vunpack.c.l.b16 %v2691
    %v3327 = vunpack.c.h.b16 %v2691
    %v3328 = vunpack.c.l.b16 %v2692
    %v3329 = vunpack.c.h.b16 %v2692
    %v3330 = vunpack.c.l.b16 %v2693
    %v3331 = vunpack.c.h.b16 %v2693
    %v3332 = vunpack.c.l.b16 %v2694
    %v3333 = vunpack.c.h.b16 %v2694
    %v3334 = vunpack.c.l.b16 %v2695
    %v3335 = vunpack.c.h.b16 %v2695
    %v3336 = vunpack.c.l.b16 %v2696
    %v3337 = vunpack.c.h.b16 %v2696
    %v3338 = vunpack.c.l.b16 %v2697
    %v3339 = vunpack.c.h.b16 %v2697
    %v3340 = vunpack.c.l.b16 %v2698
    %v3341 = vunpack.c.h.b16 %v2698
    %v3342 = vunpack.c.l.b16 %v2699
    %v3343 = vunpack.c.h.b16 %v2699
    %v3344 = vunpack.c.l.b16 %v2700
    %v3345 = vunpack.c.h.b16 %v2700
    %v3346 = vunpack.c.l.b16 %v2701
    %v3347 = vunpack.c.h.b16 %v2701
    %v3348 = vunpack.c.l.b16 %v2702
    %v3349 = vunpack.c.h.b16 %v2702
    %v3350 = vunpack.c.l.b16 %v2703
    %v3351 = vunpack.c.h.b16 %v2703
    %v3352 = vunpack.c.l.b16 %v2704
    %v3353 = vunpack.c.h.b16 %v2704
    %v3354 = vunpack.c.l.b16 %v2705
    %v3355 = vunpack.c.h.b16 %v2705
    %v3356 = vunpack.c.l.b16 %v2706
    %v3357 = vunpack.c.h.b16 %v2706
    %v3358 = vunpack.c.l.b16 %v2707
    %v3359 = vunpack.c.h.b16 %v2707
    %v3360 = vunpack.c.l.b16 %v2708
    %v3361 = vunpack.c.h.b16 %v2708
    %v3362 = vunpack.c.l.b16 %v2709
    %v3363 = vunpack.c.h.b16 %v2709
    %v3364 = vunpack.c.l.b16 %v2710
    %v3365 = vunpack.c.h.b16 %v2710
    %v3366 = vunpack.c.l.b16 %v2711
    %v3367 = vunpack.c.h.b16 %v2711
    %v3368 = vunpack.c.l.b16 %v2712
    %v3369 = vunpack.c.h.b16 %v2712
    %v3370 = vunpack.c.l.b16 %v2713
    %v3371 = vunpack.c.h.b16 %v2713
    %v3372 = vunpack.c.l.b16 %v2714
    %v3373 = vunpack.c.h.b16 %v2714
    %v3374 = vunpack.c.l.b16 %v2715
    %v3375 = vunpack.c.h.b16 %v2715
    %v3376 = vunpack.c.l.b16 %v2716
    %v3377 = vunpack.c.h.b16 %v2716
    %v3378 = vunpack.c.l.b16 %v2717
    %v3379 = vunpack.c.h.b16 %v2717
    %v3380 = vunpack.c.l.b16 %v2718
    %v3381 = vunpack.c.h.b16 %v2718
    %v3382 = vunpack.c.l.b16 %v2719
    %v3383 = vunpack.c.h.b16 %v2719
    %v3384 = vunpack.c.l.b16 %v2720
    %v3385 = vunpack.c.h.b16 %v2720
    %v3386 = vunpack.c.l.b16 %v2721
    %v3387 = vunpack.c.h.b16 %v2721
    %v3388 = vunpack.c.l.b16 %v2722
    %v3389 = vunpack.c.h.b16 %v2722
    %v3390 = vunpack.c.l.b16 %v2723
    %v3391 = vunpack.c.h.b16 %v2723
    %v3392 = vunpack.c.l.b16 %v2724
    %v3393 = vunpack.c.h.b16 %v2724
    %v3394 = vunpack.c.l.b16 %v2725
    %v3395 = vunpack.c.h.b16 %v2725
    %v3396 = vunpack.c.l.b16 %v2726
    %v3397 = vunpack.c.h.b16 %v2726
    %v3398 = vunpack.c.l.b16 %v2727
    %v3399 = vunpack.c.h.b16 %v2727
    %v3400 = vunpack.c.l.b16 %v2728
    %v3401 = vunpack.c.h.b16 %v2728
    %v3402 = vunpack.c.l.b16 %v2729
    %v3403 = vunpack.c.h.b16 %v2729
    %v3404 = vunpack.c.l.b16 %v2730
    %v3405 = vunpack.c.h.b16 %v2730
    %v3406 = vunpack.c.l.b16 %v2731
    %v3407 = vunpack.c.h.b16 %v2731
    %v3408 = vunpack.c.l.b16 %v2732
    %v3409 = vunpack.c.h.b16 %v2732
    %v3410 = vunpack.c.l.b16 %v2733
    %v3411 = vunpack.c.h.b16 %v2733
    %v3412 = vunpack.c.l.b16 %v2734
    %v3413 = vunpack.c.h.b16 %v2734
    %v3414 = vunpack.c.l.b16 %v2735
    %v3415 = vunpack.c.h.b16 %v2735
    %v3416 = vunpack.c.l.b16 %v2736
    %v3417 = vunpack.c.h.b16 %v2736
    %v3418 = vunpack.c.l.b16 %v2737
    %v3419 = vunpack.c.h.b16 %v2737
    %v3420 = vunpack.c.l.b16 %v2738
    %v3421 = vunpack.c.h.b16 %v2738
    %v3422 = vunpack.c.l.b16 %v2739
    %v3423 = vunpack.c.h.b16 %v2739
    %v3424 = vunpack.c.l.b16 %v2740
    %v3425 = vunpack.c.h.b16 %v2740
    %v3426 = vunpack.c.l.b16 %v2741
    %v3427 = vunpack.c.h.b16 %v2741
    %v3428 = vunpack.c.l.b16 %v2742
    %v3429 = vunpack.c.h.b16 %v2742
    %v3430 = vunpack.c.l.b16 %v2743
    %v3431 = vunpack.c.h.b16 %v2743
    %v3432 = vunpack.c.l.b16 %v2744
    %v3433 = vunpack.c.h.b16 %v2744
    %v3434 = vunpack.c.l.b16 %v2745
    %v3435 = vunpack.c.h.b16 %v2745
    %v3436 = vunpack.c.l.b16 %v2746
    %v3437 = vunpack.c.h.b16 %v2746
    %v3438 = vunpack.c.l.b16 %v2747
    %v3439 = vunpack.c.h.b16 %v2747
    %v3440 = vunpack.c.l.b16 %v2748
    %v3441 = vunpack.c.h.b16 %v2748
    %v3442 = vunpack.c.l.b16 %v2749
    %v3443 = vunpack.c.h.b16 %v2749
    %v3444 = vunpack.c.l.b16 %v2750
    %v3445 = vunpack.c.h.b16 %v2750
    %v3446 = vunpack.c.l.b16 %v2751
    %v3447 = vunpack.c.h.b16 %v2751
    %v3448 = vunpack.c.l.b16 %v2752
    %v3449 = vunpack.c.h.b16 %v2752
    %v3450 = vunpack.c.l.b16 %v2753
    %v3451 = vunpack.c.h.b16 %v2753
    %v3452 = vunpack.c.l.b16 %v2754
    %v3453 = vunpack.c.h.b16 %v2754
    %v3454 = vunpack.c.l.b16 %v2755
    %v3455 = vunpack.c.h.b16 %v2755
    %v3456 = vunpack.c.l.b16 %v2756
    %v3457 = vunpack.c.h.b16 %v2756
    %v3458 = vunpack.c.l.b16 %v2757
    %v3459 = vunpack.c.h.b16 %v2757
    %v3460 = vunpack.c.l.b16 %v2758
    %v3461 = vunpack.c.h.b16 %v2758
    %v3462 = vunpack.c.l.b16 %v2759
    %v3463 = vunpack.c.h.b16 %v2759
    %v3464 = vunpack.c.l.b16 %v2760
    %v3465 = vunpack.c.h.b16 %v2760
    %v3466 = vunpack.c.l.b16 %v2761
    %v3467 = vunpack.c.h.b16 %v2761
    %v3468 = vunpack.c.l.b16 %v2762
    %v3469 = vunpack.c.h.b16 %v2762
    %v3470 = vunpack.c.l.b16 %v2763
    %v3471 = vunpack.c.h.b16 %v2763
    %v3472 = vunpack.c.l.b16 %v2764
    %v3473 = vunpack.c.h.b16 %v2764
    %v3474 = vunpack.c.l.b16 %v2765
    %v3475 = vunpack.c.h.b16 %v2765
    %v3476 = vunpack.c.l.b16 %v2766
    %v3477 = vunpack.c.h.b16 %v2766
    %v3478 = vunpack.c.l.b16 %v2767
    %v3479 = vunpack.c.h.b16 %v2767
    %v3480 = vunpack.c.l.b16 %v2768
    %v3481 = vunpack.c.h.b16 %v2768
    %v3482 = vunpack.c.l.b16 %v2769
    %v3483 = vunpack.c.h.b16 %v2769
    %v3484 = vunpack.c.l.b16 %v2770
    %v3485 = vunpack.c.h.b16 %v2770
    %v3486 = vunpack.c.l.b16 %v2771
    %v3487 = vunpack.c.h.b16 %v2771
    %v3488 = vunpack.c.l.b16 %v2772
    %v3489 = vunpack.c.h.b16 %v2772
    %v3490 = vunpack.c.l.b16 %v2773
    %v3491 = vunpack.c.h.b16 %v2773
    %v3492 = vunpack.c.l.b16 %v2774
    %v3493 = vunpack.c.h.b16 %v2774
    %v3494 = vunpack.c.l.b16 %v2775
    %v3495 = vunpack.c.h.b16 %v2775
    %v3496 = vunpack.c.l.b16 %v2776
    %v3497 = vunpack.c.h.b16 %v2776
    %v3498 = vunpack.c.l.b16 %v2777
    %v3499 = vunpack.c.h.b16 %v2777
    %v3500 = vunpack.c.l.b16 %v2778
    %v3501 = vunpack.c.h.b16 %v2778
    %v3502 = vunpack.c.l.b16 %v2779
    %v3503 = vunpack.c.h.b16 %v2779
    %v3504 = vunpack.c.l.b16 %v2780
    %v3505 = vunpack.c.h.b16 %v2780
    %v3506 = vunpack.c.l.b16 %v2781
    %v3507 = vunpack.c.h.b16 %v2781
    %v3508 = vunpack.c.l.b16 %v2782
    %v3509 = vunpack.c.h.b16 %v2782
    %v3510 = vunpack.c.l.b16 %v2783
    %v3511 = vunpack.c.h.b16 %v2783
    %v3512 = vunpack.c.l.b16 %v2784
    %v3513 = vunpack.c.h.b16 %v2784
    %v3514 = vunpack.c.l.b16 %v2785
    %v3515 = vunpack.c.h.b16 %v2785
    %v3516 = vunpack.c.l.b16 %v2786
    %v3517 = vunpack.c.h.b16 %v2786
    %v3518 = vunpack.c.l.b16 %v2787
    %v3519 = vunpack.c.h.b16 %v2787
    %v3520 = vunpack.c.l.b16 %v2788
    %v3521 = vunpack.c.h.b16 %v2788
    %v3522 = vunpack.c.l.b16 %v2789
    %v3523 = vunpack.c.h.b16 %v2789
    %v3524 = vunpack.c.l.b16 %v2790
    %v3525 = vunpack.c.h.b16 %v2790
    %v3526 = vunpack.c.l.b16 %v2791
    %v3527 = vunpack.c.h.b16 %v2791
    %v3528 = vunpack.c.l.b16 %v2792
    %v3529 = vunpack.c.h.b16 %v2792
    %v3530 = vunpack.c.l.b16 %v2793
    %v3531 = vunpack.c.h.b16 %v2793
    %v3532 = vunpack.c.l.b16 %v2794
    %v3533 = vunpack.c.h.b16 %v2794
    %v3534 = vunpack.c.l.b16 %v2795
    %v3535 = vunpack.c.h.b16 %v2795
    %v3536 = vunpack.c.l.b16 %v2796
    %v3537 = vunpack.c.h.b16 %v2796
    %v3538 = vunpack.c.l.b16 %v2797
    %v3539 = vunpack.c.h.b16 %v2797
    %v3540 = vunpack.c.l.b16 %v2798
    %v3541 = vunpack.c.h.b16 %v2798
    %v3542 = vunpack.c.l.b16 %v2799
    %v3543 = vunpack.c.h.b16 %v2799
    %v3544 = vunpack.c.l.b16 %v2800
    %v3545 = vunpack.c.h.b16 %v2800
    %v3546 = vunpack.c.l.b16 %v2801
    %v3547 = vunpack.c.h.b16 %v2801
    %v3548 = vunpack.c.l.b16 %v2802
    %v3549 = vunpack.c.h.b16 %v2802
    %v3550 = vunpack.c.l.b16 %v2803
    %v3551 = vunpack.c.h.b16 %v2803
    %v3552 = vunpack.c.l.b16 %v2804
    %v3553 = vunpack.c.h.b16 %v2804
    %v3554 = vunpack.c.l.b16 %v2805
    %v3555 = vunpack.c.h.b16 %v2805
    %v3556 = vunpack.c.l.b16 %v2806
    %v3557 = vunpack.c.h.b16 %v2806
    %v3558 = vunpack.c.l.b16 %v2807
    %v3559 = vunpack.c.h.b16 %v2807
    %v3560 = vunpack.c.l.b16 %v2808
    %v3561 = vunpack.c.h.b16 %v2808
    %v3562 = vunpack.c.l.b16 %v2809
    %v3563 = vunpack.c.h.b16 %v2809
    %v3564 = vunpack.c.l.b16 %v2810
    %v3565 = vunpack.c.h.b16 %v2810
    %v3566 = vunpack.c.l.b16 %v2811
    %v3567 = vunpack.c.h.b16 %v2811
    %v3568 = vunpack.c.l.b16 %v2812
    %v3569 = vunpack.c.h.b16 %v2812
    %v3570 = vunpack.c.l.b16 %v2813
    %v3571 = vunpack.c.h.b16 %v2813
    %v3572 = vunpack.c.l.b16 %v2814
    %v3573 = vunpack.c.h.b16 %v2814
    %v3574 = vunpack.c.l.b16 %v2815
    %v3575 = vunpack.c.h.b16 %v2815
    %v3576 = vunpack.c.l.b16 %v2816
    %v3577 = vunpack.c.h.b16 %v2816
    %v3578 = vunpack.c.l.b16 %v2817
    %v3579 = vunpack.c.h.b16 %v2817
    %v3580 = vunpack.c.l.b16 %v2818
    %v3581 = vunpack.c.h.b16 %v2818
    %v3582 = vunpack.c.l.b16 %v2819
    %v3583 = vunpack.c.h.b16 %v2819
    %v3584 = vunpack.c.l.b16 %v2820
    %v3585 = vunpack.c.h.b16 %v2820
    %v3586 = vunpack.c.l.b16 %v2821
    %v3587 = vunpack.c.h.b16 %v2821
    %v3588 = vunpack.c.l.b16 %v2822
    %v3589 = vunpack.c.h.b16 %v2822
    %v3590 = vunpack.c.l.b16 %v2823
    %v3591 = vunpack.c.h.b16 %v2823
    %v3592 = vunpack.c.l.b16 %v2824
    %v3593 = vunpack.c.h.b16 %v2824
    %v3594 = vunpack.c.l.b16 %v2825
    %v3595 = vunpack.c.h.b16 %v2825
    %v3596 = vunpack.c.l.b16 %v2826
    %v3597 = vunpack.c.h.b16 %v2826
    %v3598 = vunpack.c.l.b16 %v2827
    %v3599 = vunpack.c.h.b16 %v2827
    %v3600 = vunpack.c.l.b16 %v2828
    %v3601 = vunpack.c.h.b16 %v2828
    %v3602 = vunpack.c.l.b16 %v2829
    %v3603 = vunpack.c.h.b16 %v2829
    %v3604 = vunpack.c.l.b16 %v2830
    %v3605 = vunpack.c.h.b16 %v2830
    %v3606 = vunpack.c.l.b16 %v2831
    %v3607 = vunpack.c.h.b16 %v2831
    %v3608 = vunpack.c.l.b16 %v2832
    %v3609 = vunpack.c.h.b16 %v2832
    %v3610 = vunpack.c.l.b16 %v2833
    %v3611 = vunpack.c.h.b16 %v2833
    %v3612 = vunpack.c.l.b16 %v2834
    %v3613 = vunpack.c.h.b16 %v2834
    %v3614 = vunpack.c.l.b16 %v2835
    %v3615 = vunpack.c.h.b16 %v2835
    %v3616 = vunpack.c.l.b16 %v2836
    %v3617 = vunpack.c.h.b16 %v2836
    %v3618 = vunpack.c.l.b16 %v2837
    %v3619 = vunpack.c.h.b16 %v2837
    %v3620 = vunpack.c.l.b16 %v2838
    %v3621 = vunpack.c.h.b16 %v2838
    %v3622 = vunpack.c.l.b16 %v2839
    %v3623 = vunpack.c.h.b16 %v2839
    %v3624 = vunpack.c.l.b16 %v2840
    %v3625 = vunpack.c.h.b16 %v2840
    %v3626 = vunpack.c.l.b16 %v2841
    %v3627 = vunpack.c.h.b16 %v2841
    %v3628 = vunpack.c.l.b16 %v2842
    %v3629 = vunpack.c.h.b16 %v2842
    %v3630 = vunpack.c.l.b16 %v2843
    %v3631 = vunpack.c.h.b16 %v2843
    %v3632 = vunpack.c.l.b16 %v2844
    %v3633 = vunpack.c.h.b16 %v2844
    %v3634 = vunpack.c.l.b16 %v2845
    %v3635 = vunpack.c.h.b16 %v2845
    %v3636 = vpack.c.b16 %v3128, %v3124
    %v3637 = vpack.c.b16 %v3129, %v3125
    %v3638 = vpack.c.b16 %v3130, %v3126
    %v3639 = vpack.c.b16 %v3131, %v3127
    %v3640 = vpack.c.b16 %v3136, %v3132
    %v3641 = vpack.c.b16 %v3137, %v3133
    %v3642 = vpack.c.b16 %v3138, %v3134
    %v3643 = vpack.c.b16 %v3139, %v3135
    %v3644 = vpack.c.b16 %v3144, %v3140
    %v3645 = vpack.c.b16 %v3145, %v3141
    %v3646 = vpack.c.b16 %v3146, %v3142
    %v3647 = vpack.c.b16 %v3147, %v3143
    %v3648 = vpack.c.b16 %v3152, %v3148
    %v3649 = vpack.c.b16 %v3153, %v3149
    %v3650 = vpack.c.b16 %v3154, %v3150
    %v3651 = vpack.c.b16 %v3155, %v3151
    %v3652 = vpack.c.b16 %v3160, %v3156
    %v3653 = vpack.c.b16 %v3161, %v3157
    %v3654 = vpack.c.b16 %v3162, %v3158
    %v3655 = vpack.c.b16 %v3163, %v3159
    %v3656 = vpack.c.b16 %v3168, %v3164
    %v3657 = vpack.c.b16 %v3169, %v3165
    %v3658 = vpack.c.b16 %v3170, %v3166
    %v3659 = vpack.c.b16 %v3171, %v3167
    %v3660 = vpack.c.b16 %v3176, %v3172
    %v3661 = vpack.c.b16 %v3177, %v3173
    %v3662 = vpack.c.b16 %v3178, %v3174
    %v3663 = vpack.c.b16 %v3179, %v3175
    %v3664 = vpack.c.b16 %v3184, %v3180
    %v3665 = vpack.c.b16 %v3185, %v3181
    %v3666 = vpack.c.b16 %v3186, %v3182
    %v3667 = vpack.c.b16 %v3187, %v3183
    %v3668 = vpack.c.b16 %v3192, %v3188
    %v3669 = vpack.c.b16 %v3193, %v3189
    %v3670 = vpack.c.b16 %v3194, %v3190
    %v3671 = vpack.c.b16 %v3195, %v3191
    %v3672 = vpack.c.b16 %v3200, %v3196
    %v3673 = vpack.c.b16 %v3201, %v3197
    %v3674 = vpack.c.b16 %v3202, %v3198
    %v3675 = vpack.c.b16 %v3203, %v3199
    %v3676 = vpack.c.b16 %v3208, %v3204
    %v3677 = vpack.c.b16 %v3209, %v3205
    %v3678 = vpack.c.b16 %v3210, %v3206
    %v3679 = vpack.c.b16 %v3211, %v3207
    %v3680 = vpack.c.b16 %v3216, %v3212
    %v3681 = vpack.c.b16 %v3217, %v3213
    %v3682 = vpack.c.b16 %v3218, %v3214
    %v3683 = vpack.c.b16 %v3219, %v3215
    %v3684 = vpack.c.b16 %v3224, %v3220
    %v3685 = vpack.c.b16 %v3225, %v3221
    %v3686 = vpack.c.b16 %v3226, %v3222
    %v3687 = vpack.c.b16 %v3227, %v3223
    %v3688 = vpack.c.b16 %v3232, %v3228
    %v3689 = vpack.c.b16 %v3233, %v3229
    %v3690 = vpack.c.b16 %v3234, %v3230
    %v3691 = vpack.c.b16 %v3235, %v3231
    %v3692 = vpack.c.b16 %v3240, %v3236
    %v3693 = vpack.c.b16 %v3241, %v3237
    %v3694 = vpack.c.b16 %v3242, %v3238
    %v3695 = vpack.c.b16 %v3243, %v3239
    %v3696 = vpack.c.b16 %v3248, %v3244
    %v3697 = vpack.c.b16 %v3249, %v3245
    %v3698 = vpack.c.b16 %v3250, %v3246
    %v3699 = vpack.c.b16 %v3251, %v3247
    %v3700 = vpack.c.b16 %v3256, %v3252
    %v3701 = vpack.c.b16 %v3257, %v3253
    %v3702 = vpack.c.b16 %v3258, %v3254
    %v3703 = vpack.c.b16 %v3259, %v3255
    %v3704 = vpack.c.b16 %v3264, %v3260
    %v3705 = vpack.c.b16 %v3265, %v3261
    %v3706 = vpack.c.b16 %v3266, %v3262
    %v3707 = vpack.c.b16 %v3267, %v3263
    %v3708 = vpack.c.b16 %v3272, %v3268
    %v3709 = vpack.c.b16 %v3273, %v3269
    %v3710 = vpack.c.b16 %v3274, %v3270
    %v3711 = vpack.c.b16 %v3275, %v3271
    %v3712 = vpack.c.b16 %v3280, %v3276
    %v3713 = vpack.c.b16 %v3281, %v3277
    %v3714 = vpack.c.b16 %v3282, %v3278
    %v3715 = vpack.c.b16 %v3283, %v3279
    %v3716 = vpack.c.b16 %v3288, %v3284
    %v3717 = vpack.c.b16 %v3289, %v3285
    %v3718 = vpack.c.b16 %v3290, %v3286
    %v3719 = vpack.c.b16 %v3291, %v3287
    %v3720 = vpack.c.b16 %v3296, %v3292
    %v3721 = vpack.c.b16 %v3297, %v3293
    %v3722 = vpack.c.b16 %v3298, %v3294
    %v3723 = vpack.c.b16 %v3299, %v3295
    %v3724 = vpack.c.b16 %v3304, %v3300
    %v3725 = vpack.c.b16 %v3305, %v3301
    %v3726 = vpack.c.b16 %v3306, %v3302
    %v3727 = vpack.c.b16 %v3307, %v3303
    %v3728 = vpack.c.b16 %v3312, %v3308
    %v3729 = vpack.c.b16 %v3313, %v3309
    %v3730 = vpack.c.b16 %v3314, %v3310
    %v3731 = vpack.c.b16 %v3315, %v3311
    %v3732 = vpack.c.b16 %v3320, %v3316
    %v3733 = vpack.c.b16 %v3321, %v3317
    %v3734 = vpack.c.b16 %v3322, %v3318
    %v3735 = vpack.c.b16 %v3323, %v3319
    %v3736 = vpack.c.b16 %v3328, %v3324
    %v3737 = vpack.c.b16 %v3329, %v3325
    %v3738 = vpack.c.b16 %v3330, %v3326
    %v3739 = vpack.c.b16 %v3331, %v3327
    %v3740 = vpack.c.b16 %v3336, %v3332
    %v3741 = vpack.c.b16 %v3337, %v3333
    %v3742 = vpack.c.b16 %v3338, %v3334
    %v3743 = vpack.c.b16 %v3339, %v3335
    %v3744 = vpack.c.b16 %v3344, %v3340
    %v3745 = vpack.c.b16 %v3345, %v3341
    %v3746 = vpack.c.b16 %v3346, %v3342
    %v3747 = vpack.c.b16 %v3347, %v3343
    %v3748 = vpack.c.b16 %v3352, %v3348
    %v3749 = vpack.c.b16 %v3353, %v3349
    %v3750 = vpack.c.b16 %v3354, %v3350
    %v3751 = vpack.c.b16 %v3355, %v3351
    %v3752 = vpack.c.b16 %v3360, %v3356
    %v3753 = vpack.c.b16 %v3361, %v3357
    %v3754 = vpack.c.b16 %v3362, %v3358
    %v3755 = vpack.c.b16 %v3363, %v3359
    %v3756 = vpack.c.b16 %v3368, %v3364
    %v3757 = vpack.c.b16 %v3369, %v3365
    %v3758 = vpack.c.b16 %v3370, %v3366
    %v3759 = vpack.c.b16 %v3371, %v3367
    %v3760 = vpack.c.b16 %v3376, %v3372
    %v3761 = vpack.c.b16 %v3377, %v3373
    %v3762 = vpack.c.b16 %v3378, %v3374
    %v3763 = vpack.c.b16 %v3379, %v3375
    %v3764 = vpack.c.b16 %v3384, %v3380
    %v3765 = vpack.c.b16 %v3385, %v3381
    %v3766 = vpack.c.b16 %v3386, %v3382
    %v3767 = vpack.c.b16 %v3387, %v3383
    %v3768 = vpack.c.b16 %v3392, %v3388
    %v3769 = vpack.c.b16 %v3393, %v3389
    %v3770 = vpack.c.b16 %v3394, %v3390
    %v3771 = vpack.c.b16 %v3395, %v3391
    %v3772 = vpack.c.b16 %v3400, %v3396
    %v3773 = vpack.c.b16 %v3401, %v3397
    %v3774 = vpack.c.b16 %v3402, %v3398
    %v3775 = vpack.c.b16 %v3403, %v3399
    %v3776 = vpack.c.b16 %v3408, %v3404
    %v3777 = vpack.c.b16 %v3409, %v3405
    %v3778 = vpack.c.b16 %v3410, %v3406
    %v3779 = vpack.c.b16 %v3411, %v3407
    %v3780 = vpack.c.b16 %v3416, %v3412
    %v3781 = vpack.c.b16 %v3417, %v3413
    %v3782 = vpack.c.b16 %v3418, %v3414
    %v3783 = vpack.c.b16 %v3419, %v3415
    %v3784 = vpack.c.b16 %v3424, %v3420
    %v3785 = vpack.c.b16 %v3425, %v3421
    %v3786 = vpack.c.b16 %v3426, %v3422
    %v3787 = vpack.c.b16 %v3427, %v3423
    %v3788 = vpack.c.b16 %v3432, %v3428
    %v3789 = vpack.c.b16 %v3433, %v3429
    %v3790 = vpack.c.b16 %v3434, %v3430
    %v3791 = vpack.c.b16 %v3435, %v3431
    %v3792 = vpack.c.b16 %v3440, %v3436
    %v3793 = vpack.c.b16 %v3441, %v3437
    %v3794 = vpack.c.b16 %v3442, %v3438
    %v3795 = vpack.c.b16 %v3443, %v3439
    %v3796 = vpack.c.b16 %v3448, %v3444
    %v3797 = vpack.c.b16 %v3449, %v3445
    %v3798 = vpack.c.b16 %v3450, %v3446
    %v3799 = vpack.c.b16 %v3451, %v3447
    %v3800 = vpack.c.b16 %v3456, %v3452
    %v3801 = vpack.c.b16 %v3457, %v3453
    %v3802 = vpack.c.b16 %v3458, %v3454
    %v3803 = vpack.c.b16 %v3459, %v3455
    %v3804 = vpack.c.b16 %v3464, %v3460
    %v3805 = vpack.c.b16 %v3465, %v3461
    %v3806 = vpack.c.b16 %v3466, %v3462
    %v3807 = vpack.c.b16 %v3467, %v3463
    %v3808 = vpack.c.b16 %v3472, %v3468
    %v3809 = vpack.c.b16 %v3473, %v3469
    %v3810 = vpack.c.b16 %v3474, %v3470
    %v3811 = vpack.c.b16 %v3475, %v3471
    %v3812 = vpack.c.b16 %v3480, %v3476
    %v3813 = vpack.c.b16 %v3481, %v3477
    %v3814 = vpack.c.b16 %v3482, %v3478
    %v3815 = vpack.c.b16 %v3483, %v3479
    %v3816 = vpack.c.b16 %v3488, %v3484
    %v3817 = vpack.c.b16 %v3489, %v3485
    %v3818 = vpack.c.b16 %v3490, %v3486
    %v3819 = vpack.c.b16 %v3491, %v3487
    %v3820 = vpack.c.b16 %v3496, %v3492
    %v3821 = vpack.c.b16 %v3497, %v3493
    %v3822 = vpack.c.b16 %v3498, %v3494
    %v3823 = vpack.c.b16 %v3499, %v3495
    %v3824 = vpack.c.b16 %v3504, %v3500
    %v3825 = vpack.c.b16 %v3505, %v3501
    %v3826 = vpack.c.b16 %v3506, %v3502
    %v3827 = vpack.c.b16 %v3507, %v3503
    %v3828 = vpack.c.b16 %v3512, %v3508
    %v3829 = vpack.c.b16 %v3513, %v3509
    %v3830 = vpack.c.b16 %v3514, %v3510
    %v3831 = vpack.c.b16 %v3515, %v3511
    %v3832 = vpack.c.b16 %v3520, %v3516
    %v3833 = vpack.c.b16 %v3521, %v3517
    %v3834 = vpack.c.b16 %v3522, %v3518
    %v3835 = vpack.c.b16 %v3523, %v3519
    %v3836 = vpack.c.b16 %v3528, %v3524
    %v3837 = vpack.c.b16 %v3529, %v3525
    %v3838 = vpack.c.b16 %v3530, %v3526
    %v3839 = vpack.c.b16 %v3531, %v3527
    %v3840 = vpack.c.b16 %v3536, %v3532
    %v3841 = vpack.c.b16 %v3537, %v3533
    %v3842 = vpack.c.b16 %v3538, %v3534
    %v3843 = vpack.c.b16 %v3539, %v3535
    %v3844 = vpack.c.b16 %v3544, %v3540
    %v3845 = vpack.c.b16 %v3545, %v3541
    %v3846 = vpack.c.b16 %v3546, %v3542
    %v3847 = vpack.c.b16 %v3547, %v3543
    %v3848 = vpack.c.b16 %v3552, %v3548
    %v3849 = vpack.c.b16 %v3553, %v3549
    %v3850 = vpack.c.b16 %v3554, %v3550
    %v3851 = vpack.c.b16 %v3555, %v3551
    %v3852 = vpack.c.b16 %v3560, %v3556
    %v3853 = vpack.c.b16 %v3561, %v3557
    %v3854 = vpack.c.b16 %v3562, %v3558
    %v3855 = vpack.c.b16 %v3563, %v3559
    %v3856 = vpack.c.b16 %v3568, %v3564
    %v3857 = vpack.c.b16 %v3569, %v3565
    %v3858 = vpack.c.b16 %v3570, %v3566
    %v3859 = vpack.c.b16 %v3571, %v3567
    %v3860 = vpack.c.b16 %v3576, %v3572
    %v3861 = vpack.c.b16 %v3577, %v3573
    %v3862 = vpack.c.b16 %v3578, %v3574
    %v3863 = vpack.c.b16 %v3579, %v3575
    %v3864 = vpack.c.b16 %v3584, %v3580
    %v3865 = vpack.c.b16 %v3585, %v3581
    %v3866 = vpack.c.b16 %v3586, %v3582
    %v3867 = vpack.c.b16 %v3587, %v3583
    %v3868 = vpack.c.b16 %v3592, %v3588
    %v3869 = vpack.c.b16 %v3593, %v3589
    %v3870 = vpack.c.b16 %v3594, %v3590
    %v3871 = vpack.c.b16 %v3595, %v3591
    %v3872 = vpack.c.b16 %v3600, %v3596
    %v3873 = vpack.c.b16 %v3601, %v3597
    %v3874 = vpack.c.b16 %v3602, %v3598
    %v3875 = vpack.c.b16 %v3603, %v3599
    %v3876 = vpack.c.b16 %v3608, %v3604
    %v3877 = vpack.c.b16 %v3609, %v3605
    %v3878 = vpack.c.b16 %v3610, %v3606
    %v3879 = vpack.c.b16 %v3611, %v3607
    %v3880 = vpack.c.b16 %v3616, %v3612
    %v3881 = vpack.c.b16 %v3617, %v3613
    %v3882 = vpack.c.b16 %v3618, %v3614
    %v3883 = vpack.c.b16 %v3619, %v3615
    %v3884 = vpack.c.b16 %v3624, %v3620
    %v3885 = vpack.c.b16 %v3625, %v3621
    %v3886 = vpack.c.b16 %v3626, %v3622
    %v3887 = vpack.c.b16 %v3627, %v3623
    %v3888 = vpack.c.b16 %v3632, %v3628
    %v3889 = vpack.c.b16 %v3633, %v3629
    %v3890 = vpack.c.b16 %v3634, %v3630
    %v3891 = vpack.c.b16 %v3635, %v3631
    %4148 = vmatprep.subr.bf16.mxu0 %v3637
    %4149 = vmatpush1.bf16.msra.mxu0 %v3636
    %4150 = vmatprep.subr.bf16.mxu0 %v3641
    %4151 = vmatpush1.bf16.msra.mxu0 %v3640
    %4152 = vmatprep.subr.bf16.mxu0 %v3645
    %4153 = vmatpush1.bf16.msra.mxu0 %v3644
    %4154 = vmatprep.subr.bf16.mxu0 %v3649
    %4155 = vmatpush1.bf16.msra.mxu0 %v3648
    %4156 = vmatprep.subr.bf16.mxu0 %v3653
    %4157 = vmatpush1.bf16.msra.mxu0 %v3652
    %4158 = vmatprep.subr.bf16.mxu0 %v3657
    %4159 = vmatpush1.bf16.msra.mxu0 %v3656
    %4160 = vmatprep.subr.bf16.mxu0 %v3661
    %4161 = vmatpush1.bf16.msra.mxu0 %v3660
    %4162 = vmatprep.subr.bf16.mxu0 %v3665
    %4163 = vmatpush1.bf16.msra.mxu0 %v3664
    %4164 = vmatprep.subr.bf16.mxu0 %v3669
    %4165 = vmatpush1.bf16.msra.mxu0 %v3668
    %4166 = vmatprep.subr.bf16.mxu0 %v3673
    %4167 = vmatpush1.bf16.msra.mxu0 %v3672
    %4168 = vmatprep.subr.bf16.mxu0 %v3677
    %4169 = vmatpush1.bf16.msra.mxu0 %v3676
    %4170 = vmatprep.subr.bf16.mxu0 %v3681
    %4171 = vmatpush1.bf16.msra.mxu0 %v3680
    %4172 = vmatprep.subr.bf16.mxu0 %v3685
    %4173 = vmatpush1.bf16.msra.mxu0 %v3684
    %4174 = vmatprep.subr.bf16.mxu0 %v3689
    %4175 = vmatpush1.bf16.msra.mxu0 %v3688
    %4176 = vmatprep.subr.bf16.mxu0 %v3693
    %4177 = vmatpush1.bf16.msra.mxu0 %v3692
    %4178 = vmatprep.subr.bf16.mxu0 %v3697
    %4179 = vmatpush1.bf16.msra.mxu0 %v3696
    %4180 = vmatprep.mubr.bf16.mxu0 %v2583
    %4181 = vmatmul.mubr.bf16.gmra.mrb[0].mxu0 %v2582
    %v4182 = vpop.f32.mrb[0].mxu0
    %v4183 = vadd.f32 %v2851, %v4182
    %v4184 = vpop.f32.mrb[0].mxu0
    %v4185 = vadd.f32 %v2855, %v4184
    %v4186 = vpop.f32.mrb[0].mxu0
    %v4187 = vadd.f32 %v2851, %v4186
    %v4188 = vpop.f32.mrb[0].mxu0
    %v4189 = vadd.f32 %v2855, %v4188
    %4190 = vdwg.mxu0
    %4191 = vmatprep.subr.bf16.mxu0 %v3701
    %4192 = vmatpush1.bf16.msra.mxu0 %v3700
    %4193 = vmatprep.subr.bf16.mxu0 %v3705
    %4194 = vmatpush1.bf16.msra.mxu0 %v3704
    %4195 = vmatprep.subr.bf16.mxu0 %v3709
    %4196 = vmatpush1.bf16.msra.mxu0 %v3708
    %4197 = vmatprep.subr.bf16.mxu0 %v3713
    %4198 = vmatpush1.bf16.msra.mxu0 %v3712
    %4199 = vmatprep.subr.bf16.mxu0 %v3717
    %4200 = vmatpush1.bf16.msra.mxu0 %v3716
    %4201 = vmatprep.subr.bf16.mxu0 %v3721
    %4202 = vmatpush1.bf16.msra.mxu0 %v3720
    %4203 = vmatprep.subr.bf16.mxu0 %v3725
    %4204 = vmatpush1.bf16.msra.mxu0 %v3724
    %4205 = vmatprep.subr.bf16.mxu0 %v3729
    %4206 = vmatpush1.bf16.msra.mxu0 %v3728
    %4207 = vmatprep.subr.bf16.mxu0 %v3733
    %4208 = vmatpush1.bf16.msra.mxu0 %v3732
    %4209 = vmatprep.subr.bf16.mxu0 %v3737
    %4210 = vmatpush1.bf16.msra.mxu0 %v3736
    %4211 = vmatprep.subr.bf16.mxu0 %v3741
    %4212 = vmatpush1.bf16.msra.mxu0 %v3740
    %4213 = vmatprep.subr.bf16.mxu0 %v3745
    %4214 = vmatpush1.bf16.msra.mxu0 %v3744
    %4215 = vmatprep.subr.bf16.mxu0 %v3749
    %4216 = vmatpush1.bf16.msra.mxu0 %v3748
    %4217 = vmatprep.subr.bf16.mxu0 %v3753
    %4218 = vmatpush1.bf16.msra.mxu0 %v3752
    %4219 = vmatprep.subr.bf16.mxu0 %v3757
    %4220 = vmatpush1.bf16.msra.mxu0 %v3756
    %4221 = vmatprep.subr.bf16.mxu0 %v3761
    %4222 = vmatpush1.bf16.msra.mxu0 %v3760
    %4223 = vmatprep.mubr.bf16.mxu0 %v2585
    %4224 = vmatmul.mubr.bf16.gmra.mrb[0].mxu0 %v2584
    %v4225 = vpop.f32.mrb[0].mxu0
    %v4226 = vadd.f32 %v4183, %v4225
    %v4227 = vpop.f32.mrb[0].mxu0
    %v4228 = vadd.f32 %v4185, %v4227
    %v4229 = vpop.f32.mrb[0].mxu0
    %v4230 = vadd.f32 %v4187, %v4229
    %v4231 = vpop.f32.mrb[0].mxu0
    %v4232 = vadd.f32 %v4189, %v4231
    %4233 = vdwg.mxu0
    %4234 = vmatprep.subr.bf16.mxu0 %v3765
    %4235 = vmatpush1.bf16.msra.mxu0 %v3764
    %4236 = vmatprep.subr.bf16.mxu0 %v3769
    %4237 = vmatpush1.bf16.msra.mxu0 %v3768
    %4238 = vmatprep.subr.bf16.mxu0 %v3773
    %4239 = vmatpush1.bf16.msra.mxu0 %v3772
    %4240 = vmatprep.subr.bf16.mxu0 %v3777
    %4241 = vmatpush1.bf16.msra.mxu0 %v3776
    %4242 = vmatprep.subr.bf16.mxu0 %v3781
    %4243 = vmatpush1.bf16.msra.mxu0 %v3780
    %4244 = vmatprep.subr.bf16.mxu0 %v3785
    %4245 = vmatpush1.bf16.msra.mxu0 %v3784
    %4246 = vmatprep.subr.bf16.mxu0 %v3789
    %4247 = vmatpush1.bf16.msra.mxu0 %v3788
    %4248 = vmatprep.subr.bf16.mxu0 %v3793
    %4249 = vmatpush1.bf16.msra.mxu0 %v3792
    %4250 = vmatprep.subr.bf16.mxu0 %v3797
    %4251 = vmatpush1.bf16.msra.mxu0 %v3796
    %4252 = vmatprep.subr.bf16.mxu0 %v3801
    %4253 = vmatpush1.bf16.msra.mxu0 %v3800
    %4254 = vmatprep.subr.bf16.mxu0 %v3805
    %4255 = vmatpush1.bf16.msra.mxu0 %v3804
    %4256 = vmatprep.subr.bf16.mxu0 %v3809
    %4257 = vmatpush1.bf16.msra.mxu0 %v3808
    %4258 = vmatprep.subr.bf16.mxu0 %v3813
    %4259 = vmatpush1.bf16.msra.mxu0 %v3812
    %4260 = vmatprep.subr.bf16.mxu0 %v3817
    %4261 = vmatpush1.bf16.msra.mxu0 %v3816
    %4262 = vmatprep.subr.bf16.mxu0 %v3821
    %4263 = vmatpush1.bf16.msra.mxu0 %v3820
    %4264 = vmatprep.subr.bf16.mxu0 %v3825
    %4265 = vmatpush1.bf16.msra.mxu0 %v3824
    %4266 = vmatprep.mubr.bf16.mxu0 %v2587
    %4267 = vmatmul.mubr.bf16.gmra.mrb[0].mxu0 %v2586
    %v4268 = vpop.f32.mrb[0].mxu0
    %v4269 = vadd.f32 %v4226, %v4268
    %v4270 = vpop.f32.mrb[0].mxu0
    %v4271 = vadd.f32 %v4228, %v4270
    %v4272 = vpop.f32.mrb[0].mxu0
    %v4273 = vadd.f32 %v4230, %v4272
    %v4274 = vpop.f32.mrb[0].mxu0
    %v4275 = vadd.f32 %v4232, %v4274
    %4276 = vdwg.mxu0
    %4277 = vmatprep.subr.bf16.mxu0 %v3829
    %4278 = vmatpush1.bf16.msra.mxu0 %v3828
    %4279 = vmatprep.subr.bf16.mxu0 %v3833
    %4280 = vmatpush1.bf16.msra.mxu0 %v3832
    %4281 = vmatprep.subr.bf16.mxu0 %v3837
    %4282 = vmatpush1.bf16.msra.mxu0 %v3836
    %4283 = vmatprep.subr.bf16.mxu0 %v3841
    %4284 = vmatpush1.bf16.msra.mxu0 %v3840
    %4285 = vmatprep.subr.bf16.mxu0 %v3845
    %4286 = vmatpush1.bf16.msra.mxu0 %v3844
    %4287 = vmatprep.subr.bf16.mxu0 %v3849
    %4288 = vmatpush1.bf16.msra.mxu0 %v3848
    %4289 = vmatprep.subr.bf16.mxu0 %v3853
    %4290 = vmatpush1.bf16.msra.mxu0 %v3852
    %4291 = vmatprep.subr.bf16.mxu0 %v3857
    %4292 = vmatpush1.bf16.msra.mxu0 %v3856
    %4293 = vmatprep.subr.bf16.mxu0 %v3861
    %4294 = vmatpush1.bf16.msra.mxu0 %v3860
    %4295 = vmatprep.subr.bf16.mxu0 %v3865
    %4296 = vmatpush1.bf16.msra.mxu0 %v3864
    %4297 = vmatprep.subr.bf16.mxu0 %v3869
    %4298 = vmatpush1.bf16.msra.mxu0 %v3868
    %4299 = vmatprep.subr.bf16.mxu0 %v3873
    %4300 = vmatpush1.bf16.msra.mxu0 %v3872
    %4301 = vmatprep.subr.bf16.mxu0 %v3877
    %4302 = vmatpush1.bf16.msra.mxu0 %v3876
    %4303 = vmatprep.subr.bf16.mxu0 %v3881
    %4304 = vmatpush1.bf16.msra.mxu0 %v3880
    %4305 = vmatprep.subr.bf16.mxu0 %v3885
    %4306 = vmatpush1.bf16.msra.mxu0 %v3884
    %4307 = vmatprep.subr.bf16.mxu0 %v3889
    %4308 = vmatpush1.bf16.msra.mxu0 %v3888
    %4309 = vmatprep.mubr.bf16.mxu0 %v2589
    %4310 = vmatmul.mubr.bf16.gmra.mrb[0].mxu0 %v2588
    %v4311 = vpop.f32.mrb[0].mxu0
    %v4312 = vadd.f32 %v4269, %v4311
    %v4313 = vpop.f32.mrb[0].mxu0
    %v4314 = vadd.f32 %v4271, %v4313
    %v4315 = vpop.f32.mrb[0].mxu0
    %v4316 = vadd.f32 %v4273, %v4315
    %v4317 = vpop.f32.mrb[0].mxu0
    %v4318 = vadd.f32 %v4275, %v4317
    %4319 = vdwg.mxu0
    %4320 = vmatprep.subr.bf16.mxu0 %v3639
    %4321 = vmatpush1.bf16.msra.mxu0 %v3638
    %4322 = vmatprep.subr.bf16.mxu0 %v3643
    %4323 = vmatpush1.bf16.msra.mxu0 %v3642
    %4324 = vmatprep.subr.bf16.mxu0 %v3647
    %4325 = vmatpush1.bf16.msra.mxu0 %v3646
    %4326 = vmatprep.subr.bf16.mxu0 %v3651
    %4327 = vmatpush1.bf16.msra.mxu0 %v3650
    %4328 = vmatprep.subr.bf16.mxu0 %v3655
    %4329 = vmatpush1.bf16.msra.mxu0 %v3654
    %4330 = vmatprep.subr.bf16.mxu0 %v3659
    %4331 = vmatpush1.bf16.msra.mxu0 %v3658
    %4332 = vmatprep.subr.bf16.mxu0 %v3663
    %4333 = vmatpush1.bf16.msra.mxu0 %v3662
    %4334 = vmatprep.subr.bf16.mxu0 %v3667
    %4335 = vmatpush1.bf16.msra.mxu0 %v3666
    %4336 = vmatprep.subr.bf16.mxu0 %v3671
    %4337 = vmatpush1.bf16.msra.mxu0 %v3670
    %4338 = vmatprep.subr.bf16.mxu0 %v3675
    %4339 = vmatpush1.bf16.msra.mxu0 %v3674
    %4340 = vmatprep.subr.bf16.mxu0 %v3679
    %4341 = vmatpush1.bf16.msra.mxu0 %v3678
    %4342 = vmatprep.subr.bf16.mxu0 %v3683
    %4343 = vmatpush1.bf16.msra.mxu0 %v3682
    %4344 = vmatprep.subr.bf16.mxu0 %v3687
    %4345 = vmatpush1.bf16.msra.mxu0 %v3686
    %4346 = vmatprep.subr.bf16.mxu0 %v3691
    %4347 = vmatpush1.bf16.msra.mxu0 %v3690
    %4348 = vmatprep.subr.bf16.mxu0 %v3695
    %4349 = vmatpush1.bf16.msra.mxu0 %v3694
    %4350 = vmatprep.subr.bf16.mxu0 %v3699
    %4351 = vmatpush1.bf16.msra.mxu0 %v3698
    %4352 = vmatprep.mubr.bf16.mxu0 %v2583
    %4353 = vmatmul.mubr.bf16.gmra.mrb[0].mxu0 %v2582
    %v4354 = vpop.f32.mrb[0].mxu0
    %v4355 = vadd.f32 %v2859, %v4354
    %v4356 = vpop.f32.mrb[0].mxu0
    %v4357 = vadd.f32 %v2863, %v4356
    %v4358 = vpop.f32.mrb[0].mxu0
    %v4359 = vadd.f32 %v2859, %v4358
    %v4360 = vpop.f32.mrb[0].mxu0
    %v4361 = vadd.f32 %v2863, %v4360
    %4362 = vdwg.mxu0
    %4363 = vmatprep.subr.bf16.mxu0 %v3703
    %4364 = vmatpush1.bf16.msra.mxu0 %v3702
    %4365 = vmatprep.subr.bf16.mxu0 %v3707
    %4366 = vmatpush1.bf16.msra.mxu0 %v3706
    %4367 = vmatprep.subr.bf16.mxu0 %v3711
    %4368 = vmatpush1.bf16.msra.mxu0 %v3710
    %4369 = vmatprep.subr.bf16.mxu0 %v3715
    %4370 = vmatpush1.bf16.msra.mxu0 %v3714
    %4371 = vmatprep.subr.bf16.mxu0 %v3719
    %4372 = vmatpush1.bf16.msra.mxu0 %v3718
    %4373 = vmatprep.subr.bf16.mxu0 %v3723
    %4374 = vmatpush1.bf16.msra.mxu0 %v3722
    %4375 = vmatprep.subr.bf16.mxu0 %v3727
    %4376 = vmatpush1.bf16.msra.mxu0 %v3726
    %4377 = vmatprep.subr.bf16.mxu0 %v3731
    %4378 = vmatpush1.bf16.msra.mxu0 %v3730
    %4379 = vmatprep.subr.bf16.mxu0 %v3735
    %4380 = vmatpush1.bf16.msra.mxu0 %v3734
    %4381 = vmatprep.subr.bf16.mxu0 %v3739
    %4382 = vmatpush1.bf16.msra.mxu0 %v3738
    %4383 = vmatprep.subr.bf16.mxu0 %v3743
    %4384 = vmatpush1.bf16.msra.mxu0 %v3742
    %4385 = vmatprep.subr.bf16.mxu0 %v3747
    %4386 = vmatpush1.bf16.msra.mxu0 %v3746
    %4387 = vmatprep.subr.bf16.mxu0 %v3751
    %4388 = vmatpush1.bf16.msra.mxu0 %v3750
    %4389 = vmatprep.subr.bf16.mxu0 %v3755
    %4390 = vmatpush1.bf16.msra.mxu0 %v3754
    %4391 = vmatprep.subr.bf16.mxu0 %v3759
    %4392 = vmatpush1.bf16.msra.mxu0 %v3758
    %4393 = vmatprep.subr.bf16.mxu0 %v3763
    %4394 = vmatpush1.bf16.msra.mxu0 %v3762
    %4395 = vmatprep.mubr.bf16.mxu0 %v2585
    %4396 = vmatmul.mubr.bf16.gmra.mrb[0].mxu0 %v2584
    %v4397 = vpop.f32.mrb[0].mxu0
    %v4398 = vadd.f32 %v4355, %v4397
    %v4399 = vpop.f32.mrb[0].mxu0
    %v4400 = vadd.f32 %v4357, %v4399
    %v4401 = vpop.f32.mrb[0].mxu0
    %v4402 = vadd.f32 %v4359, %v4401
    %v4403 = vpop.f32.mrb[0].mxu0
    %v4404 = vadd.f32 %v4361, %v4403
    %4405 = vdwg.mxu0
    %4406 = vmatprep.subr.bf16.mxu0 %v3767
    %4407 = vmatpush1.bf16.msra.mxu0 %v3766
    %4408 = vmatprep.subr.bf16.mxu0 %v3771
    %4409 = vmatpush1.bf16.msra.mxu0 %v3770
    %4410 = vmatprep.subr.bf16.mxu0 %v3775
    %4411 = vmatpush1.bf16.msra.mxu0 %v3774
    %4412 = vmatprep.subr.bf16.mxu0 %v3779
    %4413 = vmatpush1.bf16.msra.mxu0 %v3778
    %4414 = vmatprep.subr.bf16.mxu0 %v3783
    %4415 = vmatpush1.bf16.msra.mxu0 %v3782
    %4416 = vmatprep.subr.bf16.mxu0 %v3787
    %4417 = vmatpush1.bf16.msra.mxu0 %v3786
    %4418 = vmatprep.subr.bf16.mxu0 %v3791
    %4419 = vmatpush1.bf16.msra.mxu0 %v3790
    %4420 = vmatprep.subr.bf16.mxu0 %v3795
    %4421 = vmatpush1.bf16.msra.mxu0 %v3794
    %4422 = vmatprep.subr.bf16.mxu0 %v3799
    %4423 = vmatpush1.bf16.msra.mxu0 %v3798
    %4424 = vmatprep.subr.bf16.mxu0 %v3803
    %4425 = vmatpush1.bf16.msra.mxu0 %v3802
    %4426 = vmatprep.subr.bf16.mxu0 %v3807
    %4427 = vmatpush1.bf16.msra.mxu0 %v3806
    %4428 = vmatprep.subr.bf16.mxu0 %v3811
    %4429 = vmatpush1.bf16.msra.mxu0 %v3810
    %4430 = vmatprep.subr.bf16.mxu0 %v3815
    %4431 = vmatpush1.bf16.msra.mxu0 %v3814
    %4432 = vmatprep.subr.bf16.mxu0 %v3819
    %4433 = vmatpush1.bf16.msra.mxu0 %v3818
    %4434 = vmatprep.subr.bf16.mxu0 %v3823
    %4435 = vmatpush1.bf16.msra.mxu0 %v3822
    %4436 = vmatprep.subr.bf16.mxu0 %v3827
    %4437 = vmatpush1.bf16.msra.mxu0 %v3826
    %4438 = vmatprep.mubr.bf16.mxu0 %v2587
    %4439 = vmatmul.mubr.bf16.gmra.mrb[0].mxu0 %v2586
    %v4440 = vpop.f32.mrb[0].mxu0
    %v4441 = vadd.f32 %v4398, %v4440
    %v4442 = vpop.f32.mrb[0].mxu0
    %v4443 = vadd.f32 %v4400, %v4442
    %v4444 = vpop.f32.mrb[0].mxu0
    %v4445 = vadd.f32 %v4402, %v4444
    %v4446 = vpop.f32.mrb[0].mxu0
    %v4447 = vadd.f32 %v4404, %v4446
    %4448 = vdwg.mxu0
    %4449 = vmatprep.subr.bf16.mxu0 %v3831
    %4450 = vmatpush1.bf16.msra.mxu0 %v3830
    %4451 = vmatprep.subr.bf16.mxu0 %v3835
    %4452 = vmatpush1.bf16.msra.mxu0 %v3834
    %4453 = vmatprep.subr.bf16.mxu0 %v3839
    %4454 = vmatpush1.bf16.msra.mxu0 %v3838
    %4455 = vmatprep.subr.bf16.mxu0 %v3843
    %4456 = vmatpush1.bf16.msra.mxu0 %v3842
    %4457 = vmatprep.subr.bf16.mxu0 %v3847
    %4458 = vmatpush1.bf16.msra.mxu0 %v3846
    %4459 = vmatprep.subr.bf16.mxu0 %v3851
    %4460 = vmatpush1.bf16.msra.mxu0 %v3850
    %4461 = vmatprep.subr.bf16.mxu0 %v3855
    %4462 = vmatpush1.bf16.msra.mxu0 %v3854
    %4463 = vmatprep.subr.bf16.mxu0 %v3859
    %4464 = vmatpush1.bf16.msra.mxu0 %v3858
    %4465 = vmatprep.subr.bf16.mxu0 %v3863
    %4466 = vmatpush1.bf16.msra.mxu0 %v3862
    %4467 = vmatprep.subr.bf16.mxu0 %v3867
    %4468 = vmatpush1.bf16.msra.mxu0 %v3866
    %4469 = vmatprep.subr.bf16.mxu0 %v3871
    %4470 = vmatpush1.bf16.msra.mxu0 %v3870
    %4471 = vmatprep.subr.bf16.mxu0 %v3875
    %4472 = vmatpush1.bf16.msra.mxu0 %v3874
    %4473 = vmatprep.subr.bf16.mxu0 %v3879
    %4474 = vmatpush1.bf16.msra.mxu0 %v3878
    %4475 = vmatprep.subr.bf16.mxu0 %v3883
    %4476 = vmatpush1.bf16.msra.mxu0 %v3882
    %4477 = vmatprep.subr.bf16.mxu0 %v3887
    %4478 = vmatpush1.bf16.msra.mxu0 %v3886
    %4479 = vmatprep.subr.bf16.mxu0 %v3891
    %4480 = vmatpush1.bf16.msra.mxu0 %v3890
    %4481 = vmatprep.mubr.bf16.mxu0 %v2589
    %4482 = vmatmul.mubr.bf16.gmra.mrb[0].mxu0 %v2588
    %v4483 = vpop.f32.mrb[0].mxu0
    %v4484 = vadd.f32 %v4441, %v4483
    %v4485 = vpop.f32.mrb[0].mxu0
    %v4486 = vadd.f32 %v4443, %v4485
    %v4487 = vpop.f32.mrb[0].mxu0
    %v4488 = vadd.f32 %v4445, %v4487
    %v4489 = vpop.f32.mrb[0].mxu0
    %v4490 = vadd.f32 %v4447, %v4489
    %4491 = vdwg.mxu0
    %v4492 = vmax.f32 %v4312, 0.0
    %v4493 = vmax.f32 %v4314, 0.0
    %v4494 = vmax.f32 %v4484, 0.0
    %v4495 = vmax.f32 %v4486, 0.0
    %v4496 = vmax.f32 %v4316, 0.0
    %v4497 = vmax.f32 %v4318, 0.0
    %v4498 = vmax.f32 %v4488, 0.0
    %v4499 = vmax.f32 %v4490, 0.0
    %v4500 = vpack.c.bf16 %v4496, %v4492
    %v4501 = vpack.c.bf16 %v4497, %v4493
    %v4502 = vpack.c.bf16 %v4498, %v4494
    %v4503 = vpack.c.bf16 %v4499, %v4495
    %v4504 = vld [vmem:[#allocation11] sm:$0xff]
    %v4505 = vld [vmem:[#allocation11 + $0x8] sm:$0xff]
    %v4506 = vld [vmem:[#allocation11 + $0x10] sm:$0xff]
    %v4507 = vld [vmem:[#allocation11 + $0x18] sm:$0xff]
    %v4508 = vld [vmem:[#allocation11 + $0x20] sm:$0xff]
    %v4509 = vld [vmem:[#allocation11 + $0x28] sm:$0xff]
    %v4510 = vld [vmem:[#allocation11 + $0x30] sm:$0xff]
    %v4511 = vld [vmem:[#allocation11 + $0x38] sm:$0xff]
    %v4512 = vld [vmem:[#allocation11 + $0x40] sm:$0xff]
    %v4513 = vld [vmem:[#allocation11 + $0x48] sm:$0xff]
    %v4514 = vld [vmem:[#allocation11 + $0x50] sm:$0xff]
    %v4515 = vld [vmem:[#allocation11 + $0x58] sm:$0xff]
    %v4516 = vld [vmem:[#allocation11 + $0x60] sm:$0xff]
    %v4517 = vld [vmem:[#allocation11 + $0x68] sm:$0xff]
    %v4518 = vld [vmem:[#allocation11 + $0x70] sm:$0xff]
    %v4519 = vld [vmem:[#allocation11 + $0x78] sm:$0xff]
    %v4520 = vld [vmem:[#allocation11 + $0x80] sm:$0xff]
    %v4521 = vld [vmem:[#allocation11 + $0x88] sm:$0xff]
    %v4522 = vld [vmem:[#allocation11 + $0x90] sm:$0xff]
    %v4523 = vld [vmem:[#allocation11 + $0x98] sm:$0xff]
    %v4524 = vld [vmem:[#allocation11 + $0xa0] sm:$0xff]
    %v4525 = vld [vmem:[#allocation11 + $0xa8] sm:$0xff]
    %v4526 = vld [vmem:[#allocation11 + $0xb0] sm:$0xff]
    %v4527 = vld [vmem:[#allocation11 + $0xb8] sm:$0xff]
    %v4528 = vld [vmem:[#allocation11 + $0xc0] sm:$0xff]
    %v4529 = vld [vmem:[#allocation11 + $0xc8] sm:$0xff]
    %v4530 = vld [vmem:[#allocation11 + $0xd0] sm:$0xff]
    %v4531 = vld [vmem:[#allocation11 + $0xd8] sm:$0xff]
    %v4532 = vld [vmem:[#allocation11 + $0xe0] sm:$0xff]
    %v4533 = vld [vmem:[#allocation11 + $0xe8] sm:$0xff]
    %v4534 = vld [vmem:[#allocation11 + $0xf0] sm:$0xff]
    %v4535 = vld [vmem:[#allocation11 + $0xf8] sm:$0xff]
    %v4536 = vld [vmem:[#allocation11 + $0x100] sm:$0xff]
    %v4537 = vld [vmem:[#allocation11 + $0x108] sm:$0xff]
    %v4538 = vld [vmem:[#allocation11 + $0x110] sm:$0xff]
    %v4539 = vld [vmem:[#allocation11 + $0x118] sm:$0xff]
    %v4540 = vld [vmem:[#allocation11 + $0x120] sm:$0xff]
    %v4541 = vld [vmem:[#allocation11 + $0x128] sm:$0xff]
    %v4542 = vld [vmem:[#allocation11 + $0x130] sm:$0xff]
    %v4543 = vld [vmem:[#allocation11 + $0x138] sm:$0xff]
    %v4544 = vld [vmem:[#allocation11 + $0x140] sm:$0xff]
    %v4545 = vld [vmem:[#allocation11 + $0x148] sm:$0xff]
    %v4546 = vld [vmem:[#allocation11 + $0x150] sm:$0xff]
    %v4547 = vld [vmem:[#allocation11 + $0x158] sm:$0xff]
    %v4548 = vld [vmem:[#allocation11 + $0x160] sm:$0xff]
    %v4549 = vld [vmem:[#allocation11 + $0x168] sm:$0xff]
    %v4550 = vld [vmem:[#allocation11 + $0x170] sm:$0xff]
    %v4551 = vld [vmem:[#allocation11 + $0x178] sm:$0xff]
    %v4552 = vld [vmem:[#allocation11 + $0x180] sm:$0xff]
    %v4553 = vld [vmem:[#allocation11 + $0x188] sm:$0xff]
    %v4554 = vld [vmem:[#allocation11 + $0x190] sm:$0xff]
    %v4555 = vld [vmem:[#allocation11 + $0x198] sm:$0xff]
    %v4556 = vld [vmem:[#allocation11 + $0x1a0] sm:$0xff]
    %v4557 = vld [vmem:[#allocation11 + $0x1a8] sm:$0xff]
    %v4558 = vld [vmem:[#allocation11 + $0x1b0] sm:$0xff]
    %v4559 = vld [vmem:[#allocation11 + $0x1b8] sm:$0xff]
    %v4560 = vld [vmem:[#allocation11 + $0x1c0] sm:$0xff]
    %v4561 = vld [vmem:[#allocation11 + $0x1c8] sm:$0xff]
    %v4562 = vld [vmem:[#allocation11 + $0x1d0] sm:$0xff]
    %v4563 = vld [vmem:[#allocation11 + $0x1d8] sm:$0xff]
    %v4564 = vld [vmem:[#allocation11 + $0x1e0] sm:$0xff]
    %v4565 = vld [vmem:[#allocation11 + $0x1e8] sm:$0xff]
    %v4566 = vld [vmem:[#allocation11 + $0x1f0] sm:$0xff]
    %v4567 = vld [vmem:[#allocation11 + $0x1f8] sm:$0xff]
    %v4568 = vld [vmem:[#allocation13] sm:$0x3]
    %v4570 = vlaneseq
    %v4571 = vshrl.u32 %v4570, 7
    %v4572 = vsub.s32 0, %v4571
    %v4573 = vrot.slane %v4568, %v4572
    %v4574 = vlaneseq
    %v4575 = vshrl.u32 %v4574, 7
    %v4576 = vsub.s32 1, %v4575
    %v4577 = vrot.slane %v4568, %v4576
    %v4644 = vunpack.c.l.b16 %v4504
    %v4645 = vunpack.c.h.b16 %v4504
    %v4646 = vunpack.c.l.b16 %v4505
    %v4647 = vunpack.c.h.b16 %v4505
    %v4648 = vunpack.c.l.b16 %v4506
    %v4649 = vunpack.c.h.b16 %v4506
    %v4650 = vunpack.c.l.b16 %v4507
    %v4651 = vunpack.c.h.b16 %v4507
    %v4652 = vunpack.c.l.b16 %v4508
    %v4653 = vunpack.c.h.b16 %v4508
    %v4654 = vunpack.c.l.b16 %v4509
    %v4655 = vunpack.c.h.b16 %v4509
    %v4656 = vunpack.c.l.b16 %v4510
    %v4657 = vunpack.c.h.b16 %v4510
    %v4658 = vunpack.c.l.b16 %v4511
    %v4659 = vunpack.c.h.b16 %v4511
    %v4660 = vunpack.c.l.b16 %v4512
    %v4661 = vunpack.c.h.b16 %v4512
    %v4662 = vunpack.c.l.b16 %v4513
    %v4663 = vunpack.c.h.b16 %v4513
    %v4664 = vunpack.c.l.b16 %v4514
    %v4665 = vunpack.c.h.b16 %v4514
    %v4666 = vunpack.c.l.b16 %v4515
    %v4667 = vunpack.c.h.b16 %v4515
    %v4668 = vunpack.c.l.b16 %v4516
    %v4669 = vunpack.c.h.b16 %v4516
    %v4670 = vunpack.c.l.b16 %v4517
    %v4671 = vunpack.c.h.b16 %v4517
    %v4672 = vunpack.c.l.b16 %v4518
    %v4673 = vunpack.c.h.b16 %v4518
    %v4674 = vunpack.c.l.b16 %v4519
    %v4675 = vunpack.c.h.b16 %v4519
    %v4676 = vunpack.c.l.b16 %v4520
    %v4677 = vunpack.c.h.b16 %v4520
    %v4678 = vunpack.c.l.b16 %v4521
    %v4679 = vunpack.c.h.b16 %v4521
    %v4680 = vunpack.c.l.b16 %v4522
    %v4681 = vunpack.c.h.b16 %v4522
    %v4682 = vunpack.c.l.b16 %v4523
    %v4683 = vunpack.c.h.b16 %v4523
    %v4684 = vunpack.c.l.b16 %v4524
    %v4685 = vunpack.c.h.b16 %v4524
    %v4686 = vunpack.c.l.b16 %v4525
    %v4687 = vunpack.c.h.b16 %v4525
    %v4688 = vunpack.c.l.b16 %v4526
    %v4689 = vunpack.c.h.b16 %v4526
    %v4690 = vunpack.c.l.b16 %v4527
    %v4691 = vunpack.c.h.b16 %v4527
    %v4692 = vunpack.c.l.b16 %v4528
    %v4693 = vunpack.c.h.b16 %v4528
    %v4694 = vunpack.c.l.b16 %v4529
    %v4695 = vunpack.c.h.b16 %v4529
    %v4696 = vunpack.c.l.b16 %v4530
    %v4697 = vunpack.c.h.b16 %v4530
    %v4698 = vunpack.c.l.b16 %v4531
    %v4699 = vunpack.c.h.b16 %v4531
    %v4700 = vunpack.c.l.b16 %v4532
    %v4701 = vunpack.c.h.b16 %v4532
    %v4702 = vunpack.c.l.b16 %v4533
    %v4703 = vunpack.c.h.b16 %v4533
    %v4704 = vunpack.c.l.b16 %v4534
    %v4705 = vunpack.c.h.b16 %v4534
    %v4706 = vunpack.c.l.b16 %v4535
    %v4707 = vunpack.c.h.b16 %v4535
    %v4708 = vunpack.c.l.b16 %v4536
    %v4709 = vunpack.c.h.b16 %v4536
    %v4710 = vunpack.c.l.b16 %v4537
    %v4711 = vunpack.c.h.b16 %v4537
    %v4712 = vunpack.c.l.b16 %v4538
    %v4713 = vunpack.c.h.b16 %v4538
    %v4714 = vunpack.c.l.b16 %v4539
    %v4715 = vunpack.c.h.b16 %v4539
    %v4716 = vunpack.c.l.b16 %v4540
    %v4717 = vunpack.c.h.b16 %v4540
    %v4718 = vunpack.c.l.b16 %v4541
    %v4719 = vunpack.c.h.b16 %v4541
    %v4720 = vunpack.c.l.b16 %v4542
    %v4721 = vunpack.c.h.b16 %v4542
    %v4722 = vunpack.c.l.b16 %v4543
    %v4723 = vunpack.c.h.b16 %v4543
    %v4724 = vunpack.c.l.b16 %v4544
    %v4725 = vunpack.c.h.b16 %v4544
    %v4726 = vunpack.c.l.b16 %v4545
    %v4727 = vunpack.c.h.b16 %v4545
    %v4728 = vunpack.c.l.b16 %v4546
    %v4729 = vunpack.c.h.b16 %v4546
    %v4730 = vunpack.c.l.b16 %v4547
    %v4731 = vunpack.c.h.b16 %v4547
    %v4732 = vunpack.c.l.b16 %v4548
    %v4733 = vunpack.c.h.b16 %v4548
    %v4734 = vunpack.c.l.b16 %v4549
    %v4735 = vunpack.c.h.b16 %v4549
    %v4736 = vunpack.c.l.b16 %v4550
    %v4737 = vunpack.c.h.b16 %v4550
    %v4738 = vunpack.c.l.b16 %v4551
    %v4739 = vunpack.c.h.b16 %v4551
    %v4740 = vunpack.c.l.b16 %v4552
    %v4741 = vunpack.c.h.b16 %v4552
    %v4742 = vunpack.c.l.b16 %v4553
    %v4743 = vunpack.c.h.b16 %v4553
    %v4744 = vunpack.c.l.b16 %v4554
    %v4745 = vunpack.c.h.b16 %v4554
    %v4746 = vunpack.c.l.b16 %v4555
    %v4747 = vunpack.c.h.b16 %v4555
    %v4748 = vunpack.c.l.b16 %v4556
    %v4749 = vunpack.c.h.b16 %v4556
    %v4750 = vunpack.c.l.b16 %v4557
    %v4751 = vunpack.c.h.b16 %v4557
    %v4752 = vunpack.c.l.b16 %v4558
    %v4753 = vunpack.c.h.b16 %v4558
    %v4754 = vunpack.c.l.b16 %v4559
    %v4755 = vunpack.c.h.b16 %v4559
    %v4756 = vunpack.c.l.b16 %v4560
    %v4757 = vunpack.c.h.b16 %v4560
    %v4758 = vunpack.c.l.b16 %v4561
    %v4759 = vunpack.c.h.b16 %v4561
    %v4760 = vunpack.c.l.b16 %v4562
    %v4761 = vunpack.c.h.b16 %v4562
    %v4762 = vunpack.c.l.b16 %v4563
    %v4763 = vunpack.c.h.b16 %v4563
    %v4764 = vunpack.c.l.b16 %v4564
    %v4765 = vunpack.c.h.b16 %v4564
    %v4766 = vunpack.c.l.b16 %v4565
    %v4767 = vunpack.c.h.b16 %v4565
    %v4768 = vunpack.c.l.b16 %v4566
    %v4769 = vunpack.c.h.b16 %v4566
    %v4770 = vunpack.c.l.b16 %v4567
    %v4771 = vunpack.c.h.b16 %v4567
    %v4772 = vpack.c.b16 %v4646, %v4644
    %v4773 = vpack.c.b16 %v4647, %v4645
    %v4774 = vpack.c.b16 %v4650, %v4648
    %v4775 = vpack.c.b16 %v4651, %v4649
    %v4776 = vpack.c.b16 %v4654, %v4652
    %v4777 = vpack.c.b16 %v4655, %v4653
    %v4778 = vpack.c.b16 %v4658, %v4656
    %v4779 = vpack.c.b16 %v4659, %v4657
    %v4780 = vpack.c.b16 %v4662, %v4660
    %v4781 = vpack.c.b16 %v4663, %v4661
    %v4782 = vpack.c.b16 %v4666, %v4664
    %v4783 = vpack.c.b16 %v4667, %v4665
    %v4784 = vpack.c.b16 %v4670, %v4668
    %v4785 = vpack.c.b16 %v4671, %v4669
    %v4786 = vpack.c.b16 %v4674, %v4672
    %v4787 = vpack.c.b16 %v4675, %v4673
    %v4788 = vpack.c.b16 %v4678, %v4676
    %v4789 = vpack.c.b16 %v4679, %v4677
    %v4790 = vpack.c.b16 %v4682, %v4680
    %v4791 = vpack.c.b16 %v4683, %v4681
    %v4792 = vpack.c.b16 %v4686, %v4684
    %v4793 = vpack.c.b16 %v4687, %v4685
    %v4794 = vpack.c.b16 %v4690, %v4688
    %v4795 = vpack.c.b16 %v4691, %v4689
    %v4796 = vpack.c.b16 %v4694, %v4692
    %v4797 = vpack.c.b16 %v4695, %v4693
    %v4798 = vpack.c.b16 %v4698, %v4696
    %v4799 = vpack.c.b16 %v4699, %v4697
    %v4800 = vpack.c.b16 %v4702, %v4700
    %v4801 = vpack.c.b16 %v4703, %v4701
    %v4802 = vpack.c.b16 %v4706, %v4704
    %v4803 = vpack.c.b16 %v4707, %v4705
    %v4804 = vpack.c.b16 %v4710, %v4708
    %v4805 = vpack.c.b16 %v4711, %v4709
    %v4806 = vpack.c.b16 %v4714, %v4712
    %v4807 = vpack.c.b16 %v4715, %v4713
    %v4808 = vpack.c.b16 %v4718, %v4716
    %v4809 = vpack.c.b16 %v4719, %v4717
    %v4810 = vpack.c.b16 %v4722, %v4720
    %v4811 = vpack.c.b16 %v4723, %v4721
    %v4812 = vpack.c.b16 %v4726, %v4724
    %v4813 = vpack.c.b16 %v4727, %v4725
    %v4814 = vpack.c.b16 %v4730, %v4728
    %v4815 = vpack.c.b16 %v4731, %v4729
    %v4816 = vpack.c.b16 %v4734, %v4732
    %v4817 = vpack.c.b16 %v4735, %v4733
    %v4818 = vpack.c.b16 %v4738, %v4736
    %v4819 = vpack.c.b16 %v4739, %v4737
    %v4820 = vpack.c.b16 %v4742, %v4740
    %v4821 = vpack.c.b16 %v4743, %v4741
    %v4822 = vpack.c.b16 %v4746, %v4744
    %v4823 = vpack.c.b16 %v4747, %v4745
    %v4824 = vpack.c.b16 %v4750, %v4748
    %v4825 = vpack.c.b16 %v4751, %v4749
    %v4826 = vpack.c.b16 %v4754, %v4752
    %v4827 = vpack.c.b16 %v4755, %v4753
    %v4828 = vpack.c.b16 %v4758, %v4756
    %v4829 = vpack.c.b16 %v4759, %v4757
    %v4830 = vpack.c.b16 %v4762, %v4760
    %v4831 = vpack.c.b16 %v4763, %v4761
    %v4832 = vpack.c.b16 %v4766, %v4764
    %v4833 = vpack.c.b16 %v4767, %v4765
    %v4834 = vpack.c.b16 %v4770, %v4768
    %v4835 = vpack.c.b16 %v4771, %v4769
    %4900 = vmatprep.subr.bf16.mxu0 %v4773
    %4901 = vmatpush1.bf16.msra.mxu0 %v4772
    %4902 = vmatprep.subr.bf16.mxu0 %v4775
    %4903 = vmatpush1.bf16.msra.mxu0 %v4774
    %4904 = vmatprep.subr.bf16.mxu0 %v4777
    %4905 = vmatpush1.bf16.msra.mxu0 %v4776
    %4906 = vmatprep.subr.bf16.mxu0 %v4779
    %4907 = vmatpush1.bf16.msra.mxu0 %v4778
    %4908 = vmatprep.subr.bf16.mxu0 %v4781
    %4909 = vmatpush1.bf16.msra.mxu0 %v4780
    %4910 = vmatprep.subr.bf16.mxu0 %v4783
    %4911 = vmatpush1.bf16.msra.mxu0 %v4782
    %4912 = vmatprep.subr.bf16.mxu0 %v4785
    %4913 = vmatpush1.bf16.msra.mxu0 %v4784
    %4914 = vmatprep.subr.bf16.mxu0 %v4787
    %4915 = vmatpush1.bf16.msra.mxu0 %v4786
    %4916 = vmatprep.subr.bf16.mxu0 %v4789
    %4917 = vmatpush1.bf16.msra.mxu0 %v4788
    %4918 = vmatprep.subr.bf16.mxu0 %v4791
    %4919 = vmatpush1.bf16.msra.mxu0 %v4790
    %4920 = vmatprep.subr.bf16.mxu0 %v4793
    %4921 = vmatpush1.bf16.msra.mxu0 %v4792
    %4922 = vmatprep.subr.bf16.mxu0 %v4795
    %4923 = vmatpush1.bf16.msra.mxu0 %v4794
    %4924 = vmatprep.subr.bf16.mxu0 %v4797
    %4925 = vmatpush1.bf16.msra.mxu0 %v4796
    %4926 = vmatprep.subr.bf16.mxu0 %v4799
    %4927 = vmatpush1.bf16.msra.mxu0 %v4798
    %4928 = vmatprep.subr.bf16.mxu0 %v4801
    %4929 = vmatpush1.bf16.msra.mxu0 %v4800
    %4930 = vmatprep.subr.bf16.mxu0 %v4803
    %4931 = vmatpush1.bf16.msra.mxu0 %v4802
    %4932 = vmatprep.mubr.bf16.mxu0 %v4501
    %4933 = vmatmul.mubr.bf16.gmra.mrb[0].mxu0 %v4500
    %v4934 = vpop.f32.mrb[0].mxu0
    %v4935 = vadd.f32 %v4573, %v4934
    %v4936 = vpop.f32.mrb[0].mxu0
    %v4937 = vadd.f32 %v4577, %v4936
    %v4938 = vpop.f32.mrb[0].mxu0
    %v4939 = vadd.f32 %v4573, %v4938
    %v4940 = vpop.f32.mrb[0].mxu0
    %v4941 = vadd.f32 %v4577, %v4940
    %4942 = vdwg.mxu0
    %4943 = vmatprep.subr.bf16.mxu0 %v4805
    %4944 = vmatpush1.bf16.msra.mxu0 %v4804
    %4945 = vmatprep.subr.bf16.mxu0 %v4807
    %4946 = vmatpush1.bf16.msra.mxu0 %v4806
    %4947 = vmatprep.subr.bf16.mxu0 %v4809
    %4948 = vmatpush1.bf16.msra.mxu0 %v4808
    %4949 = vmatprep.subr.bf16.mxu0 %v4811
    %4950 = vmatpush1.bf16.msra.mxu0 %v4810
    %4951 = vmatprep.subr.bf16.mxu0 %v4813
    %4952 = vmatpush1.bf16.msra.mxu0 %v4812
    %4953 = vmatprep.subr.bf16.mxu0 %v4815
    %4954 = vmatpush1.bf16.msra.mxu0 %v4814
    %4955 = vmatprep.subr.bf16.mxu0 %v4817
    %4956 = vmatpush1.bf16.msra.mxu0 %v4816
    %4957 = vmatprep.subr.bf16.mxu0 %v4819
    %4958 = vmatpush1.bf16.msra.mxu0 %v4818
    %4959 = vmatprep.subr.bf16.mxu0 %v4821
    %4960 = vmatpush1.bf16.msra.mxu0 %v4820
    %4961 = vmatprep.subr.bf16.mxu0 %v4823
    %4962 = vmatpush1.bf16.msra.mxu0 %v4822
    %4963 = vmatprep.subr.bf16.mxu0 %v4825
    %4964 = vmatpush1.bf16.msra.mxu0 %v4824
    %4965 = vmatprep.subr.bf16.mxu0 %v4827
    %4966 = vmatpush1.bf16.msra.mxu0 %v4826
    %4967 = vmatprep.subr.bf16.mxu0 %v4829
    %4968 = vmatpush1.bf16.msra.mxu0 %v4828
    %4969 = vmatprep.subr.bf16.mxu0 %v4831
    %4970 = vmatpush1.bf16.msra.mxu0 %v4830
    %4971 = vmatprep.subr.bf16.mxu0 %v4833
    %4972 = vmatpush1.bf16.msra.mxu0 %v4832
    %4973 = vmatprep.subr.bf16.mxu0 %v4835
    %4974 = vmatpush1.bf16.msra.mxu0 %v4834
    %4975 = vmatprep.mubr.bf16.mxu0 %v4503
    %4976 = vmatmul.mubr.bf16.gmra.mrb[0].mxu0 %v4502
    %v4977 = vpop.f32.mrb[0].mxu0
    %v4978 = vadd.f32 %v4935, %v4977
    %v4979 = vpop.f32.mrb[0].mxu0
    %v4980 = vadd.f32 %v4937, %v4979
    %v4981 = vpop.f32.mrb[0].mxu0
    %v4982 = vadd.f32 %v4939, %v4981
    %v4983 = vpop.f32.mrb[0].mxu0
    %v4984 = vadd.f32 %v4941, %v4983
    %4985 = vdwg.mxu0
    %v4986 = vmax.f32 %v4978, 0.0
    %v4987 = vmax.f32 %v4980, 0.0
    %v4988 = vmax.f32 %v4982, 0.0
    %v4989 = vmax.f32 %v4984, 0.0
    %v4990 = vpack.c.bf16 %v4988, %v4986
    %v4991 = vpack.c.bf16 %v4989, %v4987
    %v4992 = vld [vmem:[#allocation14] sm:$0xf]
    %v4993 = vld [vmem:[#allocation14 + $0x4] sm:$0xf]
    %v4994 = vld [vmem:[#allocation14 + $0x8] sm:$0xf]
    %v4995 = vld [vmem:[#allocation14 + $0xc] sm:$0xf]
    %v4996 = vld [vmem:[#allocation14 + $0x10] sm:$0xf]
    %v4997 = vld [vmem:[#allocation14 + $0x14] sm:$0xf]
    %v4998 = vld [vmem:[#allocation14 + $0x18] sm:$0xf]
    %v4999 = vld [vmem:[#allocation14 + $0x1c] sm:$0xf]
    %v5000 = vld [vmem:[#allocation14 + $0x20] sm:$0xf]
    %v5001 = vld [vmem:[#allocation14 + $0x24] sm:$0xf]
    %v5002 = vld [vmem:[#allocation14 + $0x28] sm:$0xf]
    %v5003 = vld [vmem:[#allocation14 + $0x2c] sm:$0xf]
    %v5004 = vld [vmem:[#allocation14 + $0x30] sm:$0xf]
    %v5005 = vld [vmem:[#allocation14 + $0x34] sm:$0xf]
    %v5006 = vld [vmem:[#allocation14 + $0x38] sm:$0xf]
    %v5007 = vld [vmem:[#allocation14 + $0x3c] sm:$0xf]
    %v5008 = vld [vmem:[#allocation14 + $0x40] sm:$0xf]
    %v5009 = vld [vmem:[#allocation14 + $0x44] sm:$0xf]
    %v5010 = vld [vmem:[#allocation14 + $0x48] sm:$0xf]
    %v5011 = vld [vmem:[#allocation14 + $0x4c] sm:$0xf]
    %v5012 = vld [vmem:[#allocation14 + $0x50] sm:$0xf]
    %v5013 = vld [vmem:[#allocation14 + $0x54] sm:$0xf]
    %v5014 = vld [vmem:[#allocation14 + $0x58] sm:$0xf]
    %v5015 = vld [vmem:[#allocation14 + $0x5c] sm:$0xf]
    %v5016 = vld [vmem:[#allocation14 + $0x60] sm:$0xf]
    %v5017 = vld [vmem:[#allocation14 + $0x64] sm:$0xf]
    %v5018 = vld [vmem:[#allocation14 + $0x68] sm:$0xf]
    %v5019 = vld [vmem:[#allocation14 + $0x6c] sm:$0xf]
    %v5020 = vld [vmem:[#allocation14 + $0x70] sm:$0xf]
    %v5021 = vld [vmem:[#allocation14 + $0x74] sm:$0xf]
    %v5022 = vld [vmem:[#allocation14 + $0x78] sm:$0xf]
    %v5023 = vld [vmem:[#allocation14 + $0x7c] sm:$0xf]
    %v5024 = vld [vmem:[#allocation16] sm:$0x1]
    %v5026 = vlaneseq
    %v5027 = vshrl.u32 %v5026, 7
    %v5028 = vsub.s32 0, %v5027
    %v5029 = vrot.slane %v5024, %v5028
    %v5063 = vunpack.c.l.b16 %v4992
    %v5064 = vunpack.c.l.b16 %v4993
    %v5065 = vunpack.c.l.b16 %v4994
    %v5066 = vunpack.c.l.b16 %v4995
    %v5067 = vunpack.c.l.b16 %v4996
    %v5068 = vunpack.c.l.b16 %v4997
    %v5069 = vunpack.c.l.b16 %v4998
    %v5070 = vunpack.c.l.b16 %v4999
    %v5071 = vunpack.c.l.b16 %v5000
    %v5072 = vunpack.c.l.b16 %v5001
    %v5073 = vunpack.c.l.b16 %v5002
    %v5074 = vunpack.c.l.b16 %v5003
    %v5075 = vunpack.c.l.b16 %v5004
    %v5076 = vunpack.c.l.b16 %v5005
    %v5077 = vunpack.c.l.b16 %v5006
    %v5078 = vunpack.c.l.b16 %v5007
    %v5079 = vunpack.c.l.b16 %v5008
    %v5080 = vunpack.c.l.b16 %v5009
    %v5081 = vunpack.c.l.b16 %v5010
    %v5082 = vunpack.c.l.b16 %v5011
    %v5083 = vunpack.c.l.b16 %v5012
    %v5084 = vunpack.c.l.b16 %v5013
    %v5085 = vunpack.c.l.b16 %v5014
    %v5086 = vunpack.c.l.b16 %v5015
    %v5087 = vunpack.c.l.b16 %v5016
    %v5088 = vunpack.c.l.b16 %v5017
    %v5089 = vunpack.c.l.b16 %v5018
    %v5090 = vunpack.c.l.b16 %v5019
    %v5091 = vunpack.c.l.b16 %v5020
    %v5092 = vunpack.c.l.b16 %v5021
    %v5093 = vunpack.c.l.b16 %v5022
    %v5094 = vunpack.c.l.b16 %v5023
    %v5095 = vpack.c.b16 %v5064, %v5063
    %v5096 = vpack.c.b16 %v5066, %v5065
    %v5097 = vpack.c.b16 %v5068, %v5067
    %v5098 = vpack.c.b16 %v5070, %v5069
    %v5099 = vpack.c.b16 %v5072, %v5071
    %v5100 = vpack.c.b16 %v5074, %v5073
    %v5101 = vpack.c.b16 %v5076, %v5075
    %v5102 = vpack.c.b16 %v5078, %v5077
    %v5103 = vpack.c.b16 %v5080, %v5079
    %v5104 = vpack.c.b16 %v5082, %v5081
    %v5105 = vpack.c.b16 %v5084, %v5083
    %v5106 = vpack.c.b16 %v5086, %v5085
    %v5107 = vpack.c.b16 %v5088, %v5087
    %v5108 = vpack.c.b16 %v5090, %v5089
    %v5109 = vpack.c.b16 %v5092, %v5091
    %v5110 = vpack.c.b16 %v5094, %v5093
    %5127 = vmatprep.subr.bf16.mxu0 0
    %5128 = vmatpush1.bf16.msra.mxu0 %v5095
    %5129 = vmatprep.subr.bf16.mxu0 0
    %5130 = vmatpush1.bf16.msra.mxu0 %v5096
    %5131 = vmatprep.subr.bf16.mxu0 0
    %5132 = vmatpush1.bf16.msra.mxu0 %v5097
    %5133 = vmatprep.subr.bf16.mxu0 0
    %5134 = vmatpush1.bf16.msra.mxu0 %v5098
    %5135 = vmatprep.subr.bf16.mxu0 0
    %5136 = vmatpush1.bf16.msra.mxu0 %v5099
    %5137 = vmatprep.subr.bf16.mxu0 0
    %5138 = vmatpush1.bf16.msra.mxu0 %v5100
    %5139 = vmatprep.subr.bf16.mxu0 0
    %5140 = vmatpush1.bf16.msra.mxu0 %v5101
    %5141 = vmatprep.subr.bf16.mxu0 0
    %5142 = vmatpush1.bf16.msra.mxu0 %v5102
    %5143 = vmatprep.subr.bf16.mxu0 0
    %5144 = vmatpush1.bf16.msra.mxu0 %v5103
    %5145 = vmatprep.subr.bf16.mxu0 0
    %5146 = vmatpush1.bf16.msra.mxu0 %v5104
    %5147 = vmatprep.subr.bf16.mxu0 0
    %5148 = vmatpush1.bf16.msra.mxu0 %v5105
    %5149 = vmatprep.subr.bf16.mxu0 0
    %5150 = vmatpush1.bf16.msra.mxu0 %v5106
    %5151 = vmatprep.subr.bf16.mxu0 0
    %5152 = vmatpush1.bf16.msra.mxu0 %v5107
    %5153 = vmatprep.subr.bf16.mxu0 0
    %5154 = vmatpush1.bf16.msra.mxu0 %v5108
    %5155 = vmatprep.subr.bf16.mxu0 0
    %5156 = vmatpush1.bf16.msra.mxu0 %v5109
    %5157 = vmatprep.subr.bf16.mxu0 0
    %5158 = vmatpush1.bf16.msra.mxu0 %v5110
    %5159 = vmatprep.mubr.bf16.mxu0 %v4991
    %5160 = vmatmul.mubr.bf16.gmra.mrb[0].mxu0 %v4990
    %v5161 = vpop.f32.mrb[0].mxu0
    %v5162 = vadd.f32 %v5029, %v5161
    %v5163 = vpop.f32.mrb[0].mxu0
    %v5164 = vpop.f32.mrb[0].mxu0
    %v5165 = vadd.f32 %v5029, %v5164
    %v5166 = vpop.f32.mrb[0].mxu0
    %5167 = vdwg.mxu0
    %v5168 = vpack.c.bf16 %v5165, %v5162
    %v5170 = vunpack.c.l.b16 %v5168
    %v5171 = vunpack.c.h.b16 %v5168
    %v5172 = vpack.c.b16 %v5170, %v5170
    %v5173 = vpack.c.b16 %v5171, %v5171
    %5176 = vst [vmem:[#allocation17] sm:$0xf] %v5172
    %5177 = vst [vmem:[#allocation17 + $0x4] sm:$0xf] %v5173
    // Predicated region
    $region74: #{tpu_custom_call.1} parent=1 // pred_check
      _
    $region75: #{tpu_custom_call.1} parent=1 // pred_check_branch
      %5179 = sbr.rel (0) target = $region77
    $region76: #{tpu_custom_call.1} parent=1 // pred_region
      %s5181 = ssub.s32 128, 128
      %5182 = vsyncadd [#allocation4], %s5181
      %s5183 = sshll.u32 [#allocation17], 4
      %s5184 = int_to_ptr.vmem [resolvable:$true] %s5183
      %5189 = dma.vmem_to_hbm [thread:$0]  %s5184, 128, %s9, [#allocation4], 64, 64, 4
    $region77: #{tpu_custom_call.1} parent=1 // pred_fallthru
      _
    // Predicated region
    $region78: #{tpu_custom_call.1} parent=1 // pred_check
      _
    $region79: #{tpu_custom_call.1} parent=1 // pred_check_branch
      %5191 = sbr.rel (0) target = $region81
    $region80: #{tpu_custom_call.1} parent=1 // pred_region
      %5192 = dma.done [#allocation4], 128
    $region81: #{tpu_custom_call.1} parent=1 // pred_fallthru
      _
    %5193 = vsyncpa [#allocation3], 1
    %5194 = vsyncpa [#allocation6], 1
    %5195 = vsyncpa [#allocation9], 1
    %5196 = vsyncpa [#allocation12], 1
    %5197 = vsyncpa [#allocation15], 1
    %5198 = vsyncpa [#allocation4], 1

</llo_original>
